<compile_context>
chip_gen: v5e
topology: v5e:2x2
jax: 0.10.0
libtpu: 0.0.40
codegen_flags: <defaults>
</compile_context>

<pallas_src>
import functools

import jax
import jax.numpy as jnp
from jax.experimental import pallas as pl
from jax.experimental.pallas import tpu as pltpu

MAX_DIM = 64 * 16
NEG_SLOPE = 0.01          # nn.LeakyReLU() default (module uses the default)
IN_EPS = 1e-5             # nn.InstanceNorm2d default
OUT_PAD = 128             # lane-dense fused FC output width


# ---------------------------------------------------------------------------
# Hardware-aware sizing helpers
# ---------------------------------------------------------------------------
def _round_up(x, m):
    return -(-x // m) * m


@functools.lru_cache(maxsize=None)
def _hw_params():
    """(vmem_budget_bytes, max_k_tile, min_batch_grid_steps), generation-aware."""
    cap = 64 * 1024 * 1024
    try:
        info = pltpu.get_tpu_info()
        cap = int(getattr(info, "vmem_capacity_bytes", cap) or cap)
    except Exception:
        pass
    if cap <= 80 * 1024 * 1024:
        # v7x-class: 64 MiB VMEM, 2 TensorCores -> smaller K tiles, and keep
        # >= 2 grid steps on the parallel batch axis so the 2nd core has work.
        return 48 * 1024 * 1024, 1024, 2
    # v5e / v6e: 128 MiB VMEM, 1 TensorCore -> bigger tiles / batch blocks.
    return 96 * 1024 * 1024, 2048, 1


def _pick_tile(k, max_tile):
    """Largest multiple-of-128 divisor of k <= max_tile; k itself if small/ragged."""
    if k <= max_tile or k % 128 != 0:
        return k
    for t in range(max_tile, 127, -128):
        if k % t == 0:
            return t
    return k


def _pick_batch_block(n, per_sample_bytes, fixed_bytes, budget, min_steps):
    """Largest divisor of n fitting the VMEM budget, keeping >= min_steps grid steps."""
    need = min(min_steps, n)
    limit = int(budget * 0.85)
    best = 1
    for d in range(1, n + 1):
        if n % d or n // d < need:
            continue
        if fixed_bytes + d * per_sample_bytes <= limit:
            best = d
    return best


def _pick_fc_batch_block(n, min_steps):
    if min_steps > 1 and n >= 16:
        for d in range(n // min_steps, 7, -1):
            if n % d == 0 and d % 8 == 0:
                return d
    return n


# ---------------------------------------------------------------------------
# Pallas kernels
# ---------------------------------------------------------------------------
def _conv_in_lrelu_kernel(x_ref, w_ref, g_ref, b_ref, o_ref,
                          *, wp2, wo, n_off, inv_cnt):
    # x_ref : (B_blk, L, KCt) bf16 parity-packed planes
    #         n_off==4: L = (Ho+1)*wp2 ;  n_off==1 (full im2col): L = Ho*wp2
    # w_ref : (n_off, KCt, Cout) bf16 ;  g_ref/b_ref: (1, Cout) f32
    # o_ref : (B_blk, M, Cout) f32, M = Ho*wp2; resident across the KC grid axis
    kc = pl.program_id(1)
    b_blk, m_rows, c_out = o_ref.shape

    @pl.when(kc == 0)
    def _init():
        o_ref[...] = jnp.zeros_like(o_ref)

    for b in range(b_blk):
        acc = o_ref[b]
        if n_off == 1:
            acc = acc + jnp.dot(x_ref[b], w_ref[0],
                                preferred_element_type=jnp.float32)
        else:
            # Both base slabs start at sublane-aligned offsets (wp2 % 8 == 0).
            base0 = x_ref[b, pl.ds(0, m_rows), :]        # (dh=0) rows i
            base1 = x_ref[b, pl.ds(wp2, m_rows), :]      # (dh=1) rows i + wp2
            even = (jnp.dot(base0, w_ref[0], preferred_element_type=jnp.float32) +
                    jnp.dot(base1, w_ref[2], preferred_element_type=jnp.float32))
            odd = (jnp.dot(base0, w_ref[1], preferred_element_type=jnp.float32) +
                   jnp.dot(base1, w_ref[3], preferred_element_type=jnp.float32))
            # dw=1 needs row i+1:  roll(X)@W == roll(X@W), so one f32 roll of the
            # partial result replaces two unaligned slab reads.  shift=m_rows-1
            # == -1 (np.roll convention): result[i] = odd[i+1]; the single
            # wrapped row lands in the last junk column and is masked below.
            acc = acc + even + pltpu.roll(odd, shift=m_rows - 1, axis=0)
        o_ref[b] = acc

    @pl.when(kc == pl.num_programs(1) - 1)
    def _finalize():
        rows = jax.lax.broadcasted_iota(jnp.int32, (m_rows, 1), 0)
        mask = ((rows % wp2) < wo).astype(jnp.float32)   # 0 on junk columns
        gamma = g_ref[...]
        beta = b_ref[...]
        for b in range(b_blk):
            y = o_ref[b] * mask
            # Two-pass (mean-subtracted) stats: biased variance, eps=1e-5.
            mean = jnp.sum(y, axis=0, keepdims=True) * inv_cnt
            d = (y - mean) * mask
            var = jnp.sum(d * d, axis=0, keepdims=True) * inv_cnt
            yn = d * jax.lax.rsqrt(var + IN_EPS) * gamma + beta
            yn = jnp.where(yn >= 0, yn, NEG_SLOPE * yn)
            o_ref[b] = yn * mask                          # junk stays zero


def _fused_fc_kernel(x_ref, w1_ref, b1_ref, w2_ref, b2_ref, o_ref, acc_ref):
    # x_ref : (Nb, Kt) bf16       w1_ref: (Kt, 2*fc_dim) bf16
    # w2_ref: (2*fc_dim, 128) bf16 block-diagonal (adv | cls), lane-dense output
    k = pl.program_id(1)

    @pl.when(k == 0)
    def _init():
        acc_ref[...] = jnp.zeros_like(acc_ref)

    acc_ref[...] += jnp.dot(x_ref[...], w1_ref[...],
                            preferred_element_type=jnp.float32)

    @pl.when(k == pl.num_programs(1) - 1)
    def _finalize():
        hid = acc_ref[...] + b1_ref[...]
        hid = jnp.where(hid >= 0, hid, NEG_SLOPE * hid)
        o_ref[...] = jnp.dot(hid.astype(w2_ref.dtype), w2_ref[...],
                             preferred_element_type=jnp.float32) + b2_ref[...]


# ---------------------------------------------------------------------------
# Pallas wrappers
# ---------------------------------------------------------------------------
def pallas_conv_in_lrelu(planes, layer, ho, wo, wp2):
    """planes: (N, L, KC) bf16; layer['w']: (n_off, KC, Cout) bf16.
    Returns (N, Ho*wp2, Cout) f32 (junk columns zeroed)."""
    n, l_rows, kc = planes.shape
    n_off, _, c_out = layer["w"].shape
    m_rows = ho * wp2
    budget, max_tile, min_steps = _hw_params()

    kct = _pick_tile(kc, max_tile)
    kc_blocks = kc // kct
    # VMEM footprint: weights & planes double-buffered, output resident (x2 margin).
    w_bytes = 2 * n_off * kct * c_out * 2
    per_sample = 2 * l_rows * kct * 2 + 2 * m_rows * c_out * 4
    b_blk = _pick_batch_block(n, per_sample, w_bytes, budget, min_steps)

    kern = functools.partial(_conv_in_lrelu_kernel, wp2=wp2, wo=wo,
                             n_off=n_off, inv_cnt=1.0 / (ho * wo))
    return pl.pallas_call(
        kern,
        out_shape=jax.ShapeDtypeStruct((n, m_rows, c_out), jnp.float32),
        grid=(n // b_blk, kc_blocks),
        in_specs=[
            pl.BlockSpec((b_blk, l_rows, kct), lambda i, k: (i, 0, k)),
            pl.BlockSpec((n_off, kct, c_out), lambda i, k: (0, k, 0)),
            pl.BlockSpec((1, c_out), lambda i, k: (0, 0)),
            pl.BlockSpec((1, c_out), lambda i, k: (0, 0)),
        ],
        out_specs=pl.BlockSpec((b_blk, m_rows, c_out), lambda i, k: (i, 0, 0)),
        compiler_params=pltpu.CompilerParams(
            dimension_semantics=("parallel", "arbitrary"),
            vmem_limit_bytes=budget),
    )(planes, layer["w"], layer["gamma"], layer["beta"])


def pallas_fused_fc(x, fc):
    """x: (N, fc_in) bf16; fc dict with fused bf16 weights. Returns (N, 128) f32."""
    n, k_in = x.shape
    h2 = fc["w1"].shape[1]
    budget, max_tile, min_steps = _hw_params()
    kt = _pick_tile(k_in, max_tile)
    kb = k_in // kt
    nb = _pick_fc_batch_block(n, min_steps)
    return pl.pallas_call(
        _fused_fc_kernel,
        out_shape=jax.ShapeDtypeStruct((n, OUT_PAD), jnp.float32),
        grid=(n // nb, kb),
        in_specs=[
            pl.BlockSpec((nb, kt), lambda i, k: (i, k)),
            pl.BlockSpec((kt, h2), lambda i, k: (k, 0)),
            pl.BlockSpec((1, h2), lambda i, k: (0, 0)),
            pl.BlockSpec((h2, OUT_PAD), lambda i, k: (0, 0)),
            pl.BlockSpec((1, OUT_PAD), lambda i, k: (0, 0)),
        ],
        out_specs=pl.BlockSpec((nb, OUT_PAD), lambda i, k: (i, 0)),
        scratch_shapes=[pltpu.VMEM((nb, h2), jnp.float32)],
        compiler_params=pltpu.CompilerParams(
            dimension_semantics=("parallel", "arbitrary"),
            vmem_limit_bytes=budget),
    )(x, fc["w1"], fc["b1"], fc["w2"], fc["b2"])


# ---------------------------------------------------------------------------
# Glue: parity packing (single fused XLA layout pass per layer, bf16 planes)
# ---------------------------------------------------------------------------
def _parity_pack(x, *, fused16):
    """x: (N, H, W, C) NHWC -> bf16 packed planes.
    Row r = hb2*wp2 + wb2, lane = (ph*2+pw)*C + c, value xp[2*hb2+ph, 2*wb2+pw, c]
    with xp = conv-padded input and wp2 = round_up(Wo+1, 8) (sublane-aligned).
    fused16: additionally concat the 4 (dh,dw) offsets along lanes (16-tap im2col)."""
    n, h, w, c = x.shape
    ho, wo = h // 2, w // 2
    wp2 = _round_up(wo + 1, 8)
    m_rows = ho * wp2
    xp = jnp.pad(x, ((0, 0), (1, 1), (1, 2 * wp2 - w - 1), (0, 0)))
    xr = xp.reshape(n, ho + 1, 2, wp2, 2, c).transpose(0, 1, 3, 2, 4, 5)
    planes = xr.reshape(n, (ho + 1) * wp2, 4 * c)
    if fused16:
        ext = jnp.pad(planes, ((0, 0), (0, 1), (0, 0)))   # 1 spare zero row
        planes = jnp.concatenate(
            [ext[:, 0:m_rows], ext[:, 1:m_rows + 1],
             ext[:, wp2:wp2 + m_rows], ext[:, wp2 + 1:wp2 + 1 + m_rows]],
            axis=-1)
    return planes.astype(jnp.bfloat16), ho, wo, wp2


# ---------------------------------------------------------------------------
# Parameter init (deterministic, synthetic) + one-time kernel-ready prep
# ---------------------------------------------------------------------------
def init_params(key, *, dim, n_layers, img_size, fc_dim):
    params = {"conv": [], "fc_adv": [], "fc_cls": []}
    n_in = 3
    keys = iter(jax.random.split(key, 4 * n_layers + 8))
    for i in range(n_layers):
        n_out = min(dim * 2 ** i, MAX_DIM)
        w = 0.1 * jax.random.normal(next(keys), (4, 4, n_in, n_out), jnp.float32)
        gamma = 1.0 + 0.1 * jax.random.normal(next(keys), (n_out,), jnp.float32)
        beta = 0.1 * jax.random.normal(next(keys), (n_out,), jnp.float32)
        params["conv"].append((w, gamma, beta))
        n_in = n_out
    f_size = img_size // 2 ** n_layers
    fc_in = n_in * f_size * f_size   # uses the actual last channel count

    def linear_init(k, kin, kout):
        k1, k2 = jax.random.split(k)
        return (0.1 * jax.random.normal(k1, (kin, kout), jnp.float32),
                0.1 * jax.random.normal(k2, (kout,), jnp.float32))

    params["fc_adv"] = [linear_init(next(keys), fc_in, fc_dim),
                        linear_init(next(keys), fc_dim, 1)]
    params["fc_cls"] = [linear_init(next(keys), fc_in, fc_dim),
                        linear_init(next(keys), fc_dim, 13)]
    return params


def prepare_params(params, img_size):
    """Fold layout work into the weights once: offset-major bf16 conv weights
    (16-tap fused layout for Cin<=4), NCHW->NHWC row permutation + head fusion +
    lane-dense padding for the FC weights."""
    prep_conv = []
    s = img_size
    for (w, gamma, beta) in params["conv"]:
        c_in, c_out = w.shape[2], w.shape[3]
        # (kh,kw,cin,cout) -> (off=dh*2+dw, rows (ph,pw,cin), cout),
        # with kh = 2*dh + ph, kw = 2*dw + pw (matches parity-pack lane order).
        wr = w.reshape(2, 2, 2, 2, c_in, c_out).transpose(0, 2, 1, 3, 4, 5)
        w_off = wr.reshape(4, 4 * c_in, c_out)
        fused16 = c_in <= 4                       # first (RGB) layer: one K=16*Cin matmul
        if fused16:
            w_off = w_off.reshape(1, 16 * c_in, c_out)
        prep_conv.append({"w": w_off.astype(jnp.bfloat16),
                          "gamma": gamma.reshape(1, c_out).astype(jnp.float32),
                          "beta": beta.reshape(1, c_out).astype(jnp.float32),
                          "fused16": fused16})
        s = s // 2
    last_c = params["conv"][-1][0].shape[3]
    f = s

    (wa1, ba1), (wa2, ba2) = params["fc_adv"]
    (wc1, bc1), (wc2, bc2) = params["fc_cls"]

    def perm_rows_nchw_to_nhwc(w1):
        # Module flattens NCHW; features arrive NHWC-flattened -> permute rows once.
        return w1.reshape(last_c, f, f, -1).transpose(1, 2, 0, 3).reshape(last_c * f * f, -1)

    w1 = jnp.concatenate([perm_rows_nchw_to_nhwc(wa1),
                          perm_rows_nchw_to_nhwc(wc1)], axis=1).astype(jnp.bfloat16)
    b1 = jnp.concatenate([ba1, bc1]).reshape(1, -1).astype(jnp.float32)
    # Block-diagonal second layer, padded to a lane-dense 128-wide output:
    # column 0 = adv, columns 1..13 = cls, rest zero.
    col_adv = jnp.pad(wa2, ((0, 0), (0, OUT_PAD - 1)))
    col_cls = jnp.pad(wc2, ((0, 0), (1, OUT_PAD - 1 - 13)))
    w2 = jnp.concatenate([col_adv, col_cls], axis=0).astype(jnp.bfloat16)
    b2 = jnp.concatenate([ba2, bc2,
                          jnp.zeros((OUT_PAD - 14,), jnp.float32)]).reshape(1, -1)
    return {"conv": prep_conv, "fc": {"w1": w1, "b1": b1, "w2": w2, "b2": b2}}


# ---------------------------------------------------------------------------
# Forward pass
# ---------------------------------------------------------------------------
def discriminators_forward(x_nchw, prep):
    n = x_nchw.shape[0]
    h = jnp.transpose(x_nchw, (0, 2, 3, 1)).astype(jnp.float32)      # NCHW -> NHWC
    for layer in prep["conv"]:
        planes, ho, wo, wp2 = _parity_pack(h, fused16=layer["fused16"])
        out = pallas_conv_in_lrelu(planes, layer, ho, wo, wp2)       # (N, Ho*wp2, Cout)
        c_out = layer["w"].shape[-1]
        # Junk columns are zeroed in-kernel; the slice below fuses (XLA) with the
        # next layer's pad/reshape/cast into a single layout pass.
        h = out.reshape(n, ho, wp2, c_out)[:, :, :wo, :]
    # NHWC flatten (the NCHW permutation was folded into the FC weights).
    # TODO(synk): emit the last conv layer directly in bf16 to drop this cast pass.
    h_flat = h.reshape(n, -1).astype(jnp.bfloat16)
    fused = pallas_fused_fc(h_flat, prep["fc"])                       # (N, 128)
    adv = fused[:, 0:1]
    cls = fused[:, 1:14]
    return adv, cls


# ---------------------------------------------------------------------------
if __name__ == "__main__":
    # Small config consistent with the module structure:
    # dim=8, n_layers=3, img_size=16 -> channels 8,16,32; f_size=2; fc_in=128.
    BATCH, IMG, DIM, N_LAYERS, FC_DIM = 2, 16, 8, 3, 32

    key = jax.random.PRNGKey(0)
    k_x, k_p = jax.random.split(key)
    x = jax.random.normal(k_x, (BATCH, 3, IMG, IMG), jnp.float32)  # NCHW, like PyTorch
    params = init_params(k_p, dim=DIM, n_layers=N_LAYERS, img_size=IMG, fc_dim=FC_DIM)
    prep = prepare_params(params, IMG)

    fwd = jax.jit(functools.partial(discriminators_forward, prep=prep))
    adv, cls = fwd(x)
    jax.block_until_ready((adv, cls))

    assert adv.shape == (BATCH, 1), adv.shape
    assert cls.shape == (BATCH, 13), cls.shape
    assert bool(jnp.all(jnp.isfinite(adv))) and bool(jnp.all(jnp.isfinite(cls)))
    print("KERNEL_OK")
</pallas_src>

<mosaic_0001>
module attributes {stable_mosaic.version = 11 : i64} {
  func.func @_conv_in_lrelu_kernel(%arg0: i32, %arg1: i32, %arg2: memref<1x128x48xbf16, #tpu.memory_space<vmem>>, %arg3: memref<1x48x8xbf16, #tpu.memory_space<vmem>>, %arg4: memref<1x8xf32, #tpu.memory_space<vmem>>, %arg5: memref<1x8xf32, #tpu.memory_space<vmem>>, %arg6: memref<1x128x8xf32, #tpu.memory_space<vmem>>) attributes {dimension_semantics = [#tpu.dimension_semantics<parallel>, #tpu.dimension_semantics<arbitrary>], iteration_bounds = array<i64: 2, 1>, scalar_prefetch = 0 : i64, scratch_operands = 0 : i64, tpu.core_type = #tpu.core_type<tc>, window_params = [{transform_indices = @transform_0, window_bounds = array<i64: 1, 128, 48>}, {transform_indices = @transform_1, window_bounds = array<i64: 1, 48, 8>}, {pipeline_mode = #tpu.pipeline_mode<synchronous>, transform_indices = @transform_2, window_bounds = array<i64: 1, 8>}, {pipeline_mode = #tpu.pipeline_mode<synchronous>, transform_indices = @transform_3, window_bounds = array<i64: 1, 8>}, {transform_indices = @transform_4, window_bounds = array<i64: 1, 128, 8>}]} {
    %c0_i32 = arith.constant 0 : i32
    %0 = arith.cmpi eq, %arg1, %c0_i32 : i32
    %1 = arith.extui %0 : i1 to i32
    %c0_i32_0 = arith.constant 0 : i32
    %2 = arith.cmpi ne, %1, %c0_i32_0 : i32
    scf.if %2 {
      %cst_14 = arith.constant 0.000000e+00 : f32
      %17 = vector.broadcast %cst_14 : f32 to vector<1x128x8xf32>
      %c0_15 = arith.constant 0 : index
      %c0_16 = arith.constant 0 : index
      %c0_17 = arith.constant 0 : index
      %18 = vector.load %arg6[%c0_15, %c0_16, %c0_17] : memref<1x128x8xf32, #tpu.memory_space<vmem>>, vector<1x128x8xf32>
      tpu.vector_store %arg6[%c0_15, %c0_16, %c0_17], %17 {strides = array<i32>} : memref<1x128x8xf32, #tpu.memory_space<vmem>>, vector<1x128x8xf32>,
    } else {
    }
    %c0 = arith.constant 0 : index
    %c0_1 = arith.constant 0 : index
    %c0_2 = arith.constant 0 : index
    %3 = vector.load %arg6[%c0, %c0_1, %c0_2] : memref<1x128x8xf32, #tpu.memory_space<vmem>>, vector<1x128x8xf32>
    %4 = vector.shape_cast %3 : vector<1x128x8xf32> to vector<128x8xf32>
    %c0_3 = arith.constant 0 : index
    %c0_4 = arith.constant 0 : index
    %c0_5 = arith.constant 0 : index
    %5 = vector.load %arg2[%c0_3, %c0_4, %c0_5] : memref<1x128x48xbf16, #tpu.memory_space<vmem>>, vector<1x128x48xbf16>
    %6 = vector.shape_cast %5 : vector<1x128x48xbf16> to vector<128x48xbf16>
    %c0_6 = arith.constant 0 : index
    %c0_7 = arith.constant 0 : index
    %c0_8 = arith.constant 0 : index
    %7 = vector.load %arg3[%c0_6, %c0_7, %c0_8] : memref<1x48x8xbf16, #tpu.memory_space<vmem>>, vector<1x48x8xbf16>
    %8 = vector.shape_cast %7 : vector<1x48x8xbf16> to vector<48x8xbf16>
    %cst = arith.constant dense<0.000000e+00> : vector<128x8xf32>
    %9 = tpu.matmul %6, %8, %cst {dimension_numbers = #tpu.dot_dimension_numbers<[1], [0], [0], [1], [0, 0, 1, 1], [], []>} : vector<128x48xbf16>, vector<48x8xbf16>, vector<128x8xf32> -> vector<128x8xf32>
    %10 = arith.addf %4, %9 : vector<128x8xf32>
    %c0_9 = arith.constant 0 : index
    %c0_10 = arith.constant 0 : index
    %c0_11 = arith.constant 0 : index
    %11 = vector.load %arg6[%c0_9, %c0_10, %c0_11] : memref<1x128x8xf32, #tpu.memory_space<vmem>>, vector<1x128x8xf32>
    %12 = vector.shape_cast %11 : vector<1x128x8xf32> to vector<128x8xf32>
    %13 = vector.shape_cast %10 : vector<128x8xf32> to vector<1x128x8xf32>
    tpu.vector_store %arg6[%c0_9, %c0_10, %c0_11], %13 {strides = array<i32>} : memref<1x128x8xf32, #tpu.memory_space<vmem>>, vector<1x128x8xf32>,
    %c0_i32_12 = arith.constant 0 : i32
    %14 = arith.cmpi eq, %arg1, %c0_i32_12 : i32
    %15 = arith.extui %14 : i1 to i32
    %c0_i32_13 = arith.constant 0 : i32
    %16 = arith.cmpi ne, %15, %c0_i32_13 : i32
    scf.if %16 {
      %17 = tpu.iota {dimensions = array<i32: 0>} : vector<128x1xi32>
      %c16_i32 = arith.constant 16 : i32
      %c0_i32_14 = arith.constant 0 : i32
      %18 = arith.cmpi eq, %c16_i32, %c0_i32_14 : i32
      %c1_i32 = arith.constant 1 : i32
      %19 = arith.select %18, %c1_i32, %c16_i32 : i32
      %20 = vector.broadcast %19 : i32 to vector<128x1xi32>
      %21 = arith.remsi %17, %20 : vector<128x1xi32>
      %c0_i32_15 = arith.constant 0 : i32
      %22 = vector.broadcast %c0_i32_15 : i32 to vector<128x1xi32>
      %23 = arith.cmpi ne, %21, %22 : vector<128x1xi32>
      %c0_i32_16 = arith.constant 0 : i32
      %24 = vector.broadcast %c0_i32_16 : i32 to vector<128x1xi32>
      %25 = arith.cmpi slt, %21, %24 : vector<128x1xi32>
      %c0_i32_17 = arith.constant 0 : i32
      %26 = arith.cmpi slt, %19, %c0_i32_17 : i32
      %27 = vector.broadcast %26 : i1 to vector<128x1xi1>
      %28 = vector.broadcast %27 : vector<128x1xi1> to vector<128x1xi1>
      %29 = arith.xori %25, %28 : vector<128x1xi1>
      %30 = arith.andi %29, %23 : vector<128x1xi1>
      %31 = vector.broadcast %19 : i32 to vector<128x1xi32>
      %32 = arith.addi %21, %31 : vector<128x1xi32>
      %33 = arith.select %30, %32, %21 : vector<128x1xi1>, vector<128x1xi32>
      %c8_i32 = arith.constant 8 : i32
      %34 = vector.broadcast %c8_i32 : i32 to vector<128x1xi32>
      %35 = arith.cmpi slt, %33, %34 : vector<128x1xi32>
      %36 = arith.extui %35 : vector<128x1xi1> to vector<128x1xi32>
      %37 = arith.sitofp %36 : vector<128x1xi32> to vector<128x1xf32>
      %c0_18 = arith.constant 0 : index
      %c0_19 = arith.constant 0 : index
      %38 = vector.load %arg4[%c0_18, %c0_19] : memref<1x8xf32, #tpu.memory_space<vmem>>, vector<1x8xf32>
      %c0_20 = arith.constant 0 : index
      %c0_21 = arith.constant 0 : index
      %39 = vector.load %arg5[%c0_20, %c0_21] : memref<1x8xf32, #tpu.memory_space<vmem>>, vector<1x8xf32>
      %c0_22 = arith.constant 0 : index
      %c0_23 = arith.constant 0 : index
      %c0_24 = arith.constant 0 : index
      %40 = vector.load %arg6[%c0_22, %c0_23, %c0_24] : memref<1x128x8xf32, #tpu.memory_space<vmem>>, vector<1x128x8xf32>
      %41 = vector.shape_cast %40 : vector<1x128x8xf32> to vector<128x8xf32>
      %42 = vector.broadcast %37 : vector<128x1xf32> to vector<128x8xf32>
      %43 = arith.mulf %41, %42 : vector<128x8xf32>
      %cst_25 = arith.constant dense<0.000000e+00> : vector<8xf32>
      %44 = vector.multi_reduction <add>, %43, %cst_25 [0] : vector<128x8xf32> to vector<8xf32>
      %45 = vector.shape_cast %44 : vector<8xf32> to vector<1x8xf32>
      %cst_26 = arith.constant 1.562500e-02 : f32
      %46 = vector.broadcast %cst_26 : f32 to vector<1x8xf32>
      %47 = arith.mulf %45, %46 : vector<1x8xf32>
      %48 = vector.broadcast %47 : vector<1x8xf32> to vector<128x8xf32>
      %49 = arith.subf %43, %48 : vector<128x8xf32>
      %50 = vector.broadcast %37 : vector<128x1xf32> to vector<128x8xf32>
      %51 = arith.mulf %49, %50 : vector<128x8xf32>
      %52 = arith.mulf %51, %51 : vector<128x8xf32>
      %cst_27 = arith.constant dense<0.000000e+00> : vector<8xf32>
      %53 = vector.multi_reduction <add>, %52, %cst_27 [0] : vector<128x8xf32> to vector<8xf32>
      %54 = vector.shape_cast %53 : vector<8xf32> to vector<1x8xf32>
      %cst_28 = arith.constant 1.562500e-02 : f32
      %55 = vector.broadcast %cst_28 : f32 to vector<1x8xf32>
      %56 = arith.mulf %54, %55 : vector<1x8xf32>
      %cst_29 = arith.constant 9.99999974E-6 : f32
      %57 = vector.broadcast %cst_29 : f32 to vector<1x8xf32>
      %58 = arith.addf %56, %57 : vector<1x8xf32>
      %59 = math.rsqrt %58 : vector<1x8xf32>
      %60 = vector.broadcast %59 : vector<1x8xf32> to vector<128x8xf32>
      %61 = arith.mulf %51, %60 : vector<128x8xf32>
      %62 = vector.broadcast %38 : vector<1x8xf32> to vector<128x8xf32>
      %63 = arith.mulf %61, %62 : vector<128x8xf32>
      %64 = vector.broadcast %39 : vector<1x8xf32> to vector<128x8xf32>
      %65 = arith.addf %63, %64 : vector<128x8xf32>
      %cst_30 = arith.constant 0.000000e+00 : f32
      %66 = vector.broadcast %cst_30 : f32 to vector<128x8xf32>
      %67 = arith.cmpf oge, %65, %66 : vector<128x8xf32>
      %cst_31 = arith.constant 0.00999999977 : f32
      %68 = vector.broadcast %cst_31 : f32 to vector<128x8xf32>
      %69 = arith.mulf %68, %65 : vector<128x8xf32>
      %70 = arith.select %67, %65, %69 : vector<128x8xi1>, vector<128x8xf32>
      %71 = vector.broadcast %37 : vector<128x1xf32> to vector<128x8xf32>
      %72 = arith.mulf %70, %71 : vector<128x8xf32>
      %c0_32 = arith.constant 0 : index
      %c0_33 = arith.constant 0 : index
      %c0_34 = arith.constant 0 : index
      %73 = vector.load %arg6[%c0_32, %c0_33, %c0_34] : memref<1x128x8xf32, #tpu.memory_space<vmem>>, vector<1x128x8xf32>
      %74 = vector.shape_cast %73 : vector<1x128x8xf32> to vector<128x8xf32>
      %75 = vector.shape_cast %72 : vector<128x8xf32> to vector<1x128x8xf32>
      tpu.vector_store %arg6[%c0_32, %c0_33, %c0_34], %75 {strides = array<i32>} : memref<1x128x8xf32, #tpu.memory_space<vmem>>, vector<1x128x8xf32>,
    } else {
    }
    return
  }
  func.func @transform_0(%arg0: i32, %arg1: i32) -> (i32, i32, i32) {
    %c0_i32 = arith.constant 0 : i32
    %c0_i32_0 = arith.constant 0 : i32
    return %arg0, %c0_i32, %arg1 : i32, i32, i32
  }
  func.func @transform_1(%arg0: i32, %arg1: i32) -> (i32, i32, i32) {
    %c0_i32 = arith.constant 0 : i32
    %c0_i32_0 = arith.constant 0 : i32
    %c0_i32_1 = arith.constant 0 : i32
    return %c0_i32, %arg1, %c0_i32_0 : i32, i32, i32
  }
  func.func @transform_2(%arg0: i32, %arg1: i32) -> (i32, i32) {
    %c0_i32 = arith.constant 0 : i32
    %c0_i32_0 = arith.constant 0 : i32
    %c0_i32_1 = arith.constant 0 : i32
    return %c0_i32, %c0_i32_0 : i32, i32
  }
  func.func @transform_3(%arg0: i32, %arg1: i32) -> (i32, i32) {
    %c0_i32 = arith.constant 0 : i32
    %c0_i32_0 = arith.constant 0 : i32
    %c0_i32_1 = arith.constant 0 : i32
    return %c0_i32, %c0_i32_0 : i32, i32
  }
  func.func @transform_4(%arg0: i32, %arg1: i32) -> (i32, i32, i32) {
    %c0_i32 = arith.constant 0 : i32
    %c0_i32_0 = arith.constant 0 : i32
    %c0_i32_1 = arith.constant 0 : i32
    return %arg0, %c0_i32, %c0_i32_0 : i32, i32, i32
  }
}

module attributes {stable_mosaic.version = 11 : i64} {
  func.func @_conv_in_lrelu_kernel(%arg0: i32, %arg1: i32, %arg2: memref<1x40x32xbf16, #tpu.memory_space<vmem>>, %arg3: memref<4x32x16xbf16, #tpu.memory_space<vmem>>, %arg4: memref<1x16xf32, #tpu.memory_space<vmem>>, %arg5: memref<1x16xf32, #tpu.memory_space<vmem>>, %arg6: memref<1x32x16xf32, #tpu.memory_space<vmem>>) attributes {dimension_semantics = [#tpu.dimension_semantics<parallel>, #tpu.dimension_semantics<arbitrary>], iteration_bounds = array<i64: 2, 1>, scalar_prefetch = 0 : i64, scratch_operands = 0 : i64, tpu.core_type = #tpu.core_type<tc>, window_params = [{transform_indices = @transform_0, window_bounds = array<i64: 1, 40, 32>}, {transform_indices = @transform_1, window_bounds = array<i64: 4, 32, 16>}, {pipeline_mode = #tpu.pipeline_mode<synchronous>, transform_indices = @transform_2, window_bounds = array<i64: 1, 16>}, {pipeline_mode = #tpu.pipeline_mode<synchronous>, transform_indices = @transform_3, window_bounds = array<i64: 1, 16>}, {transform_indices = @transform_4, window_bounds = array<i64: 1, 32, 16>}]} {
    %c0_i32 = arith.constant 0 : i32
    %0 = arith.cmpi eq, %arg1, %c0_i32 : i32
    %1 = arith.extui %0 : i1 to i32
    %c0_i32_0 = arith.constant 0 : i32
    %2 = arith.cmpi ne, %1, %c0_i32_0 : i32
    scf.if %2 {
      %cst_25 = arith.constant 0.000000e+00 : f32
      %32 = vector.broadcast %cst_25 : f32 to vector<1x32x16xf32>
      %c0_26 = arith.constant 0 : index
      %c0_27 = arith.constant 0 : index
      %c0_28 = arith.constant 0 : index
      %33 = vector.load %arg6[%c0_26, %c0_27, %c0_28] : memref<1x32x16xf32, #tpu.memory_space<vmem>>, vector<1x32x16xf32>
      tpu.vector_store %arg6[%c0_26, %c0_27, %c0_28], %32 {strides = array<i32>} : memref<1x32x16xf32, #tpu.memory_space<vmem>>, vector<1x32x16xf32>,
    } else {
    }
    %c0 = arith.constant 0 : index
    %c0_1 = arith.constant 0 : index
    %c0_2 = arith.constant 0 : index
    %3 = vector.load %arg6[%c0, %c0_1, %c0_2] : memref<1x32x16xf32, #tpu.memory_space<vmem>>, vector<1x32x16xf32>
    %4 = vector.shape_cast %3 : vector<1x32x16xf32> to vector<32x16xf32>
    %c0_3 = arith.constant 0 : index
    %c0_4 = arith.constant 0 : index
    %c0_5 = arith.constant 0 : index
    %5 = vector.load %arg2[%c0_3, %c0_4, %c0_5] : memref<1x40x32xbf16, #tpu.memory_space<vmem>>, vector<1x32x32xbf16>
    %6 = vector.shape_cast %5 : vector<1x32x32xbf16> to vector<32x32xbf16>
    %c0_6 = arith.constant 0 : index
    %c8 = arith.constant 8 : index
    %c0_7 = arith.constant 0 : index
    %7 = vector.load %arg2[%c0_6, %c8, %c0_7] : memref<1x40x32xbf16, #tpu.memory_space<vmem>>, vector<1x32x32xbf16>
    %8 = vector.shape_cast %7 : vector<1x32x32xbf16> to vector<32x32xbf16>
    %c0_8 = arith.constant 0 : index
    %c0_9 = arith.constant 0 : index
    %c0_10 = arith.constant 0 : index
    %9 = vector.load %arg3[%c0_8, %c0_9, %c0_10] : memref<4x32x16xbf16, #tpu.memory_space<vmem>>, vector<1x32x16xbf16>
    %10 = vector.shape_cast %9 : vector<1x32x16xbf16> to vector<32x16xbf16>
    %cst = arith.constant dense<0.000000e+00> : vector<32x16xf32>
    %11 = tpu.matmul %6, %10, %cst {dimension_numbers = #tpu.dot_dimension_numbers<[1], [0], [0], [1], [0, 0, 1, 1], [], []>} : vector<32x32xbf16>, vector<32x16xbf16>, vector<32x16xf32> -> vector<32x16xf32>
    %c2 = arith.constant 2 : index
    %c0_11 = arith.constant 0 : index
    %c0_12 = arith.constant 0 : index
    %12 = vector.load %arg3[%c2, %c0_11, %c0_12] : memref<4x32x16xbf16, #tpu.memory_space<vmem>>, vector<1x32x16xbf16>
    %13 = vector.shape_cast %12 : vector<1x32x16xbf16> to vector<32x16xbf16>
    %cst_13 = arith.constant dense<0.000000e+00> : vector<32x16xf32>
    %14 = tpu.matmul %8, %13, %cst_13 {dimension_numbers = #tpu.dot_dimension_numbers<[1], [0], [0], [1], [0, 0, 1, 1], [], []>} : vector<32x32xbf16>, vector<32x16xbf16>, vector<32x16xf32> -> vector<32x16xf32>
    %15 = arith.addf %11, %14 : vector<32x16xf32>
    %c1 = arith.constant 1 : index
    %c0_14 = arith.constant 0 : index
    %c0_15 = arith.constant 0 : index
    %16 = vector.load %arg3[%c1, %c0_14, %c0_15] : memref<4x32x16xbf16, #tpu.memory_space<vmem>>, vector<1x32x16xbf16>
    %17 = vector.shape_cast %16 : vector<1x32x16xbf16> to vector<32x16xbf16>
    %cst_16 = arith.constant dense<0.000000e+00> : vector<32x16xf32>
    %18 = tpu.matmul %6, %17, %cst_16 {dimension_numbers = #tpu.dot_dimension_numbers<[1], [0], [0], [1], [0, 0, 1, 1], [], []>} : vector<32x32xbf16>, vector<32x16xbf16>, vector<32x16xf32> -> vector<32x16xf32>
    %c3 = arith.constant 3 : index
    %c0_17 = arith.constant 0 : index
    %c0_18 = arith.constant 0 : index
    %19 = vector.load %arg3[%c3, %c0_17, %c0_18] : memref<4x32x16xbf16, #tpu.memory_space<vmem>>, vector<1x32x16xbf16>
    %20 = vector.shape_cast %19 : vector<1x32x16xbf16> to vector<32x16xbf16>
    %cst_19 = arith.constant dense<0.000000e+00> : vector<32x16xf32>
    %21 = tpu.matmul %8, %20, %cst_19 {dimension_numbers = #tpu.dot_dimension_numbers<[1], [0], [0], [1], [0, 0, 1, 1], [], []>} : vector<32x32xbf16>, vector<32x16xbf16>, vector<32x16xf32> -> vector<32x16xf32>
    %22 = arith.addf %18, %21 : vector<32x16xf32>
    %23 = arith.addf %4, %15 : vector<32x16xf32>
    %c31_i32 = arith.constant 31 : i32
    %24 = tpu.dynamic_rotate %22 by %c31_i32 dim 0 : vector<32x16xf32>, i32 -> vector<32x16xf32>
    %25 = arith.addf %23, %24 : vector<32x16xf32>
    %c0_20 = arith.constant 0 : index
    %c0_21 = arith.constant 0 : index
    %c0_22 = arith.constant 0 : index
    %26 = vector.load %arg6[%c0_20, %c0_21, %c0_22] : memref<1x32x16xf32, #tpu.memory_space<vmem>>, vector<1x32x16xf32>
    %27 = vector.shape_cast %26 : vector<1x32x16xf32> to vector<32x16xf32>
    %28 = vector.shape_cast %25 : vector<32x16xf32> to vector<1x32x16xf32>
    tpu.vector_store %arg6[%c0_20, %c0_21, %c0_22], %28 {strides = array<i32>} : memref<1x32x16xf32, #tpu.memory_space<vmem>>, vector<1x32x16xf32>,
    %c0_i32_23 = arith.constant 0 : i32
    %29 = arith.cmpi eq, %arg1, %c0_i32_23 : i32
    %30 = arith.extui %29 : i1 to i32
    %c0_i32_24 = arith.constant 0 : i32
    %31 = arith.cmpi ne, %30, %c0_i32_24 : i32
    scf.if %31 {
      %32 = tpu.iota {dimensions = array<i32: 0>} : vector<32x1xi32>
      %c8_i32 = arith.constant 8 : i32
      %c0_i32_25 = arith.constant 0 : i32
      %33 = arith.cmpi eq, %c8_i32, %c0_i32_25 : i32
      %c1_i32 = arith.constant 1 : i32
      %34 = arith.select %33, %c1_i32, %c8_i32 : i32
      %35 = vector.broadcast %34 : i32 to vector<32x1xi32>
      %36 = arith.remsi %32, %35 : vector<32x1xi32>
      %c0_i32_26 = arith.constant 0 : i32
      %37 = vector.broadcast %c0_i32_26 : i32 to vector<32x1xi32>
      %38 = arith.cmpi ne, %36, %37 : vector<32x1xi32>
      %c0_i32_27 = arith.constant 0 : i32
      %39 = vector.broadcast %c0_i32_27 : i32 to vector<32x1xi32>
      %40 = arith.cmpi slt, %36, %39 : vector<32x1xi32>
      %c0_i32_28 = arith.constant 0 : i32
      %41 = arith.cmpi slt, %34, %c0_i32_28 : i32
      %42 = vector.broadcast %41 : i1 to vector<32x1xi1>
      %43 = vector.broadcast %42 : vector<32x1xi1> to vector<32x1xi1>
      %44 = arith.xori %40, %43 : vector<32x1xi1>
      %45 = arith.andi %44, %38 : vector<32x1xi1>
      %46 = vector.broadcast %34 : i32 to vector<32x1xi32>
      %47 = arith.addi %36, %46 : vector<32x1xi32>
      %48 = arith.select %45, %47, %36 : vector<32x1xi1>, vector<32x1xi32>
      %c4_i32 = arith.constant 4 : i32
      %49 = vector.broadcast %c4_i32 : i32 to vector<32x1xi32>
      %50 = arith.cmpi slt, %48, %49 : vector<32x1xi32>
      %51 = arith.extui %50 : vector<32x1xi1> to vector<32x1xi32>
      %52 = arith.sitofp %51 : vector<32x1xi32> to vector<32x1xf32>
      %c0_29 = arith.constant 0 : index
      %c0_30 = arith.constant 0 : index
      %53 = vector.load %arg4[%c0_29, %c0_30] : memref<1x16xf32, #tpu.memory_space<vmem>>, vector<1x16xf32>
      %c0_31 = arith.constant 0 : index
      %c0_32 = arith.constant 0 : index
      %54 = vector.load %arg5[%c0_31, %c0_32] : memref<1x16xf32, #tpu.memory_space<vmem>>, vector<1x16xf32>
      %c0_33 = arith.constant 0 : index
      %c0_34 = arith.constant 0 : index
      %c0_35 = arith.constant 0 : index
      %55 = vector.load %arg6[%c0_33, %c0_34, %c0_35] : memref<1x32x16xf32, #tpu.memory_space<vmem>>, vector<1x32x16xf32>
      %56 = vector.shape_cast %55 : vector<1x32x16xf32> to vector<32x16xf32>
      %57 = vector.broadcast %52 : vector<32x1xf32> to vector<32x16xf32>
      %58 = arith.mulf %56, %57 : vector<32x16xf32>
      %cst_36 = arith.constant dense<0.000000e+00> : vector<16xf32>
      %59 = vector.multi_reduction <add>, %58, %cst_36 [0] : vector<32x16xf32> to vector<16xf32>
      %60 = vector.shape_cast %59 : vector<16xf32> to vector<1x16xf32>
      %cst_37 = arith.constant 6.250000e-02 : f32
      %61 = vector.broadcast %cst_37 : f32 to vector<1x16xf32>
      %62 = arith.mulf %60, %61 : vector<1x16xf32>
      %63 = vector.broadcast %62 : vector<1x16xf32> to vector<32x16xf32>
      %64 = arith.subf %58, %63 : vector<32x16xf32>
      %65 = vector.broadcast %52 : vector<32x1xf32> to vector<32x16xf32>
      %66 = arith.mulf %64, %65 : vector<32x16xf32>
      %67 = arith.mulf %66, %66 : vector<32x16xf32>
      %cst_38 = arith.constant dense<0.000000e+00> : vector<16xf32>
      %68 = vector.multi_reduction <add>, %67, %cst_38 [0] : vector<32x16xf32> to vector<16xf32>
      %69 = vector.shape_cast %68 : vector<16xf32> to vector<1x16xf32>
      %cst_39 = arith.constant 6.250000e-02 : f32
      %70 = vector.broadcast %cst_39 : f32 to vector<1x16xf32>
      %71 = arith.mulf %69, %70 : vector<1x16xf32>
      %cst_40 = arith.constant 9.99999974E-6 : f32
      %72 = vector.broadcast %cst_40 : f32 to vector<1x16xf32>
      %73 = arith.addf %71, %72 : vector<1x16xf32>
      %74 = math.rsqrt %73 : vector<1x16xf32>
      %75 = vector.broadcast %74 : vector<1x16xf32> to vector<32x16xf32>
      %76 = arith.mulf %66, %75 : vector<32x16xf32>
      %77 = vector.broadcast %53 : vector<1x16xf32> to vector<32x16xf32>
      %78 = arith.mulf %76, %77 : vector<32x16xf32>
      %79 = vector.broadcast %54 : vector<1x16xf32> to vector<32x16xf32>
      %80 = arith.addf %78, %79 : vector<32x16xf32>
      %cst_41 = arith.constant 0.000000e+00 : f32
      %81 = vector.broadcast %cst_41 : f32 to vector<32x16xf32>
      %82 = arith.cmpf oge, %80, %81 : vector<32x16xf32>
      %cst_42 = arith.constant 0.00999999977 : f32
      %83 = vector.broadcast %cst_42 : f32 to vector<32x16xf32>
      %84 = arith.mulf %83, %80 : vector<32x16xf32>
      %85 = arith.select %82, %80, %84 : vector<32x16xi1>, vector<32x16xf32>
      %86 = vector.broadcast %52 : vector<32x1xf32> to vector<32x16xf32>
      %87 = arith.mulf %85, %86 : vector<32x16xf32>
      %c0_43 = arith.constant 0 : index
      %c0_44 = arith.constant 0 : index
      %c0_45 = arith.constant 0 : index
      %88 = vector.load %arg6[%c0_43, %c0_44, %c0_45] : memref<1x32x16xf32, #tpu.memory_space<vmem>>, vector<1x32x16xf32>
      %89 = vector.shape_cast %88 : vector<1x32x16xf32> to vector<32x16xf32>
      %90 = vector.shape_cast %87 : vector<32x16xf32> to vector<1x32x16xf32>
      tpu.vector_store %arg6[%c0_43, %c0_44, %c0_45], %90 {strides = array<i32>} : memref<1x32x16xf32, #tpu.memory_space<vmem>>, vector<1x32x16xf32>,
    } else {
    }
    return
  }
  func.func @transform_0(%arg0: i32, %arg1: i32) -> (i32, i32, i32) {
    %c0_i32 = arith.constant 0 : i32
    %c0_i32_0 = arith.constant 0 : i32
    return %arg0, %c0_i32, %arg1 : i32, i32, i32
  }
  func.func @transform_1(%arg0: i32, %arg1: i32) -> (i32, i32, i32) {
    %c0_i32 = arith.constant 0 : i32
    %c0_i32_0 = arith.constant 0 : i32
    %c0_i32_1 = arith.constant 0 : i32
    return %c0_i32, %arg1, %c0_i32_0 : i32, i32, i32
  }
  func.func @transform_2(%arg0: i32, %arg1: i32) -> (i32, i32) {
    %c0_i32 = arith.constant 0 : i32
    %c0_i32_0 = arith.constant 0 : i32
    %c0_i32_1 = arith.constant 0 : i32
    return %c0_i32, %c0_i32_0 : i32, i32
  }
  func.func @transform_3(%arg0: i32, %arg1: i32) -> (i32, i32) {
    %c0_i32 = arith.constant 0 : i32
    %c0_i32_0 = arith.constant 0 : i32
    %c0_i32_1 = arith.constant 0 : i32
    return %c0_i32, %c0_i32_0 : i32, i32
  }
  func.func @transform_4(%arg0: i32, %arg1: i32) -> (i32, i32, i32) {
    %c0_i32 = arith.constant 0 : i32
    %c0_i32_0 = arith.constant 0 : i32
    %c0_i32_1 = arith.constant 0 : i32
    return %arg0, %c0_i32, %c0_i32_0 : i32, i32, i32
  }
}

module attributes {stable_mosaic.version = 11 : i64} {
  func.func @_fused_fc_kernel(%arg0: i32, %arg1: i32, %arg2: memref<2x128xbf16, #tpu.memory_space<vmem>>, %arg3: memref<128x64xbf16, #tpu.memory_space<vmem>>, %arg4: memref<1x64xf32, #tpu.memory_space<vmem>>, %arg5: memref<64x128xbf16, #tpu.memory_space<vmem>>, %arg6: memref<1x128xf32, #tpu.memory_space<vmem>>, %arg7: memref<2x128xf32, #tpu.memory_space<vmem>>, %arg8: memref<2x64xf32, #tpu.memory_space<vmem>>) attributes {dimension_semantics = [#tpu.dimension_semantics<parallel>, #tpu.dimension_semantics<arbitrary>], iteration_bounds = array<i64: 1, 1>, scalar_prefetch = 0 : i64, scratch_operands = 1 : i64, tpu.core_type = #tpu.core_type<tc>, window_params = [{transform_indices = @transform_0, window_bounds = array<i64: 2, 128>}, {transform_indices = @transform_1, window_bounds = array<i64: 128, 64>}, {pipeline_mode = #tpu.pipeline_mode<synchronous>, transform_indices = @transform_2, window_bounds = array<i64: 1, 64>}, {pipeline_mode = #tpu.pipeline_mode<synchronous>, transform_indices = @transform_3, window_bounds = array<i64: 64, 128>}, {pipeline_mode = #tpu.pipeline_mode<synchronous>, transform_indices = @transform_4, window_bounds = array<i64: 1, 128>}, {transform_indices = @transform_5, window_bounds = array<i64: 2, 128>}]} {
    %c0_i32 = arith.constant 0 : i32
    %0 = arith.cmpi eq, %arg1, %c0_i32 : i32
    %1 = arith.extui %0 : i1 to i32
    %c0_i32_0 = arith.constant 0 : i32
    %2 = arith.cmpi ne, %1, %c0_i32_0 : i32
    scf.if %2 {
      %cst_10 = arith.constant 0.000000e+00 : f32
      %12 = vector.broadcast %cst_10 : f32 to vector<2x64xf32>
      %c0_11 = arith.constant 0 : index
      %c0_12 = arith.constant 0 : index
      %13 = vector.load %arg8[%c0_11, %c0_12] : memref<2x64xf32, #tpu.memory_space<vmem>>, vector<2x64xf32>
      tpu.vector_store %arg8[%c0_11, %c0_12], %12 {strides = array<i32>} : memref<2x64xf32, #tpu.memory_space<vmem>>, vector<2x64xf32>,
    } else {
    }
    %c0 = arith.constant 0 : index
    %c0_1 = arith.constant 0 : index
    %3 = vector.load %arg8[%c0, %c0_1] : memref<2x64xf32, #tpu.memory_space<vmem>>, vector<2x64xf32>
    %c0_2 = arith.constant 0 : index
    %c0_3 = arith.constant 0 : index
    %4 = vector.load %arg2[%c0_2, %c0_3] : memref<2x128xbf16, #tpu.memory_space<vmem>>, vector<2x128xbf16>
    %c0_4 = arith.constant 0 : index
    %c0_5 = arith.constant 0 : index
    %5 = vector.load %arg3[%c0_4, %c0_5] : memref<128x64xbf16, #tpu.memory_space<vmem>>, vector<128x64xbf16>
    %cst = arith.constant dense<0.000000e+00> : vector<2x64xf32>
    %6 = tpu.matmul %4, %5, %cst {dimension_numbers = #tpu.dot_dimension_numbers<[1], [0], [0], [1], [0, 0, 1, 1], [], []>} : vector<2x128xbf16>, vector<128x64xbf16>, vector<2x64xf32> -> vector<2x64xf32>
    %7 = arith.addf %3, %6 : vector<2x64xf32>
    %c0_6 = arith.constant 0 : index
    %c0_7 = arith.constant 0 : index
    %8 = vector.load %arg8[%c0_6, %c0_7] : memref<2x64xf32, #tpu.memory_space<vmem>>, vector<2x64xf32>
    tpu.vector_store %arg8[%c0_6, %c0_7], %7 {strides = array<i32>} : memref<2x64xf32, #tpu.memory_space<vmem>>, vector<2x64xf32>,
    %c0_i32_8 = arith.constant 0 : i32
    %9 = arith.cmpi eq, %arg1, %c0_i32_8 : i32
    %10 = arith.extui %9 : i1 to i32
    %c0_i32_9 = arith.constant 0 : i32
    %11 = arith.cmpi ne, %10, %c0_i32_9 : i32
    scf.if %11 {
      %c0_10 = arith.constant 0 : index
      %c0_11 = arith.constant 0 : index
      %12 = vector.load %arg8[%c0_10, %c0_11] : memref<2x64xf32, #tpu.memory_space<vmem>>, vector<2x64xf32>
      %c0_12 = arith.constant 0 : index
      %c0_13 = arith.constant 0 : index
      %13 = vector.load %arg4[%c0_12, %c0_13] : memref<1x64xf32, #tpu.memory_space<vmem>>, vector<1x64xf32>
      %14 = vector.broadcast %13 : vector<1x64xf32> to vector<2x64xf32>
      %15 = arith.addf %12, %14 : vector<2x64xf32>
      %cst_14 = arith.constant 0.000000e+00 : f32
      %16 = vector.broadcast %cst_14 : f32 to vector<2x64xf32>
      %17 = arith.cmpf oge, %15, %16 : vector<2x64xf32>
      %cst_15 = arith.constant 0.00999999977 : f32
      %18 = vector.broadcast %cst_15 : f32 to vector<2x64xf32>
      %19 = arith.mulf %18, %15 : vector<2x64xf32>
      %20 = arith.select %17, %15, %19 : vector<2x64xi1>, vector<2x64xf32>
      %21 = arith.truncf %20 : vector<2x64xf32> to vector<2x64xbf16>
      %c0_16 = arith.constant 0 : index
      %c0_17 = arith.constant 0 : index
      %22 = vector.load %arg5[%c0_16, %c0_17] : memref<64x128xbf16, #tpu.memory_space<vmem>>, vector<64x128xbf16>
      %cst_18 = arith.constant dense<0.000000e+00> : vector<2x128xf32>
      %23 = tpu.matmul %21, %22, %cst_18 {dimension_numbers = #tpu.dot_dimension_numbers<[1], [0], [0], [1], [0, 0, 1, 1], [], []>} : vector<2x64xbf16>, vector<64x128xbf16>, vector<2x128xf32> -> vector<2x128xf32>
      %c0_19 = arith.constant 0 : index
      %c0_20 = arith.constant 0 : index
      %24 = vector.load %arg6[%c0_19, %c0_20] : memref<1x128xf32, #tpu.memory_space<vmem>>, vector<1x128xf32>
      %25 = vector.broadcast %24 : vector<1x128xf32> to vector<2x128xf32>
      %26 = arith.addf %23, %25 : vector<2x128xf32>
      %c0_21 = arith.constant 0 : index
      %c0_22 = arith.constant 0 : index
      %27 = vector.load %arg7[%c0_21, %c0_22] : memref<2x128xf32, #tpu.memory_space<vmem>>, vector<2x128xf32>
      tpu.vector_store %arg7[%c0_21, %c0_22], %26 {strides = array<i32>} : memref<2x128xf32, #tpu.memory_space<vmem>>, vector<2x128xf32>,
    } else {
    }
    return
  }
  func.func @transform_0(%arg0: i32, %arg1: i32) -> (i32, i32) {
    %c0_i32 = arith.constant 0 : i32
    return %arg0, %arg1 : i32, i32
  }
  func.func @transform_1(%arg0: i32, %arg1: i32) -> (i32, i32) {
    %c0_i32 = arith.constant 0 : i32
    %c0_i32_0 = arith.constant 0 : i32
    return %arg1, %c0_i32 : i32, i32
  }
  func.func @transform_2(%arg0: i32, %arg1: i32) -> (i32, i32) {
    %c0_i32 = arith.constant 0 : i32
    %c0_i32_0 = arith.constant 0 : i32
    %c0_i32_1 = arith.constant 0 : i32
    return %c0_i32, %c0_i32_0 : i32, i32
  }
  func.func @transform_3(%arg0: i32, %arg1: i32) -> (i32, i32) {
    %c0_i32 = arith.constant 0 : i32
    %c0_i32_0 = arith.constant 0 : i32
    %c0_i32_1 = arith.constant 0 : i32
    return %c0_i32, %c0_i32_0 : i32, i32
  }
  func.func @transform_4(%arg0: i32, %arg1: i32) -> (i32, i32) {
    %c0_i32 = arith.constant 0 : i32
    %c0_i32_0 = arith.constant 0 : i32
    %c0_i32_1 = arith.constant 0 : i32
    return %c0_i32, %c0_i32_0 : i32, i32
  }
  func.func @transform_5(%arg0: i32, %arg1: i32) -> (i32, i32) {
    %c0_i32 = arith.constant 0 : i32
    %c0_i32_0 = arith.constant 0 : i32
    return %arg0, %c0_i32 : i32, i32
  }
}

module attributes {stable_mosaic.version = 11 : i64} {
  func.func @_conv_in_lrelu_kernel(%arg0: i32, %arg1: i32, %arg2: memref<1x24x64xbf16, #tpu.memory_space<vmem>>, %arg3: memref<4x64x32xbf16, #tpu.memory_space<vmem>>, %arg4: memref<1x32xf32, #tpu.memory_space<vmem>>, %arg5: memref<1x32xf32, #tpu.memory_space<vmem>>, %arg6: memref<1x16x32xf32, #tpu.memory_space<vmem>>) attributes {dimension_semantics = [#tpu.dimension_semantics<parallel>, #tpu.dimension_semantics<arbitrary>], iteration_bounds = array<i64: 2, 1>, scalar_prefetch = 0 : i64, scratch_operands = 0 : i64, tpu.core_type = #tpu.core_type<tc>, window_params = [{transform_indices = @transform_0, window_bounds = array<i64: 1, 24, 64>}, {transform_indices = @transform_1, window_bounds = array<i64: 4, 64, 32>}, {pipeline_mode = #tpu.pipeline_mode<synchronous>, transform_indices = @transform_2, window_bounds = array<i64: 1, 32>}, {pipeline_mode = #tpu.pipeline_mode<synchronous>, transform_indices = @transform_3, window_bounds = array<i64: 1, 32>}, {transform_indices = @transform_4, window_bounds = array<i64: 1, 16, 32>}]} {
    %c0_i32 = arith.constant 0 : i32
    %0 = arith.cmpi eq, %arg1, %c0_i32 : i32
    %1 = arith.extui %0 : i1 to i32
    %c0_i32_0 = arith.constant 0 : i32
    %2 = arith.cmpi ne, %1, %c0_i32_0 : i32
    scf.if %2 {
      %cst_25 = arith.constant 0.000000e+00 : f32
      %32 = vector.broadcast %cst_25 : f32 to vector<1x16x32xf32>
      %c0_26 = arith.constant 0 : index
      %c0_27 = arith.constant 0 : index
      %c0_28 = arith.constant 0 : index
      %33 = vector.load %arg6[%c0_26, %c0_27, %c0_28] : memref<1x16x32xf32, #tpu.memory_space<vmem>>, vector<1x16x32xf32>
      tpu.vector_store %arg6[%c0_26, %c0_27, %c0_28], %32 {strides = array<i32>} : memref<1x16x32xf32, #tpu.memory_space<vmem>>, vector<1x16x32xf32>,
    } else {
    }
    %c0 = arith.constant 0 : index
    %c0_1 = arith.constant 0 : index
    %c0_2 = arith.constant 0 : index
    %3 = vector.load %arg6[%c0, %c0_1, %c0_2] : memref<1x16x32xf32, #tpu.memory_space<vmem>>, vector<1x16x32xf32>
    %4 = vector.shape_cast %3 : vector<1x16x32xf32> to vector<16x32xf32>
    %c0_3 = arith.constant 0 : index
    %c0_4 = arith.constant 0 : index
    %c0_5 = arith.constant 0 : index
    %5 = vector.load %arg2[%c0_3, %c0_4, %c0_5] : memref<1x24x64xbf16, #tpu.memory_space<vmem>>, vector<1x16x64xbf16>
    %6 = vector.shape_cast %5 : vector<1x16x64xbf16> to vector<16x64xbf16>
    %c0_6 = arith.constant 0 : index
    %c8 = arith.constant 8 : index
    %c0_7 = arith.constant 0 : index
    %7 = vector.load %arg2[%c0_6, %c8, %c0_7] : memref<1x24x64xbf16, #tpu.memory_space<vmem>>, vector<1x16x64xbf16>
    %8 = vector.shape_cast %7 : vector<1x16x64xbf16> to vector<16x64xbf16>
    %c0_8 = arith.constant 0 : index
    %c0_9 = arith.constant 0 : index
    %c0_10 = arith.constant 0 : index
    %9 = vector.load %arg3[%c0_8, %c0_9, %c0_10] : memref<4x64x32xbf16, #tpu.memory_space<vmem>>, vector<1x64x32xbf16>
    %10 = vector.shape_cast %9 : vector<1x64x32xbf16> to vector<64x32xbf16>
    %cst = arith.constant dense<0.000000e+00> : vector<16x32xf32>
    %11 = tpu.matmul %6, %10, %cst {dimension_numbers = #tpu.dot_dimension_numbers<[1], [0], [0], [1], [0, 0, 1, 1], [], []>} : vector<16x64xbf16>, vector<64x32xbf16>, vector<16x32xf32> -> vector<16x32xf32>
    %c2 = arith.constant 2 : index
    %c0_11 = arith.constant 0 : index
    %c0_12 = arith.constant 0 : index
    %12 = vector.load %arg3[%c2, %c0_11, %c0_12] : memref<4x64x32xbf16, #tpu.memory_space<vmem>>, vector<1x64x32xbf16>
    %13 = vector.shape_cast %12 : vector<1x64x32xbf16> to vector<64x32xbf16>
    %cst_13 = arith.constant dense<0.000000e+00> : vector<16x32xf32>
    %14 = tpu.matmul %8, %13, %cst_13 {dimension_numbers = #tpu.dot_dimension_numbers<[1], [0], [0], [1], [0, 0, 1, 1], [], []>} : vector<16x64xbf16>, vector<64x32xbf16>, vector<16x32xf32> -> vector<16x32xf32>
    %15 = arith.addf %11, %14 : vector<16x32xf32>
    %c1 = arith.constant 1 : index
    %c0_14 = arith.constant 0 : index
    %c0_15 = arith.constant 0 : index
    %16 = vector.load %arg3[%c1, %c0_14, %c0_15] : memref<4x64x32xbf16, #tpu.memory_space<vmem>>, vector<1x64x32xbf16>
    %17 = vector.shape_cast %16 : vector<1x64x32xbf16> to vector<64x32xbf16>
    %cst_16 = arith.constant dense<0.000000e+00> : vector<16x32xf32>
    %18 = tpu.matmul %6, %17, %cst_16 {dimension_numbers = #tpu.dot_dimension_numbers<[1], [0], [0], [1], [0, 0, 1, 1], [], []>} : vector<16x64xbf16>, vector<64x32xbf16>, vector<16x32xf32> -> vector<16x32xf32>
    %c3 = arith.constant 3 : index
    %c0_17 = arith.constant 0 : index
    %c0_18 = arith.constant 0 : index
    %19 = vector.load %arg3[%c3, %c0_17, %c0_18] : memref<4x64x32xbf16, #tpu.memory_space<vmem>>, vector<1x64x32xbf16>
    %20 = vector.shape_cast %19 : vector<1x64x32xbf16> to vector<64x32xbf16>
    %cst_19 = arith.constant dense<0.000000e+00> : vector<16x32xf32>
    %21 = tpu.matmul %8, %20, %cst_19 {dimension_numbers = #tpu.dot_dimension_numbers<[1], [0], [0], [1], [0, 0, 1, 1], [], []>} : vector<16x64xbf16>, vector<64x32xbf16>, vector<16x32xf32> -> vector<16x32xf32>
    %22 = arith.addf %18, %21 : vector<16x32xf32>
    %23 = arith.addf %4, %15 : vector<16x32xf32>
    %c15_i32 = arith.constant 15 : i32
    %24 = tpu.dynamic_rotate %22 by %c15_i32 dim 0 : vector<16x32xf32>, i32 -> vector<16x32xf32>
    %25 = arith.addf %23, %24 : vector<16x32xf32>
    %c0_20 = arith.constant 0 : index
    %c0_21 = arith.constant 0 : index
    %c0_22 = arith.constant 0 : index
    %26 = vector.load %arg6[%c0_20, %c0_21, %c0_22] : memref<1x16x32xf32, #tpu.memory_space<vmem>>, vector<1x16x32xf32>
    %27 = vector.shape_cast %26 : vector<1x16x32xf32> to vector<16x32xf32>
    %28 = vector.shape_cast %25 : vector<16x32xf32> to vector<1x16x32xf32>
    tpu.vector_store %arg6[%c0_20, %c0_21, %c0_22], %28 {strides = array<i32>} : memref<1x16x32xf32, #tpu.memory_space<vmem>>, vector<1x16x32xf32>,
    %c0_i32_23 = arith.constant 0 : i32
    %29 = arith.cmpi eq, %arg1, %c0_i32_23 : i32
    %30 = arith.extui %29 : i1 to i32
    %c0_i32_24 = arith.constant 0 : i32
    %31 = arith.cmpi ne, %30, %c0_i32_24 : i32
    scf.if %31 {
      %32 = tpu.iota {dimensions = array<i32: 0>} : vector<16x1xi32>
      %c8_i32 = arith.constant 8 : i32
      %c0_i32_25 = arith.constant 0 : i32
      %33 = arith.cmpi eq, %c8_i32, %c0_i32_25 : i32
      %c1_i32 = arith.constant 1 : i32
      %34 = arith.select %33, %c1_i32, %c8_i32 : i32
      %35 = vector.broadcast %34 : i32 to vector<16x1xi32>
      %36 = arith.remsi %32, %35 : vector<16x1xi32>
      %c0_i32_26 = arith.constant 0 : i32
      %37 = vector.broadcast %c0_i32_26 : i32 to vector<16x1xi32>
      %38 = arith.cmpi ne, %36, %37 : vector<16x1xi32>
      %c0_i32_27 = arith.constant 0 : i32
      %39 = vector.broadcast %c0_i32_27 : i32 to vector<16x1xi32>
      %40 = arith.cmpi slt, %36, %39 : vector<16x1xi32>
      %c0_i32_28 = arith.constant 0 : i32
      %41 = arith.cmpi slt, %34, %c0_i32_28 : i32
      %42 = vector.broadcast %41 : i1 to vector<16x1xi1>
      %43 = vector.broadcast %42 : vector<16x1xi1> to vector<16x1xi1>
      %44 = arith.xori %40, %43 : vector<16x1xi1>
      %45 = arith.andi %44, %38 : vector<16x1xi1>
      %46 = vector.broadcast %34 : i32 to vector<16x1xi32>
      %47 = arith.addi %36, %46 : vector<16x1xi32>
      %48 = arith.select %45, %47, %36 : vector<16x1xi1>, vector<16x1xi32>
      %c2_i32 = arith.constant 2 : i32
      %49 = vector.broadcast %c2_i32 : i32 to vector<16x1xi32>
      %50 = arith.cmpi slt, %48, %49 : vector<16x1xi32>
      %51 = arith.extui %50 : vector<16x1xi1> to vector<16x1xi32>
      %52 = arith.sitofp %51 : vector<16x1xi32> to vector<16x1xf32>
      %c0_29 = arith.constant 0 : index
      %c0_30 = arith.constant 0 : index
      %53 = vector.load %arg4[%c0_29, %c0_30] : memref<1x32xf32, #tpu.memory_space<vmem>>, vector<1x32xf32>
      %c0_31 = arith.constant 0 : index
      %c0_32 = arith.constant 0 : index
      %54 = vector.load %arg5[%c0_31, %c0_32] : memref<1x32xf32, #tpu.memory_space<vmem>>, vector<1x32xf32>
      %c0_33 = arith.constant 0 : index
      %c0_34 = arith.constant 0 : index
      %c0_35 = arith.constant 0 : index
      %55 = vector.load %arg6[%c0_33, %c0_34, %c0_35] : memref<1x16x32xf32, #tpu.memory_space<vmem>>, vector<1x16x32xf32>
      %56 = vector.shape_cast %55 : vector<1x16x32xf32> to vector<16x32xf32>
      %57 = vector.broadcast %52 : vector<16x1xf32> to vector<16x32xf32>
      %58 = arith.mulf %56, %57 : vector<16x32xf32>
      %cst_36 = arith.constant dense<0.000000e+00> : vector<32xf32>
      %59 = vector.multi_reduction <add>, %58, %cst_36 [0] : vector<16x32xf32> to vector<32xf32>
      %60 = vector.shape_cast %59 : vector<32xf32> to vector<1x32xf32>
      %cst_37 = arith.constant 2.500000e-01 : f32
      %61 = vector.broadcast %cst_37 : f32 to vector<1x32xf32>
      %62 = arith.mulf %60, %61 : vector<1x32xf32>
      %63 = vector.broadcast %62 : vector<1x32xf32> to vector<16x32xf32>
      %64 = arith.subf %58, %63 : vector<16x32xf32>
      %65 = vector.broadcast %52 : vector<16x1xf32> to vector<16x32xf32>
      %66 = arith.mulf %64, %65 : vector<16x32xf32>
      %67 = arith.mulf %66, %66 : vector<16x32xf32>
      %cst_38 = arith.constant dense<0.000000e+00> : vector<32xf32>
      %68 = vector.multi_reduction <add>, %67, %cst_38 [0] : vector<16x32xf32> to vector<32xf32>
      %69 = vector.shape_cast %68 : vector<32xf32> to vector<1x32xf32>
      %cst_39 = arith.constant 2.500000e-01 : f32
      %70 = vector.broadcast %cst_39 : f32 to vector<1x32xf32>
      %71 = arith.mulf %69, %70 : vector<1x32xf32>
      %cst_40 = arith.constant 9.99999974E-6 : f32
      %72 = vector.broadcast %cst_40 : f32 to vector<1x32xf32>
      %73 = arith.addf %71, %72 : vector<1x32xf32>
      %74 = math.rsqrt %73 : vector<1x32xf32>
      %75 = vector.broadcast %74 : vector<1x32xf32> to vector<16x32xf32>
      %76 = arith.mulf %66, %75 : vector<16x32xf32>
      %77 = vector.broadcast %53 : vector<1x32xf32> to vector<16x32xf32>
      %78 = arith.mulf %76, %77 : vector<16x32xf32>
      %79 = vector.broadcast %54 : vector<1x32xf32> to vector<16x32xf32>
      %80 = arith.addf %78, %79 : vector<16x32xf32>
      %cst_41 = arith.constant 0.000000e+00 : f32
      %81 = vector.broadcast %cst_41 : f32 to vector<16x32xf32>
      %82 = arith.cmpf oge, %80, %81 : vector<16x32xf32>
      %cst_42 = arith.constant 0.00999999977 : f32
      %83 = vector.broadcast %cst_42 : f32 to vector<16x32xf32>
      %84 = arith.mulf %83, %80 : vector<16x32xf32>
      %85 = arith.select %82, %80, %84 : vector<16x32xi1>, vector<16x32xf32>
      %86 = vector.broadcast %52 : vector<16x1xf32> to vector<16x32xf32>
      %87 = arith.mulf %85, %86 : vector<16x32xf32>
      %c0_43 = arith.constant 0 : index
      %c0_44 = arith.constant 0 : index
      %c0_45 = arith.constant 0 : index
      %88 = vector.load %arg6[%c0_43, %c0_44, %c0_45] : memref<1x16x32xf32, #tpu.memory_space<vmem>>, vector<1x16x32xf32>
      %89 = vector.shape_cast %88 : vector<1x16x32xf32> to vector<16x32xf32>
      %90 = vector.shape_cast %87 : vector<16x32xf32> to vector<1x16x32xf32>
      tpu.vector_store %arg6[%c0_43, %c0_44, %c0_45], %90 {strides = array<i32>} : memref<1x16x32xf32, #tpu.memory_space<vmem>>, vector<1x16x32xf32>,
    } else {
    }
    return
  }
  func.func @transform_0(%arg0: i32, %arg1: i32) -> (i32, i32, i32) {
    %c0_i32 = arith.constant 0 : i32
    %c0_i32_0 = arith.constant 0 : i32
    return %arg0, %c0_i32, %arg1 : i32, i32, i32
  }
  func.func @transform_1(%arg0: i32, %arg1: i32) -> (i32, i32, i32) {
    %c0_i32 = arith.constant 0 : i32
    %c0_i32_0 = arith.constant 0 : i32
    %c0_i32_1 = arith.constant 0 : i32
    return %c0_i32, %arg1, %c0_i32_0 : i32, i32, i32
  }
  func.func @transform_2(%arg0: i32, %arg1: i32) -> (i32, i32) {
    %c0_i32 = arith.constant 0 : i32
    %c0_i32_0 = arith.constant 0 : i32
    %c0_i32_1 = arith.constant 0 : i32
    return %c0_i32, %c0_i32_0 : i32, i32
  }
  func.func @transform_3(%arg0: i32, %arg1: i32) -> (i32, i32) {
    %c0_i32 = arith.constant 0 : i32
    %c0_i32_0 = arith.constant 0 : i32
    %c0_i32_1 = arith.constant 0 : i32
    return %c0_i32, %c0_i32_0 : i32, i32
  }
  func.func @transform_4(%arg0: i32, %arg1: i32) -> (i32, i32, i32) {
    %c0_i32 = arith.constant 0 : i32
    %c0_i32_0 = arith.constant 0 : i32
    %c0_i32_1 = arith.constant 0 : i32
    return %arg0, %c0_i32, %c0_i32_0 : i32, i32, i32
  }
}

</mosaic_0001>

<llo_original>
// kernel: discriminators_forward.4
$region0: #{discriminators_forward.4}
  #allocation0 [shape = 'u32[]', space=smem, size = 0x4, offset = 0x4, fixed_abs, tag = 'smem constant byte address 0x4 - core index']
  #allocation1 [shape = 'u32[72,128]{1,0:T(1,128)}', space=vmem, size = 0x9000, scoped, tag = 'internal scratch']
  %s0 = inlined_call_operand.vmem [shape: bf16[2,128,48], index: 0, kind: input, shape index: {}]
  %s1 = inlined_call_operand.vmem [shape: bf16[1,48,8], index: 1, kind: input, shape index: {}]
  %s2 = inlined_call_operand.vmem [shape: f32[1,8], index: 2, kind: input, shape index: {}]
  %s3 = inlined_call_operand.vmem [shape: f32[1,8], index: 3, kind: input, shape index: {}]
  %s4 = inlined_call_operand.vmem [shape: f32[2,128,8], index: 4, kind: output, shape index: {}]
  %s5 = sld [smem:[#allocation0]]
  $region57: #{discriminators_forward.4} parent=0
    _
  %s7 = ssub.s32 1, %s5
  %s8 = scalar_select 0, %s7, %s5
  loop: start=0, step=1, limit=4
  $region2: #{discriminators_forward.4} parent=0 // loop_pre_header
    _
  $region3: #{discriminators_forward.4} parent=0 // loop_header
    %s10 = sphi 0, %s14
    %p11 = scmp.ge.s32.totalorder %s10, 4
    %s17 = sphi 0, %s29
    %s18 = sphi 0, %s25
    %s19 = sphi 0, %s17
    %s20 = sphi 0, %s18
    %s21 = sphi 0, %s19
    %s22 = sphi 0, %s20
    %s34 = sphi 0, %s36
    %s37 = sphi 0, %s34
    %s38 = sphi 0, %s37
    %s54 = sphi 0, %s38
    %s60 = sphi 0, %s62
    %s63 = sphi 0, %s60
    %s64 = sphi 0, %s63
    %s80 = sphi 0, %s64
    %s84 = sphi 0, %s84
    %s86 = sphi 0, %s84
    %s87 = sphi 0, %s86
    %s101 = sphi 0, %s87
    %s105 = sphi 0, %s105
    %s107 = sphi 0, %s105
    %s108 = sphi 0, %s107
    %s122 = sphi 0, %s108
    %s128 = sphi 0, %s130
    %s131 = sphi 0, %s128
    %s132 = sphi 0, %s131
    %s148 = sphi 0, %s132
  $region4: #{discriminators_forward.4} parent=0 // loop_header_branch
    %13 = sbr.rel (%p11) target = $region8
  $region5: #{discriminators_forward.4} parent=0 // loop_body
    %s15 = ssub.s32 %s10, 1
    %s16 = ssub.s32 %s10, 2
    %s23 = sadd.s32 1, %s18
    %p24 = scmp.ge.s32.totalorder %s23, 1
    %s25 = scalar_select %p24, 0, %s23
    %s26 = sadd.s32 1, %s17
    %s27 = scalar_select %p24, %s26, %s17
    %p28 = scmp.ge.s32.totalorder %s27, 2
    %s29 = scalar_select %p28, 0, %s27
    %s30 = ssub.s32 %s17, %s29
    %s31 = ssub.s32 %s18, %s25
    %s32 = sor.u32 %s30, %s31
    %p33 = scmp.eq.s32.totalorder %s32, 0
    %s35 = sadd.s32 %s34, 1
    %s36 = scalar_select %p33, %s34, %s35
    %p39 = pneg %p33
    %p40 = scmp.eq.s32.totalorder %s10, 1
    %p41 = por %p39, %p40
    %p42 = scmp.ne.s32.totalorder %s34, %s37
    %p43 = scmp.eq.s32.totalorder %s10, 0
    %p44 = por %p42, %p43
    %p45 = scmp.ne.s32.totalorder %s34, %s37
    %p46 = scmp.eq.s32.totalorder %s15, 1
    %p47 = por %p45, %p46
    %p48 = scmp.ne.s32.totalorder %s37, %s38
    %p49 = scmp.eq.s32.totalorder %s15, 0
    %p50 = por %p48, %p49
    %p51 = scmp.ne.s32.totalorder %s37, %s38
    %p52 = scmp.eq.s32.totalorder %s16, 1
    %p53 = por %p51, %p52
    %p55 = scmp.ne.s32.totalorder %s38, %s54
    %p56 = scmp.eq.s32.totalorder %s16, 0
    %p57 = por %p55, %p56
    %s58 = ssub.s32 %s18, %s25
    %p59 = scmp.eq.s32.totalorder %s58, 0
    %s61 = sadd.s32 %s60, 1
    %s62 = scalar_select %p59, %s60, %s61
    %p65 = pneg %p59
    %p66 = scmp.eq.s32.totalorder %s10, 1
    %p67 = por %p65, %p66
    %p68 = scmp.ne.s32.totalorder %s60, %s63
    %p69 = scmp.eq.s32.totalorder %s10, 0
    %p70 = por %p68, %p69
    %p71 = scmp.ne.s32.totalorder %s60, %s63
    %p72 = scmp.eq.s32.totalorder %s15, 1
    %p73 = por %p71, %p72
    %p74 = scmp.ne.s32.totalorder %s63, %s64
    %p75 = scmp.eq.s32.totalorder %s15, 0
    %p76 = por %p74, %p75
    %p77 = scmp.ne.s32.totalorder %s63, %s64
    %p78 = scmp.eq.s32.totalorder %s16, 1
    %p79 = por %p77, %p78
    %p81 = scmp.ne.s32.totalorder %s64, %s80
    %p82 = scmp.eq.s32.totalorder %s16, 0
    %p83 = por %p81, %p82
    %s85 = sadd.s32 %s84, 1
    %p88 = scmp.eq.s32.totalorder %s10, 1
    %p89 = scmp.ne.s32.totalorder %s84, %s86
    %p90 = scmp.eq.s32.totalorder %s10, 0
    %p91 = por %p89, %p90
    %p92 = scmp.ne.s32.totalorder %s84, %s86
    %p93 = scmp.eq.s32.totalorder %s15, 1
    %p94 = por %p92, %p93
    %p95 = scmp.ne.s32.totalorder %s86, %s87
    %p96 = scmp.eq.s32.totalorder %s15, 0
    %p97 = por %p95, %p96
    %p98 = scmp.ne.s32.totalorder %s86, %s87
    %p99 = scmp.eq.s32.totalorder %s16, 1
    %p100 = por %p98, %p99
    %p102 = scmp.ne.s32.totalorder %s87, %s101
    %p103 = scmp.eq.s32.totalorder %s16, 0
    %p104 = por %p102, %p103
    %s106 = sadd.s32 %s105, 1
    %p109 = scmp.eq.s32.totalorder %s10, 1
    %p110 = scmp.ne.s32.totalorder %s105, %s107
    %p111 = scmp.eq.s32.totalorder %s10, 0
    %p112 = por %p110, %p111
    %p113 = scmp.ne.s32.totalorder %s105, %s107
    %p114 = scmp.eq.s32.totalorder %s15, 1
    %p115 = por %p113, %p114
    %p116 = scmp.ne.s32.totalorder %s107, %s108
    %p117 = scmp.eq.s32.totalorder %s15, 0
    %p118 = por %p116, %p117
    %p119 = scmp.ne.s32.totalorder %s107, %s108
    %p120 = scmp.eq.s32.totalorder %s16, 1
    %p121 = por %p119, %p120
    %p123 = scmp.ne.s32.totalorder %s108, %s122
    %p124 = scmp.eq.s32.totalorder %s16, 0
    %p125 = por %p123, %p124
    %s126 = ssub.s32 %s17, %s29
    %p127 = scmp.eq.s32.totalorder %s126, 0
    %s129 = sadd.s32 %s128, 1
    %s130 = scalar_select %p127, %s128, %s129
    %p133 = pneg %p127
    %p134 = scmp.eq.s32.totalorder %s10, 1
    %p135 = por %p133, %p134
    %p136 = scmp.ne.s32.totalorder %s128, %s131
    %p137 = scmp.eq.s32.totalorder %s10, 0
    %p138 = por %p136, %p137
    %p139 = scmp.ne.s32.totalorder %s128, %s131
    %p140 = scmp.eq.s32.totalorder %s15, 1
    %p141 = por %p139, %p140
    %p142 = scmp.ne.s32.totalorder %s131, %s132
    %p143 = scmp.eq.s32.totalorder %s15, 0
    %p144 = por %p142, %p143
    %p145 = scmp.ne.s32.totalorder %s131, %s132
    %p146 = scmp.eq.s32.totalorder %s16, 1
    %p147 = por %p145, %p146
    %p149 = scmp.ne.s32.totalorder %s132, %s148
    %p150 = scmp.eq.s32.totalorder %s16, 0
    %p151 = por %p149, %p150
    %p152 = scmp.le.s32.totalorder 1, %s10
    %p153 = scmp.lt.s32.totalorder %s10, 3
    %p154 = pnand %p152, %p153
    %p155 = pneg %p154
    // Predicated region
    $region9: #{discriminators_forward.4} parent=5 // pred_check
      _
    $region10: #{discriminators_forward.4} parent=5 // pred_check_branch
      %157 = sbr.rel (%p154) target = $region12
    $region11: #{discriminators_forward.4} parent=5 // pred_region
      %s158 = ssub.s32 %s10, 1
      // Predicated region
      $region13: #{discriminators_forward.4} parent=11 // pred_check
        %p159 = pneg %p76
      $region14: #{discriminators_forward.4} parent=11 // pred_check_branch
        %161 = sbr.rel (%p159) target = $region16
      $region15: #{discriminators_forward.4} parent=11 // pred_region
        %s162 = smul.u32 6, %s20
        %p163 = scmp.lt.s32.totalorder %s162, 5
        %s164 = scalar_select %p163, %s162, 5
        %s165 = smul.addr %s164, 4
        %s166 = scalar_lea.vmem %s1, %s165
        %s167 = smul.u32 6, %s20
      $region16: #{discriminators_forward.4} parent=11 // pred_fallthru
        _
      // Predicated region
      $region17: #{discriminators_forward.4} parent=11 // pred_check
        %p168 = pneg %p97
      $region18: #{discriminators_forward.4} parent=11 // pred_check_branch
        %170 = sbr.rel (%p168) target = $region20
      $region19: #{discriminators_forward.4} parent=11 // pred_region
        _
      $region20: #{discriminators_forward.4} parent=11 // pred_fallthru
        _
      // Predicated region
      $region21: #{discriminators_forward.4} parent=11 // pred_check
        %p171 = pneg %p118
      $region22: #{discriminators_forward.4} parent=11 // pred_check_branch
        %173 = sbr.rel (%p171) target = $region24
      $region23: #{discriminators_forward.4} parent=11 // pred_region
        _
      $region24: #{discriminators_forward.4} parent=11 // pred_fallthru
        _
    $region12: #{discriminators_forward.4} parent=5 // pred_fallthru
      _
    %p174 = scmp.lt.s32.totalorder %s10, 2
    // Predicated region
    $region25: #{discriminators_forward.4} parent=5 // pred_check
      %p175 = pneg %p174
    $region26: #{discriminators_forward.4} parent=5 // pred_check_branch
      %177 = sbr.rel (%p175) target = $region28
    $region27: #{discriminators_forward.4} parent=5 // pred_region
      // Predicated region
      $region29: #{discriminators_forward.4} parent=27 // pred_check
        %p178 = pneg %p44
      $region30: #{discriminators_forward.4} parent=27 // pred_check_branch
        %180 = sbr.rel (%p178) target = $region32
      $region31: #{discriminators_forward.4} parent=27 // pred_region
        %p181 = scmp.lt.s32.totalorder %s17, 1
        %s182 = scalar_select %p181, %s17, 1
        %p183 = scmp.lt.s32.totalorder %s18, 0
        %s184 = scalar_select %p183, %s18, 0
        %s185 = smul.addr %s182, 16
        %s186 = sadd.s32 %s184, %s185
        %s187 = smul.addr %s186, 4
        %s188 = scalar_lea.vmem %s0, %s187
      $region32: #{discriminators_forward.4} parent=27 // pred_fallthru
        _
    $region28: #{discriminators_forward.4} parent=5 // pred_fallthru
      _
    %p189 = scmp.le.s32.totalorder 1, %s10
    %p190 = scmp.lt.s32.totalorder %s10, 3
    %p191 = pnand %p189, %p190
    %p192 = pneg %p191
    // Predicated region
    $region33: #{discriminators_forward.4} parent=5 // pred_check
      _
    $region34: #{discriminators_forward.4} parent=5 // pred_check_branch
      %194 = sbr.rel (%p191) target = $region36
    $region35: #{discriminators_forward.4} parent=5 // pred_region
      %s195 = ssub.s32 %s10, 1
      %p196 = scmp.lt.s32.totalorder %s19, 1
      %s197 = scalar_select %p196, %s19, 1
      %p198 = scmp.lt.s32.totalorder %s20, 0
      %s199 = scalar_select %p198, %s20, 0
      %s200 = smul.addr %s197, 16
      %s201 = sadd.s32 %s199, %s200
      %s202 = smul.addr %s201, 4
      %s203 = scalar_lea.vmem %s0, %s202
      %p204 = pneg %p50
      %p205 = pneg %p47
      %s206 = smul.u32 6, %s20
      %p207 = scmp.lt.s32.totalorder %s206, 5
      %s208 = scalar_select %p207, %s206, 5
      %s209 = smul.addr %s208, 4
      %s210 = scalar_lea.vmem %s1, %s209
      %p211 = pneg %p76
      %p212 = pneg %p73
      %p213 = pneg %p97
      %p214 = pneg %p94
      %p215 = pneg %p118
      %p216 = pneg %p115
      %p217 = pneg %p144
      %p218 = pneg %p141
      %p219 = scmp.lt.s32.totalorder %s19, 1
      %s220 = scalar_select %p219, %s19, 1
      %s221 = smul.addr %s220, 16
      %s222 = smul.addr %s221, 8
      %s223 = scalar_lea.vmem %s4, %s222
      %p224 = scmp.lt.s32.totalorder %s19, 1
      %s225 = scalar_select %p224, %s19, 1
      %p226 = scmp.lt.s32.totalorder %s20, 0
      %s227 = scalar_select %p226, %s20, 0
      %s228 = smul.addr %s225, 16
      %s229 = sadd.s32 %s227, %s228
      %s230 = smul.addr %s229, 4
      %s231 = scalar_lea.vmem %s0, %s230
      %s232 = smul.u32 6, %s20
      %p233 = scmp.lt.s32.totalorder %s232, 5
      %s234 = scalar_select %p233, %s232, 5
      %s235 = smul.addr %s234, 4
      %s236 = scalar_lea.vmem %s1, %s235
      %s237 = smul.u32 6, %s20
      %p238 = scmp.lt.s32.totalorder %s19, 1
      %s239 = scalar_select %p238, %s19, 1
      %s240 = smul.addr %s239, 16
      %s241 = smul.addr %s240, 8
      %s242 = scalar_lea.vmem %s4, %s241
      %p244 = scmp.eq.s32.totalorder %s20, 0
      // Predicated region
      $region37: #{discriminators_forward.4} parent=35 // pred_check
        %p245 = pneg %p244
      $region38: #{discriminators_forward.4} parent=35 // pred_check_branch
        %247 = sbr.rel (%p245) target = $region40
      $region39: #{discriminators_forward.4} parent=35 // pred_region
        %vm248 = vcmask 64512
        %249 = vst.msk [vmem:[%s242] sm:$0xff] %vm248, 0.0
        %250 = vst.msk [vmem:[%s242 + $0x8] sm:$0xff] %vm248, 0.0
        %251 = vst.msk [vmem:[%s242 + $0x10] sm:$0xff] %vm248, 0.0
        %252 = vst.msk [vmem:[%s242 + $0x18] sm:$0xff] %vm248, 0.0
        %253 = vst.msk [vmem:[%s242 + $0x20] sm:$0xff] %vm248, 0.0
        %254 = vst.msk [vmem:[%s242 + $0x28] sm:$0xff] %vm248, 0.0
        %255 = vst.msk [vmem:[%s242 + $0x30] sm:$0xff] %vm248, 0.0
        %256 = vst.msk [vmem:[%s242 + $0x38] sm:$0xff] %vm248, 0.0
        %257 = vst.msk [vmem:[%s242 + $0x40] sm:$0xff] %vm248, 0.0
        %258 = vst.msk [vmem:[%s242 + $0x48] sm:$0xff] %vm248, 0.0
        %259 = vst.msk [vmem:[%s242 + $0x50] sm:$0xff] %vm248, 0.0
        %260 = vst.msk [vmem:[%s242 + $0x58] sm:$0xff] %vm248, 0.0
        %261 = vst.msk [vmem:[%s242 + $0x60] sm:$0xff] %vm248, 0.0
        %262 = vst.msk [vmem:[%s242 + $0x68] sm:$0xff] %vm248, 0.0
        %263 = vst.msk [vmem:[%s242 + $0x70] sm:$0xff] %vm248, 0.0
        %264 = vst.msk [vmem:[%s242 + $0x78] sm:$0xff] %vm248, 0.0
      $region40: #{discriminators_forward.4} parent=35 // pred_fallthru
        _
      %v265 = vld [vmem:[%s242] sm:$0xff]
      %v266 = vld [vmem:[%s242 + $0x8] sm:$0xff]
      %v267 = vld [vmem:[%s242 + $0x10] sm:$0xff]
      %v268 = vld [vmem:[%s242 + $0x18] sm:$0xff]
      %v269 = vld [vmem:[%s242 + $0x20] sm:$0xff]
      %v270 = vld [vmem:[%s242 + $0x28] sm:$0xff]
      %v271 = vld [vmem:[%s242 + $0x30] sm:$0xff]
      %v272 = vld [vmem:[%s242 + $0x38] sm:$0xff]
      %v273 = vld [vmem:[%s242 + $0x40] sm:$0xff]
      %v274 = vld [vmem:[%s242 + $0x48] sm:$0xff]
      %v275 = vld [vmem:[%s242 + $0x50] sm:$0xff]
      %v276 = vld [vmem:[%s242 + $0x58] sm:$0xff]
      %v277 = vld [vmem:[%s242 + $0x60] sm:$0xff]
      %v278 = vld [vmem:[%s242 + $0x68] sm:$0xff]
      %v279 = vld [vmem:[%s242 + $0x70] sm:$0xff]
      %v280 = vld [vmem:[%s242 + $0x78] sm:$0xff]
      %v281 = vld [vmem:[%s231] sm:$0xf]
      %v282 = vld [vmem:[%s231 + $0x4] sm:$0xf]
      %v283 = vld [vmem:[%s231 + $0x8] sm:$0xf]
      %v284 = vld [vmem:[%s231 + $0xc] sm:$0xf]
      %v285 = vld [vmem:[%s231 + $0x10] sm:$0xf]
      %v286 = vld [vmem:[%s231 + $0x14] sm:$0xf]
      %v287 = vld [vmem:[%s231 + $0x18] sm:$0xf]
      %v288 = vld [vmem:[%s231 + $0x1c] sm:$0xf]
      %v289 = vld [vmem:[%s231 + $0x20] sm:$0xf]
      %v290 = vld [vmem:[%s231 + $0x24] sm:$0xf]
      %v291 = vld [vmem:[%s231 + $0x28] sm:$0xf]
      %v292 = vld [vmem:[%s231 + $0x2c] sm:$0xf]
      %v293 = vld [vmem:[%s231 + $0x30] sm:$0xf]
      %v294 = vld [vmem:[%s231 + $0x34] sm:$0xf]
      %v295 = vld [vmem:[%s231 + $0x38] sm:$0xf]
      %v296 = vld [vmem:[%s231 + $0x3c] sm:$0xf]
      %v297 = vld [vmem:[%s236] sm:$0xf]
      %v298 = vld [vmem:[%s236 + $0x4] sm:$0xf]
      %v299 = vld [vmem:[%s236 + $0x8] sm:$0xf]
      %v300 = vld [vmem:[%s236 + $0xc] sm:$0xf]
      %v301 = vld [vmem:[%s236 + $0x10] sm:$0xf]
      %v302 = vld [vmem:[%s236 + $0x14] sm:$0xf]
      %v319 = vunpack.c.l.b16 %v281
      %v320 = vunpack.c.l.b16 %v282
      %v321 = vunpack.c.l.b16 %v283
      %v322 = vunpack.c.l.b16 %v284
      %v323 = vunpack.c.l.b16 %v285
      %v324 = vunpack.c.l.b16 %v286
      %v325 = vunpack.c.l.b16 %v287
      %v326 = vunpack.c.l.b16 %v288
      %v327 = vunpack.c.l.b16 %v289
      %v328 = vunpack.c.l.b16 %v290
      %v329 = vunpack.c.l.b16 %v291
      %v330 = vunpack.c.l.b16 %v292
      %v331 = vunpack.c.l.b16 %v293
      %v332 = vunpack.c.l.b16 %v294
      %v333 = vunpack.c.l.b16 %v295
      %v334 = vunpack.c.l.b16 %v296
      %v335 = vpack.c.b16 %v320, %v319
      %v336 = vpack.c.b16 %v322, %v321
      %v337 = vpack.c.b16 %v324, %v323
      %v338 = vpack.c.b16 %v326, %v325
      %v339 = vpack.c.b16 %v328, %v327
      %v340 = vpack.c.b16 %v330, %v329
      %v341 = vpack.c.b16 %v332, %v331
      %v342 = vpack.c.b16 %v334, %v333
      %v349 = vunpack.c.l.b16 %v297
      %v350 = vunpack.c.l.b16 %v298
      %v351 = vunpack.c.l.b16 %v299
      %v352 = vunpack.c.l.b16 %v300
      %v353 = vunpack.c.l.b16 %v301
      %v354 = vunpack.c.l.b16 %v302
      %v355 = vpack.c.b16 %v350, %v349
      %v356 = vpack.c.b16 %v352, %v351
      %v357 = vpack.c.b16 %v354, %v353
      %vm361 = vcmask 392192
      %v363 = vsel %vm361, %v335, 0
      %v366 = vsel %vm361, %v336, 0
      %v369 = vsel %vm361, %v337, 0
      %v372 = vsel %vm361, %v338, 0
      %v375 = vsel %vm361, %v339, 0
      %v378 = vsel %vm361, %v340, 0
      %v381 = vsel %vm361, %v341, 0
      %v384 = vsel %vm361, %v342, 0
      %386 = vmatpush.bf16.msra.mxu0 0
      %387 = vmatpush.bf16.msra.mxu0 0
      %388 = vmatpush.bf16.msra.mxu0 0
      %389 = vmatpush.bf16.msra.mxu0 0
      %390 = vmatpush.bf16.msra.mxu0 0
      %391 = vmatpush.bf16.msra.mxu0 %v357
      %392 = vmatpush.bf16.msra.mxu0 %v356
      %393 = vmatpush.bf16.msra.mxu0 %v355
      %394 = vmatmul.bf16.gmra.mxu0 %v363
      %v395 = vpop.f32.mrf.mxu0
      %v396 = vadd.f32 0.0, %v395
      %v397 = vpop.f32.mrf.mxu0
      %v398 = vadd.f32 0.0, %v397
      %399 = vmatmul.bf16.gmra.mxu0 %v366
      %v400 = vpop.f32.mrf.mxu0
      %v401 = vadd.f32 0.0, %v400
      %v402 = vpop.f32.mrf.mxu0
      %v403 = vadd.f32 0.0, %v402
      %404 = vmatmul.bf16.gmra.mxu0 %v369
      %v405 = vpop.f32.mrf.mxu0
      %v406 = vadd.f32 0.0, %v405
      %v407 = vpop.f32.mrf.mxu0
      %v408 = vadd.f32 0.0, %v407
      %409 = vmatmul.bf16.gmra.mxu0 %v372
      %v410 = vpop.f32.mrf.mxu0
      %v411 = vadd.f32 0.0, %v410
      %v412 = vpop.f32.mrf.mxu0
      %v413 = vadd.f32 0.0, %v412
      %414 = vmatmul.bf16.gmra.mxu0 %v375
      %v415 = vpop.f32.mrf.mxu0
      %v416 = vadd.f32 0.0, %v415
      %v417 = vpop.f32.mrf.mxu0
      %v418 = vadd.f32 0.0, %v417
      %419 = vmatmul.bf16.gmra.mxu0 %v378
      %v420 = vpop.f32.mrf.mxu0
      %v421 = vadd.f32 0.0, %v420
      %v422 = vpop.f32.mrf.mxu0
      %v423 = vadd.f32 0.0, %v422
      %424 = vmatmul.bf16.gmra.mxu0 %v381
      %v425 = vpop.f32.mrf.mxu0
      %v426 = vadd.f32 0.0, %v425
      %v427 = vpop.f32.mrf.mxu0
      %v428 = vadd.f32 0.0, %v427
      %429 = vmatmul.bf16.gmra.mxu0 %v384
      %v430 = vpop.f32.mrf.mxu0
      %v431 = vadd.f32 0.0, %v430
      %v432 = vpop.f32.mrf.mxu0
      %v433 = vadd.f32 0.0, %v432
      %434 = vdwg.mxu0
      %v435 = vadd.f32 %v265, %v396
      %v436 = vadd.f32 %v266, %v398
      %v437 = vadd.f32 %v267, %v401
      %v438 = vadd.f32 %v268, %v403
      %v439 = vadd.f32 %v269, %v406
      %v440 = vadd.f32 %v270, %v408
      %v441 = vadd.f32 %v271, %v411
      %v442 = vadd.f32 %v272, %v413
      %v443 = vadd.f32 %v273, %v416
      %v444 = vadd.f32 %v274, %v418
      %v445 = vadd.f32 %v275, %v421
      %v446 = vadd.f32 %v276, %v423
      %v447 = vadd.f32 %v277, %v426
      %v448 = vadd.f32 %v278, %v428
      %v449 = vadd.f32 %v279, %v431
      %v450 = vadd.f32 %v280, %v433
      %vm451 = vcmask 64512
      %452 = vst.msk [vmem:[%s242] sm:$0xff] %vm451, %v435
      %453 = vst.msk [vmem:[%s242 + $0x8] sm:$0xff] %vm451, %v436
      %454 = vst.msk [vmem:[%s242 + $0x10] sm:$0xff] %vm451, %v437
      %455 = vst.msk [vmem:[%s242 + $0x18] sm:$0xff] %vm451, %v438
      %456 = vst.msk [vmem:[%s242 + $0x20] sm:$0xff] %vm451, %v439
      %457 = vst.msk [vmem:[%s242 + $0x28] sm:$0xff] %vm451, %v440
      %458 = vst.msk [vmem:[%s242 + $0x30] sm:$0xff] %vm451, %v441
      %459 = vst.msk [vmem:[%s242 + $0x38] sm:$0xff] %vm451, %v442
      %460 = vst.msk [vmem:[%s242 + $0x40] sm:$0xff] %vm451, %v443
      %461 = vst.msk [vmem:[%s242 + $0x48] sm:$0xff] %vm451, %v444
      %462 = vst.msk [vmem:[%s242 + $0x50] sm:$0xff] %vm451, %v445
      %463 = vst.msk [vmem:[%s242 + $0x58] sm:$0xff] %vm451, %v446
      %464 = vst.msk [vmem:[%s242 + $0x60] sm:$0xff] %vm451, %v447
      %465 = vst.msk [vmem:[%s242 + $0x68] sm:$0xff] %vm451, %v448
      %466 = vst.msk [vmem:[%s242 + $0x70] sm:$0xff] %vm451, %v449
      %467 = vst.msk [vmem:[%s242 + $0x78] sm:$0xff] %vm451, %v450
      // Predicated region
      $region41: #{discriminators_forward.4} parent=35 // pred_check
        %p468 = pneg %p244
      $region42: #{discriminators_forward.4} parent=35 // pred_check_branch
        %470 = sbr.rel (%p468) target = $region44
      $region43: #{discriminators_forward.4} parent=35 // pred_region
        %v471 = vlaneseq
        %v472 = vshrl.u32 %v471, 7
        %v473 = vadd.s32 %v472, 8
        %v474 = vadd.s32 %v472, 16
        %v475 = vadd.s32 %v472, 24
        %v476 = vadd.s32 %v472, 32
        %v477 = vadd.s32 %v472, 40
        %v478 = vadd.s32 %v472, 48
        %v479 = vadd.s32 %v472, 56
        %v480 = vadd.s32 %v472, 64
        %v481 = vadd.s32 %v472, 72
        %v482 = vadd.s32 %v472, 80
        %v483 = vadd.s32 %v472, 88
        %v484 = vadd.s32 %v472, 96
        %v485 = vadd.s32 %v472, 104
        %v486 = vadd.s32 %v472, 112
        %v487 = vadd.s32 %v472, 120
        %vm488 = vcmp.lt.s32.totalorder %v472, 0
        %v489 = vsub.s32 0, %v472
        %v490 = vsel %vm488, %v489, %v472
        %v491 = vshrl.u32 %v490, 4
        %v492 = vand.u32 %v490, 15
        %v493 = vsub.s32 0, %v492
        %v494 = vsel %vm488, %v493, %v492
        %vm495 = vcmp.lt.s32.totalorder %v473, 0
        %v496 = vsub.s32 0, %v473
        %v497 = vsel %vm495, %v496, %v473
        %v498 = vshrl.u32 %v497, 4
        %v499 = vand.u32 %v497, 15
        %v500 = vsub.s32 0, %v499
        %v501 = vsel %vm495, %v500, %v499
        %vm502 = vcmp.lt.s32.totalorder %v474, 0
        %v503 = vsub.s32 0, %v474
        %v504 = vsel %vm502, %v503, %v474
        %v505 = vshrl.u32 %v504, 4
        %v506 = vand.u32 %v504, 15
        %v507 = vsub.s32 0, %v506
        %v508 = vsel %vm502, %v507, %v506
        %vm509 = vcmp.lt.s32.totalorder %v475, 0
        %v510 = vsub.s32 0, %v475
        %v511 = vsel %vm509, %v510, %v475
        %v512 = vshrl.u32 %v511, 4
        %v513 = vand.u32 %v511, 15
        %v514 = vsub.s32 0, %v513
        %v515 = vsel %vm509, %v514, %v513
        %vm516 = vcmp.lt.s32.totalorder %v476, 0
        %v517 = vsub.s32 0, %v476
        %v518 = vsel %vm516, %v517, %v476
        %v519 = vshrl.u32 %v518, 4
        %v520 = vand.u32 %v518, 15
        %v521 = vsub.s32 0, %v520
        %v522 = vsel %vm516, %v521, %v520
        %vm523 = vcmp.lt.s32.totalorder %v477, 0
        %v524 = vsub.s32 0, %v477
        %v525 = vsel %vm523, %v524, %v477
        %v526 = vshrl.u32 %v525, 4
        %v527 = vand.u32 %v525, 15
        %v528 = vsub.s32 0, %v527
        %v529 = vsel %vm523, %v528, %v527
        %vm530 = vcmp.lt.s32.totalorder %v478, 0
        %v531 = vsub.s32 0, %v478
        %v532 = vsel %vm530, %v531, %v478
        %v533 = vshrl.u32 %v532, 4
        %v534 = vand.u32 %v532, 15
        %v535 = vsub.s32 0, %v534
        %v536 = vsel %vm530, %v535, %v534
        %vm537 = vcmp.lt.s32.totalorder %v479, 0
        %v538 = vsub.s32 0, %v479
        %v539 = vsel %vm537, %v538, %v479
        %v540 = vshrl.u32 %v539, 4
        %v541 = vand.u32 %v539, 15
        %v542 = vsub.s32 0, %v541
        %v543 = vsel %vm537, %v542, %v541
        %vm544 = vcmp.lt.s32.totalorder %v480, 0
        %v545 = vsub.s32 0, %v480
        %v546 = vsel %vm544, %v545, %v480
        %v547 = vshrl.u32 %v546, 4
        %v548 = vand.u32 %v546, 15
        %v549 = vsub.s32 0, %v548
        %v550 = vsel %vm544, %v549, %v548
        %vm551 = vcmp.lt.s32.totalorder %v481, 0
        %v552 = vsub.s32 0, %v481
        %v553 = vsel %vm551, %v552, %v481
        %v554 = vshrl.u32 %v553, 4
        %v555 = vand.u32 %v553, 15
        %v556 = vsub.s32 0, %v555
        %v557 = vsel %vm551, %v556, %v555
        %vm558 = vcmp.lt.s32.totalorder %v482, 0
        %v559 = vsub.s32 0, %v482
        %v560 = vsel %vm558, %v559, %v482
        %v561 = vshrl.u32 %v560, 4
        %v562 = vand.u32 %v560, 15
        %v563 = vsub.s32 0, %v562
        %v564 = vsel %vm558, %v563, %v562
        %vm565 = vcmp.lt.s32.totalorder %v483, 0
        %v566 = vsub.s32 0, %v483
        %v567 = vsel %vm565, %v566, %v483
        %v568 = vshrl.u32 %v567, 4
        %v569 = vand.u32 %v567, 15
        %v570 = vsub.s32 0, %v569
        %v571 = vsel %vm565, %v570, %v569
        %vm572 = vcmp.lt.s32.totalorder %v484, 0
        %v573 = vsub.s32 0, %v484
        %v574 = vsel %vm572, %v573, %v484
        %v575 = vshrl.u32 %v574, 4
        %v576 = vand.u32 %v574, 15
        %v577 = vsub.s32 0, %v576
        %v578 = vsel %vm572, %v577, %v576
        %vm579 = vcmp.lt.s32.totalorder %v485, 0
        %v580 = vsub.s32 0, %v485
        %v581 = vsel %vm579, %v580, %v485
        %v582 = vshrl.u32 %v581, 4
        %v583 = vand.u32 %v581, 15
        %v584 = vsub.s32 0, %v583
        %v585 = vsel %vm579, %v584, %v583
        %vm586 = vcmp.lt.s32.totalorder %v486, 0
        %v587 = vsub.s32 0, %v486
        %v588 = vsel %vm586, %v587, %v486
        %v589 = vshrl.u32 %v588, 4
        %v590 = vand.u32 %v588, 15
        %v591 = vsub.s32 0, %v590
        %v592 = vsel %vm586, %v591, %v590
        %vm593 = vcmp.lt.s32.totalorder %v487, 0
        %v594 = vsub.s32 0, %v487
        %v595 = vsel %vm593, %v594, %v487
        %v596 = vshrl.u32 %v595, 4
        %v597 = vand.u32 %v595, 15
        %v598 = vsub.s32 0, %v597
        %v599 = vsel %vm593, %v598, %v597
        %vm600 = vcmp.ne.s32.totalorder %v494, 0
        %vm601 = vcmp.ne.s32.totalorder %v501, 0
        %vm602 = vcmp.ne.s32.totalorder %v508, 0
        %vm603 = vcmp.ne.s32.totalorder %v515, 0
        %vm604 = vcmp.ne.s32.totalorder %v522, 0
        %vm605 = vcmp.ne.s32.totalorder %v529, 0
        %vm606 = vcmp.ne.s32.totalorder %v536, 0
        %vm607 = vcmp.ne.s32.totalorder %v543, 0
        %vm608 = vcmp.ne.s32.totalorder %v550, 0
        %vm609 = vcmp.ne.s32.totalorder %v557, 0
        %vm610 = vcmp.ne.s32.totalorder %v564, 0
        %vm611 = vcmp.ne.s32.totalorder %v571, 0
        %vm612 = vcmp.ne.s32.totalorder %v578, 0
        %vm613 = vcmp.ne.s32.totalorder %v585, 0
        %vm614 = vcmp.ne.s32.totalorder %v592, 0
        %vm615 = vcmp.ne.s32.totalorder %v599, 0
        %vm616 = vcmp.lt.s32.totalorder %v494, 0
        %vm617 = vcmp.lt.s32.totalorder %v501, 0
        %vm618 = vcmp.lt.s32.totalorder %v508, 0
        %vm619 = vcmp.lt.s32.totalorder %v515, 0
        %vm620 = vcmp.lt.s32.totalorder %v522, 0
        %vm621 = vcmp.lt.s32.totalorder %v529, 0
        %vm622 = vcmp.lt.s32.totalorder %v536, 0
        %vm623 = vcmp.lt.s32.totalorder %v543, 0
        %vm624 = vcmp.lt.s32.totalorder %v550, 0
        %vm625 = vcmp.lt.s32.totalorder %v557, 0
        %vm626 = vcmp.lt.s32.totalorder %v564, 0
        %vm627 = vcmp.lt.s32.totalorder %v571, 0
        %vm628 = vcmp.lt.s32.totalorder %v578, 0
        %vm629 = vcmp.lt.s32.totalorder %v585, 0
        %vm630 = vcmp.lt.s32.totalorder %v592, 0
        %vm631 = vcmp.lt.s32.totalorder %v599, 0
        %vm632 = vmand %vm616, %vm600
        %vm633 = vmand %vm617, %vm601
        %vm634 = vmand %vm618, %vm602
        %vm635 = vmand %vm619, %vm603
        %vm636 = vmand %vm620, %vm604
        %vm637 = vmand %vm621, %vm605
        %vm638 = vmand %vm622, %vm606
        %vm639 = vmand %vm623, %vm607
        %vm640 = vmand %vm624, %vm608
        %vm641 = vmand %vm625, %vm609
        %vm642 = vmand %vm626, %vm610
        %vm643 = vmand %vm627, %vm611
        %vm644 = vmand %vm628, %vm612
        %vm645 = vmand %vm629, %vm613
        %vm646 = vmand %vm630, %vm614
        %vm647 = vmand %vm631, %vm615
        %v648 = vadd.s32 %v494, 16
        %v649 = vadd.s32 %v501, 16
        %v650 = vadd.s32 %v508, 16
        %v651 = vadd.s32 %v515, 16
        %v652 = vadd.s32 %v522, 16
        %v653 = vadd.s32 %v529, 16
        %v654 = vadd.s32 %v536, 16
        %v655 = vadd.s32 %v543, 16
        %v656 = vadd.s32 %v550, 16
        %v657 = vadd.s32 %v557, 16
        %v658 = vadd.s32 %v564, 16
        %v659 = vadd.s32 %v571, 16
        %v660 = vadd.s32 %v578, 16
        %v661 = vadd.s32 %v585, 16
        %v662 = vadd.s32 %v592, 16
        %v663 = vadd.s32 %v599, 16
        %v664 = vsel %vm632, %v648, %v494
        %v665 = vsel %vm633, %v649, %v501
        %v666 = vsel %vm634, %v650, %v508
        %v667 = vsel %vm635, %v651, %v515
        %v668 = vsel %vm636, %v652, %v522
        %v669 = vsel %vm637, %v653, %v529
        %v670 = vsel %vm638, %v654, %v536
        %v671 = vsel %vm639, %v655, %v543
        %v672 = vsel %vm640, %v656, %v550
        %v673 = vsel %vm641, %v657, %v557
        %v674 = vsel %vm642, %v658, %v564
        %v675 = vsel %vm643, %v659, %v571
        %v676 = vsel %vm644, %v660, %v578
        %v677 = vsel %vm645, %v661, %v585
        %v678 = vsel %vm646, %v662, %v592
        %v679 = vsel %vm647, %v663, %v599
        %vm680 = vcmp.lt.s32.totalorder %v664, 8
        %vm681 = vcmp.lt.s32.totalorder %v665, 8
        %vm682 = vcmp.lt.s32.totalorder %v666, 8
        %vm683 = vcmp.lt.s32.totalorder %v667, 8
        %vm684 = vcmp.lt.s32.totalorder %v668, 8
        %vm685 = vcmp.lt.s32.totalorder %v669, 8
        %vm686 = vcmp.lt.s32.totalorder %v670, 8
        %vm687 = vcmp.lt.s32.totalorder %v671, 8
        %vm688 = vcmp.lt.s32.totalorder %v672, 8
        %vm689 = vcmp.lt.s32.totalorder %v673, 8
        %vm690 = vcmp.lt.s32.totalorder %v674, 8
        %vm691 = vcmp.lt.s32.totalorder %v675, 8
        %vm692 = vcmp.lt.s32.totalorder %v676, 8
        %vm693 = vcmp.lt.s32.totalorder %v677, 8
        %vm694 = vcmp.lt.s32.totalorder %v678, 8
        %vm695 = vcmp.lt.s32.totalorder %v679, 8
        %v696 = vsel %vm680, 1, 0
        %v697 = vsel %vm681, 1, 0
        %v698 = vsel %vm682, 1, 0
        %v699 = vsel %vm683, 1, 0
        %v700 = vsel %vm684, 1, 0
        %v701 = vsel %vm685, 1, 0
        %v702 = vsel %vm686, 1, 0
        %v703 = vsel %vm687, 1, 0
        %v704 = vsel %vm688, 1, 0
        %v705 = vsel %vm689, 1, 0
        %v706 = vsel %vm690, 1, 0
        %v707 = vsel %vm691, 1, 0
        %v708 = vsel %vm692, 1, 0
        %v709 = vsel %vm693, 1, 0
        %v710 = vsel %vm694, 1, 0
        %v711 = vsel %vm695, 1, 0
        %v712 = vcvt.s32.f32 %v696
        %v713 = vcvt.s32.f32 %v697
        %v714 = vcvt.s32.f32 %v698
        %v715 = vcvt.s32.f32 %v699
        %v716 = vcvt.s32.f32 %v700
        %v717 = vcvt.s32.f32 %v701
        %v718 = vcvt.s32.f32 %v702
        %v719 = vcvt.s32.f32 %v703
        %v720 = vcvt.s32.f32 %v704
        %v721 = vcvt.s32.f32 %v705
        %v722 = vcvt.s32.f32 %v706
        %v723 = vcvt.s32.f32 %v707
        %v724 = vcvt.s32.f32 %v708
        %v725 = vcvt.s32.f32 %v709
        %v726 = vcvt.s32.f32 %v710
        %v727 = vcvt.s32.f32 %v711
        %v728 = vld [vmem:[%s2] sm:$0x1]
        %v729 = vld [vmem:[%s3] sm:$0x1]
        %v730 = vld [vmem:[%s242] sm:$0xff]
        %v731 = vld [vmem:[%s242 + $0x8] sm:$0xff]
        %v732 = vld [vmem:[%s242 + $0x10] sm:$0xff]
        %v733 = vld [vmem:[%s242 + $0x18] sm:$0xff]
        %v734 = vld [vmem:[%s242 + $0x20] sm:$0xff]
        %v735 = vld [vmem:[%s242 + $0x28] sm:$0xff]
        %v736 = vld [vmem:[%s242 + $0x30] sm:$0xff]
        %v737 = vld [vmem:[%s242 + $0x38] sm:$0xff]
        %v738 = vld [vmem:[%s242 + $0x40] sm:$0xff]
        %v739 = vld [vmem:[%s242 + $0x48] sm:$0xff]
        %v740 = vld [vmem:[%s242 + $0x50] sm:$0xff]
        %v741 = vld [vmem:[%s242 + $0x58] sm:$0xff]
        %v742 = vld [vmem:[%s242 + $0x60] sm:$0xff]
        %v743 = vld [vmem:[%s242 + $0x68] sm:$0xff]
        %v744 = vld [vmem:[%s242 + $0x70] sm:$0xff]
        %v745 = vld [vmem:[%s242 + $0x78] sm:$0xff]
        %v746 = vmul.f32 %v730, %v712
        %v747 = vmul.f32 %v731, %v713
        %v748 = vmul.f32 %v732, %v714
        %v749 = vmul.f32 %v733, %v715
        %v750 = vmul.f32 %v734, %v716
        %v751 = vmul.f32 %v735, %v717
        %v752 = vmul.f32 %v736, %v718
        %v753 = vmul.f32 %v737, %v719
        %v754 = vmul.f32 %v738, %v720
        %v755 = vmul.f32 %v739, %v721
        %v756 = vmul.f32 %v740, %v722
        %v757 = vmul.f32 %v741, %v723
        %v758 = vmul.f32 %v742, %v724
        %v759 = vmul.f32 %v743, %v725
        %v760 = vmul.f32 %v744, %v726
        %v761 = vmul.f32 %v745, %v727
        %v762 = vsel %vm451, %v746, 0.0
        %v763 = vsel %vm451, %v747, 0.0
        %v764 = vadd.f32 %v762, %v763
        %v765 = vsel %vm451, %v748, 0.0
        %v766 = vadd.f32 %v764, %v765
        %v767 = vsel %vm451, %v749, 0.0
        %v768 = vadd.f32 %v766, %v767
        %v769 = vsel %vm451, %v750, 0.0
        %v770 = vadd.f32 %v768, %v769
        %v771 = vsel %vm451, %v751, 0.0
        %v772 = vadd.f32 %v770, %v771
        %v773 = vsel %vm451, %v752, 0.0
        %v774 = vadd.f32 %v772, %v773
        %v775 = vsel %vm451, %v753, 0.0
        %v776 = vadd.f32 %v774, %v775
        %v777 = vsel %vm451, %v754, 0.0
        %v778 = vadd.f32 %v776, %v777
        %v779 = vsel %vm451, %v755, 0.0
        %v780 = vadd.f32 %v778, %v779
        %v781 = vsel %vm451, %v756, 0.0
        %v782 = vadd.f32 %v780, %v781
        %v783 = vsel %vm451, %v757, 0.0
        %v784 = vadd.f32 %v782, %v783
        %v785 = vsel %vm451, %v758, 0.0
        %v786 = vadd.f32 %v784, %v785
        %v787 = vsel %vm451, %v759, 0.0
        %v788 = vadd.f32 %v786, %v787
        %v789 = vsel %vm451, %v760, 0.0
        %v790 = vadd.f32 %v788, %v789
        %v791 = vsel %vm451, %v761, 0.0
        %v792 = vadd.f32 %v790, %v791
        %v793 = vrot.slane %v792, 4
        %v794 = vadd.f32 %v792, %v793
        %v795 = vrot.slane %v794, 2
        %v796 = vadd.f32 %v794, %v795
        %v797 = vrot.slane %v796, 1
        %v798 = vadd.f32 %v796, %v797
        %v799 = vmul.f32 %v798, 0.015625
        %v800 = vsub.f32 %v746, %v799
        %v801 = vsub.f32 %v747, %v799
        %v802 = vsub.f32 %v748, %v799
        %v803 = vsub.f32 %v749, %v799
        %v804 = vsub.f32 %v750, %v799
        %v805 = vsub.f32 %v751, %v799
        %v806 = vsub.f32 %v752, %v799
        %v807 = vsub.f32 %v753, %v799
        %v808 = vsub.f32 %v754, %v799
        %v809 = vsub.f32 %v755, %v799
        %v810 = vsub.f32 %v756, %v799
        %v811 = vsub.f32 %v757, %v799
        %v812 = vsub.f32 %v758, %v799
        %v813 = vsub.f32 %v759, %v799
        %v814 = vsub.f32 %v760, %v799
        %v815 = vsub.f32 %v761, %v799
        %v816 = vmul.f32 %v800, %v712
        %v817 = vmul.f32 %v801, %v713
        %v818 = vmul.f32 %v802, %v714
        %v819 = vmul.f32 %v803, %v715
        %v820 = vmul.f32 %v804, %v716
        %v821 = vmul.f32 %v805, %v717
        %v822 = vmul.f32 %v806, %v718
        %v823 = vmul.f32 %v807, %v719
        %v824 = vmul.f32 %v808, %v720
        %v825 = vmul.f32 %v809, %v721
        %v826 = vmul.f32 %v810, %v722
        %v827 = vmul.f32 %v811, %v723
        %v828 = vmul.f32 %v812, %v724
        %v829 = vmul.f32 %v813, %v725
        %v830 = vmul.f32 %v814, %v726
        %v831 = vmul.f32 %v815, %v727
        %v832 = vmul.f32 %v816, %v816
        %v833 = vmul.f32 %v817, %v817
        %v834 = vmul.f32 %v818, %v818
        %v835 = vmul.f32 %v819, %v819
        %v836 = vmul.f32 %v820, %v820
        %v837 = vmul.f32 %v821, %v821
        %v838 = vmul.f32 %v822, %v822
        %v839 = vmul.f32 %v823, %v823
        %v840 = vmul.f32 %v824, %v824
        %v841 = vmul.f32 %v825, %v825
        %v842 = vmul.f32 %v826, %v826
        %v843 = vmul.f32 %v827, %v827
        %v844 = vmul.f32 %v828, %v828
        %v845 = vmul.f32 %v829, %v829
        %v846 = vmul.f32 %v830, %v830
        %v847 = vmul.f32 %v831, %v831
        %v848 = vsel %vm451, %v832, 0.0
        %v849 = vsel %vm451, %v833, 0.0
        %v850 = vadd.f32 %v848, %v849
        %v851 = vsel %vm451, %v834, 0.0
        %v852 = vadd.f32 %v850, %v851
        %v853 = vsel %vm451, %v835, 0.0
        %v854 = vadd.f32 %v852, %v853
        %v855 = vsel %vm451, %v836, 0.0
        %v856 = vadd.f32 %v854, %v855
        %v857 = vsel %vm451, %v837, 0.0
        %v858 = vadd.f32 %v856, %v857
        %v859 = vsel %vm451, %v838, 0.0
        %v860 = vadd.f32 %v858, %v859
        %v861 = vsel %vm451, %v839, 0.0
        %v862 = vadd.f32 %v860, %v861
        %v863 = vsel %vm451, %v840, 0.0
        %v864 = vadd.f32 %v862, %v863
        %v865 = vsel %vm451, %v841, 0.0
        %v866 = vadd.f32 %v864, %v865
        %v867 = vsel %vm451, %v842, 0.0
        %v868 = vadd.f32 %v866, %v867
        %v869 = vsel %vm451, %v843, 0.0
        %v870 = vadd.f32 %v868, %v869
        %v871 = vsel %vm451, %v844, 0.0
        %v872 = vadd.f32 %v870, %v871
        %v873 = vsel %vm451, %v845, 0.0
        %v874 = vadd.f32 %v872, %v873
        %v875 = vsel %vm451, %v846, 0.0
        %v876 = vadd.f32 %v874, %v875
        %v877 = vsel %vm451, %v847, 0.0
        %v878 = vadd.f32 %v876, %v877
        %v879 = vrot.slane %v878, 4
        %v880 = vadd.f32 %v878, %v879
        %v881 = vrot.slane %v880, 2
        %v882 = vadd.f32 %v880, %v881
        %v883 = vrot.slane %v882, 1
        %v884 = vadd.f32 %v882, %v883
        %v885 = vmul.f32 %v884, 0.015625
        %v886 = vadd.f32 %v885, 1e-05
        %v887 = vrsqrt.pop %v886
        %v888 = vmul.f32 %v887, %v886
        %v889 = vmul.f32 %v888, %v887
        %v890 = vmul.f32 0.5, %v889
        %v891 = vsub.f32 1.5, %v890
        %v892 = vmul.f32 %v887, %v891
        %vm893 = vweird.f32 %v886
        %vm894 = vweird.f32 %v887
        %vm895 = vmor %vm893, %vm894
        %v896 = vsel %vm895, %v887, %v892
        %v897 = vmul.f32 %v816, %v896
        %v898 = vmul.f32 %v817, %v896
        %v899 = vmul.f32 %v818, %v896
        %v900 = vmul.f32 %v819, %v896
        %v901 = vmul.f32 %v820, %v896
        %v902 = vmul.f32 %v821, %v896
        %v903 = vmul.f32 %v822, %v896
        %v904 = vmul.f32 %v823, %v896
        %v905 = vmul.f32 %v824, %v896
        %v906 = vmul.f32 %v825, %v896
        %v907 = vmul.f32 %v826, %v896
        %v908 = vmul.f32 %v827, %v896
        %v909 = vmul.f32 %v828, %v896
        %v910 = vmul.f32 %v829, %v896
        %v911 = vmul.f32 %v830, %v896
        %v912 = vmul.f32 %v831, %v896
        %v914 = vperm.slane %v728, 0
        %v916 = vmul.f32 %v897, %v914
        %v917 = vmul.f32 %v898, %v914
        %v918 = vmul.f32 %v899, %v914
        %v919 = vmul.f32 %v900, %v914
        %v920 = vmul.f32 %v901, %v914
        %v921 = vmul.f32 %v902, %v914
        %v922 = vmul.f32 %v903, %v914
        %v923 = vmul.f32 %v904, %v914
        %v924 = vmul.f32 %v905, %v914
        %v925 = vmul.f32 %v906, %v914
        %v926 = vmul.f32 %v907, %v914
        %v927 = vmul.f32 %v908, %v914
        %v928 = vmul.f32 %v909, %v914
        %v929 = vmul.f32 %v910, %v914
        %v930 = vmul.f32 %v911, %v914
        %v931 = vmul.f32 %v912, %v914
        %v933 = vperm.slane %v729, 0
        %v935 = vadd.f32 %v916, %v933
        %v936 = vadd.f32 %v917, %v933
        %v937 = vadd.f32 %v918, %v933
        %v938 = vadd.f32 %v919, %v933
        %v939 = vadd.f32 %v920, %v933
        %v940 = vadd.f32 %v921, %v933
        %v941 = vadd.f32 %v922, %v933
        %v942 = vadd.f32 %v923, %v933
        %v943 = vadd.f32 %v924, %v933
        %v944 = vadd.f32 %v925, %v933
        %v945 = vadd.f32 %v926, %v933
        %v946 = vadd.f32 %v927, %v933
        %v947 = vadd.f32 %v928, %v933
        %v948 = vadd.f32 %v929, %v933
        %v949 = vadd.f32 %v930, %v933
        %v950 = vadd.f32 %v931, %v933
        %vm951 = vcmp.ge.f32.partialorder %v935, 0.0
        %vm952 = vcmp.ge.f32.partialorder %v936, 0.0
        %vm953 = vcmp.ge.f32.partialorder %v937, 0.0
        %vm954 = vcmp.ge.f32.partialorder %v938, 0.0
        %vm955 = vcmp.ge.f32.partialorder %v939, 0.0
        %vm956 = vcmp.ge.f32.partialorder %v940, 0.0
        %vm957 = vcmp.ge.f32.partialorder %v941, 0.0
        %vm958 = vcmp.ge.f32.partialorder %v942, 0.0
        %vm959 = vcmp.ge.f32.partialorder %v943, 0.0
        %vm960 = vcmp.ge.f32.partialorder %v944, 0.0
        %vm961 = vcmp.ge.f32.partialorder %v945, 0.0
        %vm962 = vcmp.ge.f32.partialorder %v946, 0.0
        %vm963 = vcmp.ge.f32.partialorder %v947, 0.0
        %vm964 = vcmp.ge.f32.partialorder %v948, 0.0
        %vm965 = vcmp.ge.f32.partialorder %v949, 0.0
        %vm966 = vcmp.ge.f32.partialorder %v950, 0.0
        %v967 = vmul.f32 %v935, 0.01
        %v968 = vmul.f32 %v936, 0.01
        %v969 = vmul.f32 %v937, 0.01
        %v970 = vmul.f32 %v938, 0.01
        %v971 = vmul.f32 %v939, 0.01
        %v972 = vmul.f32 %v940, 0.01
        %v973 = vmul.f32 %v941, 0.01
        %v974 = vmul.f32 %v942, 0.01
        %v975 = vmul.f32 %v943, 0.01
        %v976 = vmul.f32 %v944, 0.01
        %v977 = vmul.f32 %v945, 0.01
        %v978 = vmul.f32 %v946, 0.01
        %v979 = vmul.f32 %v947, 0.01
        %v980 = vmul.f32 %v948, 0.01
        %v981 = vmul.f32 %v949, 0.01
        %v982 = vmul.f32 %v950, 0.01
        %v983 = vsel %vm951, %v935, %v967
        %v984 = vsel %vm952, %v936, %v968
        %v985 = vsel %vm953, %v937, %v969
        %v986 = vsel %vm954, %v938, %v970
        %v987 = vsel %vm955, %v939, %v971
        %v988 = vsel %vm956, %v940, %v972
        %v989 = vsel %vm957, %v941, %v973
        %v990 = vsel %vm958, %v942, %v974
        %v991 = vsel %vm959, %v943, %v975
        %v992 = vsel %vm960, %v944, %v976
        %v993 = vsel %vm961, %v945, %v977
        %v994 = vsel %vm962, %v946, %v978
        %v995 = vsel %vm963, %v947, %v979
        %v996 = vsel %vm964, %v948, %v980
        %v997 = vsel %vm965, %v949, %v981
        %v998 = vsel %vm966, %v950, %v982
        %v999 = vmul.f32 %v983, %v712
        %v1000 = vmul.f32 %v984, %v713
        %v1001 = vmul.f32 %v985, %v714
        %v1002 = vmul.f32 %v986, %v715
        %v1003 = vmul.f32 %v987, %v716
        %v1004 = vmul.f32 %v988, %v717
        %v1005 = vmul.f32 %v989, %v718
        %v1006 = vmul.f32 %v990, %v719
        %v1007 = vmul.f32 %v991, %v720
        %v1008 = vmul.f32 %v992, %v721
        %v1009 = vmul.f32 %v993, %v722
        %v1010 = vmul.f32 %v994, %v723
        %v1011 = vmul.f32 %v995, %v724
        %v1012 = vmul.f32 %v996, %v725
        %v1013 = vmul.f32 %v997, %v726
        %v1014 = vmul.f32 %v998, %v727
        %1015 = vst.msk [vmem:[%s242] sm:$0xff] %vm451, %v999
        %1016 = vst.msk [vmem:[%s242 + $0x8] sm:$0xff] %vm451, %v1000
        %1017 = vst.msk [vmem:[%s242 + $0x10] sm:$0xff] %vm451, %v1001
        %1018 = vst.msk [vmem:[%s242 + $0x18] sm:$0xff] %vm451, %v1002
        %1019 = vst.msk [vmem:[%s242 + $0x20] sm:$0xff] %vm451, %v1003
        %1020 = vst.msk [vmem:[%s242 + $0x28] sm:$0xff] %vm451, %v1004
        %1021 = vst.msk [vmem:[%s242 + $0x30] sm:$0xff] %vm451, %v1005
        %1022 = vst.msk [vmem:[%s242 + $0x38] sm:$0xff] %vm451, %v1006
        %1023 = vst.msk [vmem:[%s242 + $0x40] sm:$0xff] %vm451, %v1007
        %1024 = vst.msk [vmem:[%s242 + $0x48] sm:$0xff] %vm451, %v1008
        %1025 = vst.msk [vmem:[%s242 + $0x50] sm:$0xff] %vm451, %v1009
        %1026 = vst.msk [vmem:[%s242 + $0x58] sm:$0xff] %vm451, %v1010
        %1027 = vst.msk [vmem:[%s242 + $0x60] sm:$0xff] %vm451, %v1011
        %1028 = vst.msk [vmem:[%s242 + $0x68] sm:$0xff] %vm451, %v1012
        %1029 = vst.msk [vmem:[%s242 + $0x70] sm:$0xff] %vm451, %v1013
        %1030 = vst.msk [vmem:[%s242 + $0x78] sm:$0xff] %vm451, %v1014
      $region44: #{discriminators_forward.4} parent=35 // pred_fallthru
        _
      %p1031 = scmp.lt.s32.totalorder %s19, 1
      %s1032 = scalar_select %p1031, %s19, 1
      %s1033 = smul.addr %s1032, 16
      %s1034 = smul.addr %s1033, 8
      %s1035 = scalar_lea.vmem %s4, %s1034
      // Predicated region
      $region45: #{discriminators_forward.4} parent=35 // pred_check
        %p1036 = pneg %p141
      $region46: #{discriminators_forward.4} parent=35 // pred_check_branch
        %1038 = sbr.rel (%p1036) target = $region48
      $region47: #{discriminators_forward.4} parent=35 // pred_region
        _
      $region48: #{discriminators_forward.4} parent=35 // pred_fallthru
        _
    $region36: #{discriminators_forward.4} parent=5 // pred_fallthru
      _
    %p1039 = scmp.le.s32.totalorder 2, %s10
    // Predicated region
    $region49: #{discriminators_forward.4} parent=5 // pred_check
      %p1040 = pneg %p1039
    $region50: #{discriminators_forward.4} parent=5 // pred_check_branch
      %1042 = sbr.rel (%p1040) target = $region52
    $region51: #{discriminators_forward.4} parent=5 // pred_region
      %s1043 = ssub.s32 %s10, 2
      // Predicated region
      $region53: #{discriminators_forward.4} parent=51 // pred_check
        %p1044 = pneg %p147
      $region54: #{discriminators_forward.4} parent=51 // pred_check_branch
        %1046 = sbr.rel (%p1044) target = $region56
      $region55: #{discriminators_forward.4} parent=51 // pred_region
        %p1047 = scmp.lt.s32.totalorder %s21, 1
        %s1048 = scalar_select %p1047, %s21, 1
        %s1049 = smul.addr %s1048, 16
        %s1050 = smul.addr %s1049, 8
        %s1051 = scalar_lea.vmem %s4, %s1050
      $region56: #{discriminators_forward.4} parent=51 // pred_fallthru
        _
    $region52: #{discriminators_forward.4} parent=5 // pred_fallthru
      _
  $region6: #{discriminators_forward.4} parent=0 // loop_footer
    %s14 = sadd.s32 1, %s10
  $region7: #{discriminators_forward.4} parent=0 // loop_footer_branch
    %9 = sbr.rel target = $region3
  $region8: #{discriminators_forward.4} parent=0 // loop_exit
    _

// kernel: discriminators_forward.5
$region0: #{discriminators_forward.5}
  #allocation0 [shape = 'u32[]', space=smem, size = 0x4, offset = 0x4, fixed_abs, tag = 'smem constant byte address 0x4 - core index']
  #allocation1 [shape = 'u32[72,128]{1,0:T(1,128)}', space=vmem, size = 0x9000, scoped, tag = 'internal scratch']
  %s0 = inlined_call_operand.vmem [shape: bf16[2,40,32], index: 0, kind: input, shape index: {}]
  %s1 = inlined_call_operand.vmem [shape: bf16[4,32,16], index: 1, kind: input, shape index: {}]
  %s2 = inlined_call_operand.vmem [shape: f32[1,16], index: 2, kind: input, shape index: {}]
  %s3 = inlined_call_operand.vmem [shape: f32[1,16], index: 3, kind: input, shape index: {}]
  %s4 = inlined_call_operand.vmem [shape: f32[2,32,16], index: 4, kind: output, shape index: {}]
  %s5 = sld [smem:[#allocation0]]
  $region57: #{discriminators_forward.5} parent=0
    _
  %s7 = ssub.s32 1, %s5
  %s8 = scalar_select 0, %s7, %s5
  loop: start=0, step=1, limit=4
  $region2: #{discriminators_forward.5} parent=0 // loop_pre_header
    _
  $region3: #{discriminators_forward.5} parent=0 // loop_header
    %s10 = sphi 0, %s14
    %p11 = scmp.ge.s32.totalorder %s10, 4
    %s17 = sphi 0, %s29
    %s18 = sphi 0, %s25
    %s19 = sphi 0, %s17
    %s20 = sphi 0, %s18
    %s21 = sphi 0, %s19
    %s22 = sphi 0, %s20
    %s34 = sphi 0, %s36
    %s37 = sphi 0, %s34
    %s38 = sphi 0, %s37
    %s54 = sphi 0, %s38
    %s60 = sphi 0, %s62
    %s63 = sphi 0, %s60
    %s64 = sphi 0, %s63
    %s80 = sphi 0, %s64
    %s84 = sphi 0, %s84
    %s86 = sphi 0, %s84
    %s87 = sphi 0, %s86
    %s101 = sphi 0, %s87
    %s105 = sphi 0, %s105
    %s107 = sphi 0, %s105
    %s108 = sphi 0, %s107
    %s122 = sphi 0, %s108
    %s128 = sphi 0, %s130
    %s131 = sphi 0, %s128
    %s132 = sphi 0, %s131
    %s148 = sphi 0, %s132
  $region4: #{discriminators_forward.5} parent=0 // loop_header_branch
    %13 = sbr.rel (%p11) target = $region8
  $region5: #{discriminators_forward.5} parent=0 // loop_body
    %s15 = ssub.s32 %s10, 1
    %s16 = ssub.s32 %s10, 2
    %s23 = sadd.s32 1, %s18
    %p24 = scmp.ge.s32.totalorder %s23, 1
    %s25 = scalar_select %p24, 0, %s23
    %s26 = sadd.s32 1, %s17
    %s27 = scalar_select %p24, %s26, %s17
    %p28 = scmp.ge.s32.totalorder %s27, 2
    %s29 = scalar_select %p28, 0, %s27
    %s30 = ssub.s32 %s17, %s29
    %s31 = ssub.s32 %s18, %s25
    %s32 = sor.u32 %s30, %s31
    %p33 = scmp.eq.s32.totalorder %s32, 0
    %s35 = sadd.s32 %s34, 1
    %s36 = scalar_select %p33, %s34, %s35
    %p39 = pneg %p33
    %p40 = scmp.eq.s32.totalorder %s10, 1
    %p41 = por %p39, %p40
    %p42 = scmp.ne.s32.totalorder %s34, %s37
    %p43 = scmp.eq.s32.totalorder %s10, 0
    %p44 = por %p42, %p43
    %p45 = scmp.ne.s32.totalorder %s34, %s37
    %p46 = scmp.eq.s32.totalorder %s15, 1
    %p47 = por %p45, %p46
    %p48 = scmp.ne.s32.totalorder %s37, %s38
    %p49 = scmp.eq.s32.totalorder %s15, 0
    %p50 = por %p48, %p49
    %p51 = scmp.ne.s32.totalorder %s37, %s38
    %p52 = scmp.eq.s32.totalorder %s16, 1
    %p53 = por %p51, %p52
    %p55 = scmp.ne.s32.totalorder %s38, %s54
    %p56 = scmp.eq.s32.totalorder %s16, 0
    %p57 = por %p55, %p56
    %s58 = ssub.s32 %s18, %s25
    %p59 = scmp.eq.s32.totalorder %s58, 0
    %s61 = sadd.s32 %s60, 1
    %s62 = scalar_select %p59, %s60, %s61
    %p65 = pneg %p59
    %p66 = scmp.eq.s32.totalorder %s10, 1
    %p67 = por %p65, %p66
    %p68 = scmp.ne.s32.totalorder %s60, %s63
    %p69 = scmp.eq.s32.totalorder %s10, 0
    %p70 = por %p68, %p69
    %p71 = scmp.ne.s32.totalorder %s60, %s63
    %p72 = scmp.eq.s32.totalorder %s15, 1
    %p73 = por %p71, %p72
    %p74 = scmp.ne.s32.totalorder %s63, %s64
    %p75 = scmp.eq.s32.totalorder %s15, 0
    %p76 = por %p74, %p75
    %p77 = scmp.ne.s32.totalorder %s63, %s64
    %p78 = scmp.eq.s32.totalorder %s16, 1
    %p79 = por %p77, %p78
    %p81 = scmp.ne.s32.totalorder %s64, %s80
    %p82 = scmp.eq.s32.totalorder %s16, 0
    %p83 = por %p81, %p82
    %s85 = sadd.s32 %s84, 1
    %p88 = scmp.eq.s32.totalorder %s10, 1
    %p89 = scmp.ne.s32.totalorder %s84, %s86
    %p90 = scmp.eq.s32.totalorder %s10, 0
    %p91 = por %p89, %p90
    %p92 = scmp.ne.s32.totalorder %s84, %s86
    %p93 = scmp.eq.s32.totalorder %s15, 1
    %p94 = por %p92, %p93
    %p95 = scmp.ne.s32.totalorder %s86, %s87
    %p96 = scmp.eq.s32.totalorder %s15, 0
    %p97 = por %p95, %p96
    %p98 = scmp.ne.s32.totalorder %s86, %s87
    %p99 = scmp.eq.s32.totalorder %s16, 1
    %p100 = por %p98, %p99
    %p102 = scmp.ne.s32.totalorder %s87, %s101
    %p103 = scmp.eq.s32.totalorder %s16, 0
    %p104 = por %p102, %p103
    %s106 = sadd.s32 %s105, 1
    %p109 = scmp.eq.s32.totalorder %s10, 1
    %p110 = scmp.ne.s32.totalorder %s105, %s107
    %p111 = scmp.eq.s32.totalorder %s10, 0
    %p112 = por %p110, %p111
    %p113 = scmp.ne.s32.totalorder %s105, %s107
    %p114 = scmp.eq.s32.totalorder %s15, 1
    %p115 = por %p113, %p114
    %p116 = scmp.ne.s32.totalorder %s107, %s108
    %p117 = scmp.eq.s32.totalorder %s15, 0
    %p118 = por %p116, %p117
    %p119 = scmp.ne.s32.totalorder %s107, %s108
    %p120 = scmp.eq.s32.totalorder %s16, 1
    %p121 = por %p119, %p120
    %p123 = scmp.ne.s32.totalorder %s108, %s122
    %p124 = scmp.eq.s32.totalorder %s16, 0
    %p125 = por %p123, %p124
    %s126 = ssub.s32 %s17, %s29
    %p127 = scmp.eq.s32.totalorder %s126, 0
    %s129 = sadd.s32 %s128, 1
    %s130 = scalar_select %p127, %s128, %s129
    %p133 = pneg %p127
    %p134 = scmp.eq.s32.totalorder %s10, 1
    %p135 = por %p133, %p134
    %p136 = scmp.ne.s32.totalorder %s128, %s131
    %p137 = scmp.eq.s32.totalorder %s10, 0
    %p138 = por %p136, %p137
    %p139 = scmp.ne.s32.totalorder %s128, %s131
    %p140 = scmp.eq.s32.totalorder %s15, 1
    %p141 = por %p139, %p140
    %p142 = scmp.ne.s32.totalorder %s131, %s132
    %p143 = scmp.eq.s32.totalorder %s15, 0
    %p144 = por %p142, %p143
    %p145 = scmp.ne.s32.totalorder %s131, %s132
    %p146 = scmp.eq.s32.totalorder %s16, 1
    %p147 = por %p145, %p146
    %p149 = scmp.ne.s32.totalorder %s132, %s148
    %p150 = scmp.eq.s32.totalorder %s16, 0
    %p151 = por %p149, %p150
    %p152 = scmp.le.s32.totalorder 1, %s10
    %p153 = scmp.lt.s32.totalorder %s10, 3
    %p154 = pnand %p152, %p153
    %p155 = pneg %p154
    // Predicated region
    $region9: #{discriminators_forward.5} parent=5 // pred_check
      _
    $region10: #{discriminators_forward.5} parent=5 // pred_check_branch
      %157 = sbr.rel (%p154) target = $region12
    $region11: #{discriminators_forward.5} parent=5 // pred_region
      %s158 = ssub.s32 %s10, 1
      // Predicated region
      $region13: #{discriminators_forward.5} parent=11 // pred_check
        %p159 = pneg %p76
      $region14: #{discriminators_forward.5} parent=11 // pred_check_branch
        %161 = sbr.rel (%p159) target = $region16
      $region15: #{discriminators_forward.5} parent=11 // pred_region
        %s162 = smul.u32 4, %s20
        %p163 = scmp.lt.s32.totalorder %s162, 3
        %s164 = scalar_select %p163, %s162, 3
        %s165 = smul.addr %s164, 4
        %s166 = scalar_lea.vmem %s1, %s165
        %s167 = smul.u32 4, %s20
      $region16: #{discriminators_forward.5} parent=11 // pred_fallthru
        _
      // Predicated region
      $region17: #{discriminators_forward.5} parent=11 // pred_check
        %p168 = pneg %p97
      $region18: #{discriminators_forward.5} parent=11 // pred_check_branch
        %170 = sbr.rel (%p168) target = $region20
      $region19: #{discriminators_forward.5} parent=11 // pred_region
        _
      $region20: #{discriminators_forward.5} parent=11 // pred_fallthru
        _
      // Predicated region
      $region21: #{discriminators_forward.5} parent=11 // pred_check
        %p171 = pneg %p118
      $region22: #{discriminators_forward.5} parent=11 // pred_check_branch
        %173 = sbr.rel (%p171) target = $region24
      $region23: #{discriminators_forward.5} parent=11 // pred_region
        _
      $region24: #{discriminators_forward.5} parent=11 // pred_fallthru
        _
    $region12: #{discriminators_forward.5} parent=5 // pred_fallthru
      _
    %p174 = scmp.lt.s32.totalorder %s10, 2
    // Predicated region
    $region25: #{discriminators_forward.5} parent=5 // pred_check
      %p175 = pneg %p174
    $region26: #{discriminators_forward.5} parent=5 // pred_check_branch
      %177 = sbr.rel (%p175) target = $region28
    $region27: #{discriminators_forward.5} parent=5 // pred_region
      // Predicated region
      $region29: #{discriminators_forward.5} parent=27 // pred_check
        %p178 = pneg %p44
      $region30: #{discriminators_forward.5} parent=27 // pred_check_branch
        %180 = sbr.rel (%p178) target = $region32
      $region31: #{discriminators_forward.5} parent=27 // pred_region
        %p181 = scmp.lt.s32.totalorder %s17, 1
        %s182 = scalar_select %p181, %s17, 1
        %p183 = scmp.lt.s32.totalorder %s18, 0
        %s184 = scalar_select %p183, %s18, 0
        %s185 = smul.addr %s182, 5
        %s186 = sadd.s32 %s184, %s185
        %s187 = smul.addr %s186, 4
        %s188 = scalar_lea.vmem %s0, %s187
      $region32: #{discriminators_forward.5} parent=27 // pred_fallthru
        _
    $region28: #{discriminators_forward.5} parent=5 // pred_fallthru
      _
    %p189 = scmp.le.s32.totalorder 1, %s10
    %p190 = scmp.lt.s32.totalorder %s10, 3
    %p191 = pnand %p189, %p190
    %p192 = pneg %p191
    // Predicated region
    $region33: #{discriminators_forward.5} parent=5 // pred_check
      _
    $region34: #{discriminators_forward.5} parent=5 // pred_check_branch
      %194 = sbr.rel (%p191) target = $region36
    $region35: #{discriminators_forward.5} parent=5 // pred_region
      %s195 = ssub.s32 %s10, 1
      %p196 = scmp.lt.s32.totalorder %s19, 1
      %s197 = scalar_select %p196, %s19, 1
      %p198 = scmp.lt.s32.totalorder %s20, 0
      %s199 = scalar_select %p198, %s20, 0
      %s200 = smul.addr %s197, 5
      %s201 = sadd.s32 %s199, %s200
      %s202 = smul.addr %s201, 4
      %s203 = scalar_lea.vmem %s0, %s202
      %p204 = pneg %p50
      %p205 = pneg %p47
      %s206 = smul.u32 4, %s20
      %p207 = scmp.lt.s32.totalorder %s206, 3
      %s208 = scalar_select %p207, %s206, 3
      %s209 = smul.addr %s208, 4
      %s210 = scalar_lea.vmem %s1, %s209
      %p211 = pneg %p76
      %p212 = pneg %p73
      %p213 = pneg %p97
      %p214 = pneg %p94
      %p215 = pneg %p118
      %p216 = pneg %p115
      %p217 = pneg %p144
      %p218 = pneg %p141
      %p219 = scmp.lt.s32.totalorder %s19, 1
      %s220 = scalar_select %p219, %s19, 1
      %s221 = smul.addr %s220, 4
      %s222 = smul.addr %s221, 8
      %s223 = scalar_lea.vmem %s4, %s222
      %p224 = scmp.lt.s32.totalorder %s19, 1
      %s225 = scalar_select %p224, %s19, 1
      %p226 = scmp.lt.s32.totalorder %s20, 0
      %s227 = scalar_select %p226, %s20, 0
      %s228 = smul.addr %s225, 5
      %s229 = sadd.s32 %s227, %s228
      %s230 = smul.addr %s229, 4
      %s231 = scalar_lea.vmem %s0, %s230
      %s232 = smul.u32 4, %s20
      %p233 = scmp.lt.s32.totalorder %s232, 3
      %s234 = scalar_select %p233, %s232, 3
      %s235 = smul.addr %s234, 4
      %s236 = scalar_lea.vmem %s1, %s235
      %s237 = smul.u32 4, %s20
      %p238 = scmp.lt.s32.totalorder %s19, 1
      %s239 = scalar_select %p238, %s19, 1
      %s240 = smul.addr %s239, 4
      %s241 = smul.addr %s240, 8
      %s242 = scalar_lea.vmem %s4, %s241
      %p244 = scmp.eq.s32.totalorder %s20, 0
      // Predicated region
      $region37: #{discriminators_forward.5} parent=35 // pred_check
        %p245 = pneg %p244
      $region38: #{discriminators_forward.5} parent=35 // pred_check_branch
        %247 = sbr.rel (%p245) target = $region40
      $region39: #{discriminators_forward.5} parent=35 // pred_region
        %vm248 = vcmask 130048
        %249 = vst.msk [vmem:[%s242] sm:$0xff] %vm248, 0.0
        %250 = vst.msk [vmem:[%s242 + $0x8] sm:$0xff] %vm248, 0.0
        %251 = vst.msk [vmem:[%s242 + $0x10] sm:$0xff] %vm248, 0.0
        %252 = vst.msk [vmem:[%s242 + $0x18] sm:$0xff] %vm248, 0.0
      $region40: #{discriminators_forward.5} parent=35 // pred_fallthru
        _
      %v253 = vld [vmem:[%s242] sm:$0xff]
      %v254 = vld [vmem:[%s242 + $0x8] sm:$0xff]
      %v255 = vld [vmem:[%s242 + $0x10] sm:$0xff]
      %v256 = vld [vmem:[%s242 + $0x18] sm:$0xff]
      %v257 = vld [vmem:[%s231] sm:$0xf]
      %v258 = vld [vmem:[%s231 + $0x4] sm:$0xf]
      %v259 = vld [vmem:[%s231 + $0x8] sm:$0xf]
      %v260 = vld [vmem:[%s231 + $0xc] sm:$0xf]
      %v261 = vld [vmem:[%s231 + $0x10] sm:$0xf]
      %v262 = vld [vmem:[%s236] sm:$0xf]
      %v263 = vld [vmem:[%s236 + $0x4] sm:$0xf]
      %v264 = vld [vmem:[%s236 + $0x8] sm:$0xf]
      %v265 = vld [vmem:[%s236 + $0xc] sm:$0xf]
      %s266 = scalar_lea.vmem %s236, 32
      %v267 = vld [vmem:[%s266] sm:$0xf]
      %v268 = vld [vmem:[%s266 + $0x4] sm:$0xf]
      %v269 = vld [vmem:[%s266 + $0x8] sm:$0xf]
      %v270 = vld [vmem:[%s266 + $0xc] sm:$0xf]
      %v275 = vunpack.c.l.b16 %v258
      %v276 = vunpack.c.l.b16 %v259
      %v277 = vunpack.c.l.b16 %v260
      %v278 = vunpack.c.l.b16 %v261
      %v279 = vpack.c.b16 %v276, %v275
      %v280 = vpack.c.b16 %v278, %v277
      %v285 = vunpack.c.l.b16 %v267
      %v286 = vunpack.c.l.b16 %v268
      %v287 = vunpack.c.l.b16 %v269
      %v288 = vunpack.c.l.b16 %v270
      %v289 = vpack.c.b16 %v286, %v285
      %v290 = vpack.c.b16 %v288, %v287
      %vm293 = vcmask 261120
      %v295 = vsel %vm293, %v279, 0
      %v298 = vsel %vm293, %v280, 0
      %300 = vmatpush.bf16.msra.mxu0 0
      %301 = vmatpush.bf16.msra.mxu0 0
      %302 = vmatpush.bf16.msra.mxu0 0
      %303 = vmatpush.bf16.msra.mxu0 0
      %304 = vmatpush.bf16.msra.mxu0 0
      %305 = vmatpush.bf16.msra.mxu0 0
      %306 = vmatpush.bf16.msra.mxu0 %v290
      %307 = vmatpush.bf16.msra.mxu0 %v289
      %308 = vmatmul.bf16.gmra.mxu0 %v295
      %v309 = vpop.f32.mrf.mxu0
      %v310 = vadd.f32 0.0, %v309
      %v311 = vpop.f32.mrf.mxu0
      %v312 = vadd.f32 0.0, %v311
      %313 = vmatmul.bf16.gmra.mxu0 %v298
      %v314 = vpop.f32.mrf.mxu0
      %v315 = vadd.f32 0.0, %v314
      %v316 = vpop.f32.mrf.mxu0
      %v317 = vadd.f32 0.0, %v316
      %318 = vdwg.mxu0
      %v320 = vunpack.c.l.b16 %v257
      %v321 = vpack.c.b16 %v275, %v320
      %v322 = vpack.c.b16 %v277, %v276
      %v327 = vunpack.c.l.b16 %v262
      %v328 = vunpack.c.l.b16 %v263
      %v329 = vunpack.c.l.b16 %v264
      %v330 = vunpack.c.l.b16 %v265
      %v331 = vpack.c.b16 %v328, %v327
      %v332 = vpack.c.b16 %v330, %v329
      %v336 = vsel %vm293, %v321, 0
      %v339 = vsel %vm293, %v322, 0
      %341 = vmatpush.bf16.msra.mxu0 0
      %342 = vmatpush.bf16.msra.mxu0 0
      %343 = vmatpush.bf16.msra.mxu0 0
      %344 = vmatpush.bf16.msra.mxu0 0
      %345 = vmatpush.bf16.msra.mxu0 0
      %346 = vmatpush.bf16.msra.mxu0 0
      %347 = vmatpush.bf16.msra.mxu0 %v332
      %348 = vmatpush.bf16.msra.mxu0 %v331
      %349 = vmatmul.bf16.gmra.mxu0 %v336
      %v350 = vpop.f32.mrf.mxu0
      %v351 = vadd.f32 %v310, %v350
      %v352 = vpop.f32.mrf.mxu0
      %v353 = vadd.f32 %v312, %v352
      %354 = vmatmul.bf16.gmra.mxu0 %v339
      %v355 = vpop.f32.mrf.mxu0
      %v356 = vadd.f32 %v315, %v355
      %v357 = vpop.f32.mrf.mxu0
      %v358 = vadd.f32 %v317, %v357
      %359 = vdwg.mxu0
      %s360 = scalar_lea.vmem %s236, 16
      %v361 = vld [vmem:[%s360] sm:$0xf]
      %v362 = vld [vmem:[%s360 + $0x4] sm:$0xf]
      %v363 = vld [vmem:[%s360 + $0x8] sm:$0xf]
      %v364 = vld [vmem:[%s360 + $0xc] sm:$0xf]
      %s365 = scalar_lea.vmem %s236, 48
      %v366 = vld [vmem:[%s365] sm:$0xf]
      %v367 = vld [vmem:[%s365 + $0x4] sm:$0xf]
      %v368 = vld [vmem:[%s365 + $0x8] sm:$0xf]
      %v369 = vld [vmem:[%s365 + $0xc] sm:$0xf]
      %v374 = vunpack.c.l.b16 %v366
      %v375 = vunpack.c.l.b16 %v367
      %v376 = vunpack.c.l.b16 %v368
      %v377 = vunpack.c.l.b16 %v369
      %v378 = vpack.c.b16 %v375, %v374
      %v379 = vpack.c.b16 %v377, %v376
      %382 = vmatpush.bf16.msra.mxu0 0
      %383 = vmatpush.bf16.msra.mxu0 0
      %384 = vmatpush.bf16.msra.mxu0 0
      %385 = vmatpush.bf16.msra.mxu0 0
      %386 = vmatpush.bf16.msra.mxu0 0
      %387 = vmatpush.bf16.msra.mxu0 0
      %388 = vmatpush.bf16.msra.mxu0 %v379
      %389 = vmatpush.bf16.msra.mxu0 %v378
      %390 = vmatmul.bf16.gmra.mxu0 %v295
      %v391 = vpop.f32.mrf.mxu0
      %v392 = vadd.f32 0.0, %v391
      %v393 = vpop.f32.mrf.mxu0
      %v394 = vadd.f32 0.0, %v393
      %395 = vmatmul.bf16.gmra.mxu0 %v298
      %v396 = vpop.f32.mrf.mxu0
      %v397 = vadd.f32 0.0, %v396
      %v398 = vpop.f32.mrf.mxu0
      %v399 = vadd.f32 0.0, %v398
      %400 = vdwg.mxu0
      %v405 = vunpack.c.l.b16 %v361
      %v406 = vunpack.c.l.b16 %v362
      %v407 = vunpack.c.l.b16 %v363
      %v408 = vunpack.c.l.b16 %v364
      %v409 = vpack.c.b16 %v406, %v405
      %v410 = vpack.c.b16 %v408, %v407
      %413 = vmatpush.bf16.msra.mxu0 0
      %414 = vmatpush.bf16.msra.mxu0 0
      %415 = vmatpush.bf16.msra.mxu0 0
      %416 = vmatpush.bf16.msra.mxu0 0
      %417 = vmatpush.bf16.msra.mxu0 0
      %418 = vmatpush.bf16.msra.mxu0 0
      %419 = vmatpush.bf16.msra.mxu0 %v410
      %420 = vmatpush.bf16.msra.mxu0 %v409
      %421 = vmatmul.bf16.gmra.mxu0 %v336
      %v422 = vpop.f32.mrf.mxu0
      %v423 = vadd.f32 %v392, %v422
      %v424 = vpop.f32.mrf.mxu0
      %v425 = vadd.f32 %v394, %v424
      %426 = vmatmul.bf16.gmra.mxu0 %v339
      %v427 = vpop.f32.mrf.mxu0
      %v428 = vadd.f32 %v397, %v427
      %v429 = vpop.f32.mrf.mxu0
      %v430 = vadd.f32 %v399, %v429
      %431 = vdwg.mxu0
      %v432 = vadd.f32 %v253, %v351
      %v433 = vadd.f32 %v254, %v353
      %v434 = vadd.f32 %v255, %v356
      %v435 = vadd.f32 %v256, %v358
      %v436 = vrot.slane %v423, 1
      %v437 = vrot.slane %v425, 1
      %v438 = vrot.slane %v428, 1
      %v439 = vrot.slane %v430, 1
      %v440 = vlaneseq
      %v441 = vshrl.u32 %v440, 7
      %vm442 = vcmp.lt.s32.totalorder %v441, 7
      %v443 = vsel %vm442, %v438, %v439
      %v444 = vsel %vm442, %v437, %v438
      %v445 = vsel %vm442, %v436, %v437
      %v446 = vsel %vm442, %v439, %v436
      %v447 = vadd.f32 %v432, %v445
      %v448 = vadd.f32 %v433, %v444
      %v449 = vadd.f32 %v434, %v443
      %v450 = vadd.f32 %v435, %v446
      %vm451 = vcmask 130048
      %452 = vst.msk [vmem:[%s242] sm:$0xff] %vm451, %v447
      %453 = vst.msk [vmem:[%s242 + $0x8] sm:$0xff] %vm451, %v448
      %454 = vst.msk [vmem:[%s242 + $0x10] sm:$0xff] %vm451, %v449
      %455 = vst.msk [vmem:[%s242 + $0x18] sm:$0xff] %vm451, %v450
      // Predicated region
      $region41: #{discriminators_forward.5} parent=35 // pred_check
        %p456 = pneg %p244
      $region42: #{discriminators_forward.5} parent=35 // pred_check_branch
        %458 = sbr.rel (%p456) target = $region44
      $region43: #{discriminators_forward.5} parent=35 // pred_region
        %v459 = vadd.s32 %v441, 8
        %v460 = vadd.s32 %v441, 16
        %v461 = vadd.s32 %v441, 24
        %vm462 = vcmp.lt.s32.totalorder %v441, 0
        %v463 = vsub.s32 0, %v441
        %v464 = vsel %vm462, %v463, %v441
        %v465 = vshrl.u32 %v464, 3
        %v466 = vand.u32 %v464, 7
        %v467 = vsub.s32 0, %v466
        %v468 = vsel %vm462, %v467, %v466
        %vm469 = vcmp.lt.s32.totalorder %v459, 0
        %v470 = vsub.s32 0, %v459
        %v471 = vsel %vm469, %v470, %v459
        %v472 = vshrl.u32 %v471, 3
        %v473 = vand.u32 %v471, 7
        %v474 = vsub.s32 0, %v473
        %v475 = vsel %vm469, %v474, %v473
        %vm476 = vcmp.lt.s32.totalorder %v460, 0
        %v477 = vsub.s32 0, %v460
        %v478 = vsel %vm476, %v477, %v460
        %v479 = vshrl.u32 %v478, 3
        %v480 = vand.u32 %v478, 7
        %v481 = vsub.s32 0, %v480
        %v482 = vsel %vm476, %v481, %v480
        %vm483 = vcmp.lt.s32.totalorder %v461, 0
        %v484 = vsub.s32 0, %v461
        %v485 = vsel %vm483, %v484, %v461
        %v486 = vshrl.u32 %v485, 3
        %v487 = vand.u32 %v485, 7
        %v488 = vsub.s32 0, %v487
        %v489 = vsel %vm483, %v488, %v487
        %vm490 = vcmp.ne.s32.totalorder %v468, 0
        %vm491 = vcmp.ne.s32.totalorder %v475, 0
        %vm492 = vcmp.ne.s32.totalorder %v482, 0
        %vm493 = vcmp.ne.s32.totalorder %v489, 0
        %vm494 = vcmp.lt.s32.totalorder %v468, 0
        %vm495 = vcmp.lt.s32.totalorder %v475, 0
        %vm496 = vcmp.lt.s32.totalorder %v482, 0
        %vm497 = vcmp.lt.s32.totalorder %v489, 0
        %vm498 = vmand %vm494, %vm490
        %vm499 = vmand %vm495, %vm491
        %vm500 = vmand %vm496, %vm492
        %vm501 = vmand %vm497, %vm493
        %v502 = vadd.s32 %v468, 8
        %v503 = vadd.s32 %v475, 8
        %v504 = vadd.s32 %v482, 8
        %v505 = vadd.s32 %v489, 8
        %v506 = vsel %vm498, %v502, %v468
        %v507 = vsel %vm499, %v503, %v475
        %v508 = vsel %vm500, %v504, %v482
        %v509 = vsel %vm501, %v505, %v489
        %vm510 = vcmp.lt.s32.totalorder %v506, 4
        %vm511 = vcmp.lt.s32.totalorder %v507, 4
        %vm512 = vcmp.lt.s32.totalorder %v508, 4
        %vm513 = vcmp.lt.s32.totalorder %v509, 4
        %v514 = vsel %vm510, 1, 0
        %v515 = vsel %vm511, 1, 0
        %v516 = vsel %vm512, 1, 0
        %v517 = vsel %vm513, 1, 0
        %v518 = vcvt.s32.f32 %v514
        %v519 = vcvt.s32.f32 %v515
        %v520 = vcvt.s32.f32 %v516
        %v521 = vcvt.s32.f32 %v517
        %v522 = vld [vmem:[%s2] sm:$0x1]
        %v523 = vld [vmem:[%s3] sm:$0x1]
        %v524 = vld [vmem:[%s242] sm:$0xff]
        %v525 = vld [vmem:[%s242 + $0x8] sm:$0xff]
        %v526 = vld [vmem:[%s242 + $0x10] sm:$0xff]
        %v527 = vld [vmem:[%s242 + $0x18] sm:$0xff]
        %v528 = vmul.f32 %v524, %v518
        %v529 = vmul.f32 %v525, %v519
        %v530 = vmul.f32 %v526, %v520
        %v531 = vmul.f32 %v527, %v521
        %v532 = vsel %vm451, %v528, 0.0
        %v533 = vsel %vm451, %v529, 0.0
        %v534 = vadd.f32 %v532, %v533
        %v535 = vsel %vm451, %v530, 0.0
        %v536 = vadd.f32 %v534, %v535
        %v537 = vsel %vm451, %v531, 0.0
        %v538 = vadd.f32 %v536, %v537
        %v539 = vrot.slane %v538, 4
        %v540 = vadd.f32 %v538, %v539
        %v541 = vrot.slane %v540, 2
        %v542 = vadd.f32 %v540, %v541
        %v543 = vrot.slane %v542, 1
        %v544 = vadd.f32 %v542, %v543
        %v545 = vmul.f32 %v544, 0.0625
        %v546 = vsub.f32 %v528, %v545
        %v547 = vsub.f32 %v529, %v545
        %v548 = vsub.f32 %v530, %v545
        %v549 = vsub.f32 %v531, %v545
        %v550 = vmul.f32 %v546, %v518
        %v551 = vmul.f32 %v547, %v519
        %v552 = vmul.f32 %v548, %v520
        %v553 = vmul.f32 %v549, %v521
        %v554 = vmul.f32 %v550, %v550
        %v555 = vmul.f32 %v551, %v551
        %v556 = vmul.f32 %v552, %v552
        %v557 = vmul.f32 %v553, %v553
        %v558 = vsel %vm451, %v554, 0.0
        %v559 = vsel %vm451, %v555, 0.0
        %v560 = vadd.f32 %v558, %v559
        %v561 = vsel %vm451, %v556, 0.0
        %v562 = vadd.f32 %v560, %v561
        %v563 = vsel %vm451, %v557, 0.0
        %v564 = vadd.f32 %v562, %v563
        %v565 = vrot.slane %v564, 4
        %v566 = vadd.f32 %v564, %v565
        %v567 = vrot.slane %v566, 2
        %v568 = vadd.f32 %v566, %v567
        %v569 = vrot.slane %v568, 1
        %v570 = vadd.f32 %v568, %v569
        %v571 = vmul.f32 %v570, 0.0625
        %v572 = vadd.f32 %v571, 1e-05
        %v573 = vrsqrt.pop %v572
        %v574 = vmul.f32 %v573, %v572
        %v575 = vmul.f32 %v574, %v573
        %v576 = vmul.f32 0.5, %v575
        %v577 = vsub.f32 1.5, %v576
        %v578 = vmul.f32 %v573, %v577
        %vm579 = vweird.f32 %v572
        %vm580 = vweird.f32 %v573
        %vm581 = vmor %vm579, %vm580
        %v582 = vsel %vm581, %v573, %v578
        %v583 = vmul.f32 %v550, %v582
        %v584 = vmul.f32 %v551, %v582
        %v585 = vmul.f32 %v552, %v582
        %v586 = vmul.f32 %v553, %v582
        %v588 = vperm.slane %v522, 0
        %v590 = vmul.f32 %v583, %v588
        %v591 = vmul.f32 %v584, %v588
        %v592 = vmul.f32 %v585, %v588
        %v593 = vmul.f32 %v586, %v588
        %v595 = vperm.slane %v523, 0
        %v597 = vadd.f32 %v590, %v595
        %v598 = vadd.f32 %v591, %v595
        %v599 = vadd.f32 %v592, %v595
        %v600 = vadd.f32 %v593, %v595
        %vm601 = vcmp.ge.f32.partialorder %v597, 0.0
        %vm602 = vcmp.ge.f32.partialorder %v598, 0.0
        %vm603 = vcmp.ge.f32.partialorder %v599, 0.0
        %vm604 = vcmp.ge.f32.partialorder %v600, 0.0
        %v605 = vmul.f32 %v597, 0.01
        %v606 = vmul.f32 %v598, 0.01
        %v607 = vmul.f32 %v599, 0.01
        %v608 = vmul.f32 %v600, 0.01
        %v609 = vsel %vm601, %v597, %v605
        %v610 = vsel %vm602, %v598, %v606
        %v611 = vsel %vm603, %v599, %v607
        %v612 = vsel %vm604, %v600, %v608
        %v613 = vmul.f32 %v609, %v518
        %v614 = vmul.f32 %v610, %v519
        %v615 = vmul.f32 %v611, %v520
        %v616 = vmul.f32 %v612, %v521
        %617 = vst.msk [vmem:[%s242] sm:$0xff] %vm451, %v613
        %618 = vst.msk [vmem:[%s242 + $0x8] sm:$0xff] %vm451, %v614
        %619 = vst.msk [vmem:[%s242 + $0x10] sm:$0xff] %vm451, %v615
        %620 = vst.msk [vmem:[%s242 + $0x18] sm:$0xff] %vm451, %v616
      $region44: #{discriminators_forward.5} parent=35 // pred_fallthru
        _
      %p621 = scmp.lt.s32.totalorder %s19, 1
      %s622 = scalar_select %p621, %s19, 1
      %s623 = smul.addr %s622, 4
      %s624 = smul.addr %s623, 8
      %s625 = scalar_lea.vmem %s4, %s624
      // Predicated region
      $region45: #{discriminators_forward.5} parent=35 // pred_check
        %p626 = pneg %p141
      $region46: #{discriminators_forward.5} parent=35 // pred_check_branch
        %628 = sbr.rel (%p626) target = $region48
      $region47: #{discriminators_forward.5} parent=35 // pred_region
        _
      $region48: #{discriminators_forward.5} parent=35 // pred_fallthru
        _
    $region36: #{discriminators_forward.5} parent=5 // pred_fallthru
      _
    %p629 = scmp.le.s32.totalorder 2, %s10
    // Predicated region
    $region49: #{discriminators_forward.5} parent=5 // pred_check
      %p630 = pneg %p629
    $region50: #{discriminators_forward.5} parent=5 // pred_check_branch
      %632 = sbr.rel (%p630) target = $region52
    $region51: #{discriminators_forward.5} parent=5 // pred_region
      %s633 = ssub.s32 %s10, 2
      // Predicated region
      $region53: #{discriminators_forward.5} parent=51 // pred_check
        %p634 = pneg %p147
      $region54: #{discriminators_forward.5} parent=51 // pred_check_branch
        %636 = sbr.rel (%p634) target = $region56
      $region55: #{discriminators_forward.5} parent=51 // pred_region
        %p637 = scmp.lt.s32.totalorder %s21, 1
        %s638 = scalar_select %p637, %s21, 1
        %s639 = smul.addr %s638, 4
        %s640 = smul.addr %s639, 8
        %s641 = scalar_lea.vmem %s4, %s640
      $region56: #{discriminators_forward.5} parent=51 // pred_fallthru
        _
    $region52: #{discriminators_forward.5} parent=5 // pred_fallthru
      _
  $region6: #{discriminators_forward.5} parent=0 // loop_footer
    %s14 = sadd.s32 1, %s10
  $region7: #{discriminators_forward.5} parent=0 // loop_footer_branch
    %9 = sbr.rel target = $region3
  $region8: #{discriminators_forward.5} parent=0 // loop_exit
    _

// kernel: discriminators_forward.7
$region0: #{discriminators_forward.7}
  #allocation0 [shape = 'u32[]', space=smem, size = 0x4, offset = 0x4, fixed_abs, tag = 'smem constant byte address 0x4 - core index']
  #allocation1 [shape = 'u32[72,128]{1,0:T(1,128)}', space=vmem, size = 0x9000, scoped, tag = 'internal scratch']
  #allocation2 [shape = 'f32[2,64]{1,0:T(2,128)}', space=vmem, size = 0x400, scoped, tag = 'scratch operand']
  %s0 = inlined_call_operand.vmem [shape: bf16[2,128], index: 0, kind: input, shape index: {}]
  %s1 = inlined_call_operand.vmem [shape: bf16[128,64], index: 1, kind: input, shape index: {}]
  %s2 = inlined_call_operand.vmem [shape: f32[1,64], index: 2, kind: input, shape index: {}]
  %s3 = inlined_call_operand.vmem [shape: bf16[64,128], index: 3, kind: input, shape index: {}]
  %s4 = inlined_call_operand.vmem [shape: f32[1,128], index: 4, kind: input, shape index: {}]
  %s5 = inlined_call_operand.vmem [shape: f32[2,128], index: 5, kind: output, shape index: {}]
  %s6 = sld [smem:[#allocation0]]
  $region38: #{discriminators_forward.7} parent=0
    _
  %s8 = ssub.s32 1, %s6
  %s9 = scalar_select 0, %s8, %s6
  // Predicated region
  $region2: #{discriminators_forward.7} parent=0 // pred_check
    _
  $region3: #{discriminators_forward.7} parent=0 // pred_check_branch
    %11 = sbr.rel (0) target = $region5
  $region4: #{discriminators_forward.7} parent=0 // pred_region
    _
  $region5: #{discriminators_forward.7} parent=0 // pred_fallthru
    _
  // Predicated region
  $region6: #{discriminators_forward.7} parent=0 // pred_check
    _
  $region7: #{discriminators_forward.7} parent=0 // pred_check_branch
    %13 = sbr.rel (0) target = $region9
  $region8: #{discriminators_forward.7} parent=0 // pred_region
    _
  $region9: #{discriminators_forward.7} parent=0 // pred_fallthru
    _
  // Predicated region
  $region10: #{discriminators_forward.7} parent=0 // pred_check
    _
  $region11: #{discriminators_forward.7} parent=0 // pred_check_branch
    %15 = sbr.rel (0) target = $region13
  $region12: #{discriminators_forward.7} parent=0 // pred_region
    _
  $region13: #{discriminators_forward.7} parent=0 // pred_fallthru
    _
  // Predicated region
  $region14: #{discriminators_forward.7} parent=0 // pred_check
    _
  $region15: #{discriminators_forward.7} parent=0 // pred_check_branch
    %17 = sbr.rel (0) target = $region17
  $region16: #{discriminators_forward.7} parent=0 // pred_region
    _
  $region17: #{discriminators_forward.7} parent=0 // pred_fallthru
    _
  // Predicated region
  $region18: #{discriminators_forward.7} parent=0 // pred_check
    _
  $region19: #{discriminators_forward.7} parent=0 // pred_check_branch
    %19 = sbr.rel (0) target = $region21
  $region20: #{discriminators_forward.7} parent=0 // pred_region
    _
  $region21: #{discriminators_forward.7} parent=0 // pred_fallthru
    _
  %p21 = scmp.eq.s32.totalorder 0, 0
  // Predicated region
  $region22: #{discriminators_forward.7} parent=0 // pred_check
    %p22 = pneg %p21
  $region23: #{discriminators_forward.7} parent=0 // pred_check_branch
    %24 = sbr.rel (%p22) target = $region25
  $region24: #{discriminators_forward.7} parent=0 // pred_region
    %vm25 = vcmask 517120
    %26 = vst.msk [vmem:[#allocation2] sm:$0x3] %vm25, 0.0
  $region25: #{discriminators_forward.7} parent=0 // pred_fallthru
    _
  %v27 = vld [vmem:[#allocation2] sm:$0x3]
  %v28 = vld [vmem:[%s0] sm:$0x1]
  %v29 = vld [vmem:[%s1] sm:$0xf]
  %v30 = vld [vmem:[%s1 + $0x4] sm:$0xf]
  %v31 = vld [vmem:[%s1 + $0x8] sm:$0xf]
  %v32 = vld [vmem:[%s1 + $0xc] sm:$0xf]
  %v33 = vld [vmem:[%s1 + $0x10] sm:$0xf]
  %v34 = vld [vmem:[%s1 + $0x14] sm:$0xf]
  %v35 = vld [vmem:[%s1 + $0x18] sm:$0xf]
  %v36 = vld [vmem:[%s1 + $0x1c] sm:$0xf]
  %v37 = vld [vmem:[%s1 + $0x20] sm:$0xf]
  %v38 = vld [vmem:[%s1 + $0x24] sm:$0xf]
  %v39 = vld [vmem:[%s1 + $0x28] sm:$0xf]
  %v40 = vld [vmem:[%s1 + $0x2c] sm:$0xf]
  %v41 = vld [vmem:[%s1 + $0x30] sm:$0xf]
  %v42 = vld [vmem:[%s1 + $0x34] sm:$0xf]
  %v43 = vld [vmem:[%s1 + $0x38] sm:$0xf]
  %v44 = vld [vmem:[%s1 + $0x3c] sm:$0xf]
  %v61 = vunpack.c.l.b16 %v29
  %v62 = vunpack.c.l.b16 %v30
  %v63 = vunpack.c.l.b16 %v31
  %v64 = vunpack.c.l.b16 %v32
  %v65 = vunpack.c.l.b16 %v33
  %v66 = vunpack.c.l.b16 %v34
  %v67 = vunpack.c.l.b16 %v35
  %v68 = vunpack.c.l.b16 %v36
  %v69 = vunpack.c.l.b16 %v37
  %v70 = vunpack.c.l.b16 %v38
  %v71 = vunpack.c.l.b16 %v39
  %v72 = vunpack.c.l.b16 %v40
  %v73 = vunpack.c.l.b16 %v41
  %v74 = vunpack.c.l.b16 %v42
  %v75 = vunpack.c.l.b16 %v43
  %v76 = vunpack.c.l.b16 %v44
  %v77 = vpack.c.b16 %v62, %v61
  %v78 = vpack.c.b16 %v64, %v63
  %v79 = vpack.c.b16 %v66, %v65
  %v80 = vpack.c.b16 %v68, %v67
  %v81 = vpack.c.b16 %v70, %v69
  %v82 = vpack.c.b16 %v72, %v71
  %v83 = vpack.c.b16 %v74, %v73
  %v84 = vpack.c.b16 %v76, %v75
  %93 = vmatpush.bf16.msra.mxu0 %v84
  %94 = vmatpush.bf16.msra.mxu0 %v83
  %95 = vmatpush.bf16.msra.mxu0 %v82
  %96 = vmatpush.bf16.msra.mxu0 %v81
  %97 = vmatpush.bf16.msra.mxu0 %v80
  %98 = vmatpush.bf16.msra.mxu0 %v79
  %99 = vmatpush.bf16.msra.mxu0 %v78
  %100 = vmatpush.bf16.msra.mxu0 %v77
  %101 = vmatmul.bf16.gmra.mxu0 %v28
  %v102 = vpop.f32.mrf.mxu0
  %v103 = vadd.f32 0.0, %v102
  %v104 = vpop.f32.mrf.mxu0
  %105 = vdwg.mxu0
  %v106 = vadd.f32 %v27, %v103
  %vm107 = vcmask 517120
  %108 = vst.msk [vmem:[#allocation2] sm:$0x3] %vm107, %v106
  // Predicated region
  $region26: #{discriminators_forward.7} parent=0 // pred_check
    %p109 = pneg %p21
  $region27: #{discriminators_forward.7} parent=0 // pred_check_branch
    %111 = sbr.rel (%p109) target = $region29
  $region28: #{discriminators_forward.7} parent=0 // pred_region
    %v112 = vld [vmem:[#allocation2] sm:$0x3]
    %v113 = vld [vmem:[%s2] sm:$0x1]
    %v115 = vperm.slane %v113, 0
    %v117 = vadd.f32 %v112, %v115
    %vm118 = vcmp.ge.f32.partialorder %v117, 0.0
    %v119 = vmul.f32 %v117, 0.01
    %v120 = vsel %vm118, %v117, %v119
    %v121 = vpack.c.bf16 %v120, %v120
    %v122 = vld [vmem:[%s3] sm:$0xf]
    %v123 = vld [vmem:[%s3 + $0x4] sm:$0xf]
    %v124 = vld [vmem:[%s3 + $0x8] sm:$0xf]
    %v125 = vld [vmem:[%s3 + $0xc] sm:$0xf]
    %v126 = vld [vmem:[%s3 + $0x10] sm:$0xf]
    %v127 = vld [vmem:[%s3 + $0x14] sm:$0xf]
    %v128 = vld [vmem:[%s3 + $0x18] sm:$0xf]
    %v129 = vld [vmem:[%s3 + $0x1c] sm:$0xf]
    %v130 = vld [vmem:[%s4] sm:$0x1]
    %v132 = vperm.slane %v130, 0
    %v142 = vunpack.c.l.b16 %v122
    %v143 = vunpack.c.l.b16 %v123
    %v144 = vunpack.c.l.b16 %v124
    %v145 = vunpack.c.l.b16 %v125
    %v146 = vunpack.c.l.b16 %v126
    %v147 = vunpack.c.l.b16 %v127
    %v148 = vunpack.c.l.b16 %v128
    %v149 = vunpack.c.l.b16 %v129
    %v150 = vpack.c.b16 %v143, %v142
    %v151 = vpack.c.b16 %v145, %v144
    %v152 = vpack.c.b16 %v147, %v146
    %v153 = vpack.c.b16 %v149, %v148
    %vm158 = vcmask 523264
    %v160 = vsel %vm158, %v121, 0
    %162 = vmatpush.bf16.msra.mxu0 0
    %163 = vmatpush.bf16.msra.mxu0 0
    %164 = vmatpush.bf16.msra.mxu0 0
    %165 = vmatpush.bf16.msra.mxu0 0
    %166 = vmatpush.bf16.msra.mxu0 %v153
    %167 = vmatpush.bf16.msra.mxu0 %v152
    %168 = vmatpush.bf16.msra.mxu0 %v151
    %169 = vmatpush.bf16.msra.mxu0 %v150
    %170 = vmatmul.bf16.gmra.mxu0 %v160
    %v171 = vpop.f32.mrf.mxu0
    %v172 = vadd.f32 %v132, %v171
    %v173 = vpop.f32.mrf.mxu0
    %174 = vdwg.mxu0
    %175 = vst [vmem:[%s5] sm:$0x3] %v172
  $region29: #{discriminators_forward.7} parent=0 // pred_fallthru
    _
  // Predicated region
  $region30: #{discriminators_forward.7} parent=0 // pred_check
    _
  $region31: #{discriminators_forward.7} parent=0 // pred_check_branch
    %177 = sbr.rel (0) target = $region33
  $region32: #{discriminators_forward.7} parent=0 // pred_region
    _
  $region33: #{discriminators_forward.7} parent=0 // pred_fallthru
    _
  // Predicated region
  $region34: #{discriminators_forward.7} parent=0 // pred_check
    _
  $region35: #{discriminators_forward.7} parent=0 // pred_check_branch
    %179 = sbr.rel (0) target = $region37
  $region36: #{discriminators_forward.7} parent=0 // pred_region
    _
  $region37: #{discriminators_forward.7} parent=0 // pred_fallthru
    _

// kernel: discriminators_forward.6
$region0: #{discriminators_forward.6}
  #allocation0 [shape = 'u32[]', space=smem, size = 0x4, offset = 0x4, fixed_abs, tag = 'smem constant byte address 0x4 - core index']
  #allocation1 [shape = 'u32[72,128]{1,0:T(1,128)}', space=vmem, size = 0x9000, scoped, tag = 'internal scratch']
  %s0 = inlined_call_operand.vmem [shape: bf16[2,24,64], index: 0, kind: input, shape index: {}]
  %s1 = inlined_call_operand.vmem [shape: bf16[4,64,32], index: 1, kind: input, shape index: {}]
  %s2 = inlined_call_operand.vmem [shape: f32[1,32], index: 2, kind: input, shape index: {}]
  %s3 = inlined_call_operand.vmem [shape: f32[1,32], index: 3, kind: input, shape index: {}]
  %s4 = inlined_call_operand.vmem [shape: f32[2,16,32], index: 4, kind: output, shape index: {}]
  %s5 = sld [smem:[#allocation0]]
  $region57: #{discriminators_forward.6} parent=0
    _
  %s7 = ssub.s32 1, %s5
  %s8 = scalar_select 0, %s7, %s5
  loop: start=0, step=1, limit=4
  $region2: #{discriminators_forward.6} parent=0 // loop_pre_header
    _
  $region3: #{discriminators_forward.6} parent=0 // loop_header
    %s10 = sphi 0, %s14
    %p11 = scmp.ge.s32.totalorder %s10, 4
    %s17 = sphi 0, %s29
    %s18 = sphi 0, %s25
    %s19 = sphi 0, %s17
    %s20 = sphi 0, %s18
    %s21 = sphi 0, %s19
    %s22 = sphi 0, %s20
    %s34 = sphi 0, %s36
    %s37 = sphi 0, %s34
    %s38 = sphi 0, %s37
    %s54 = sphi 0, %s38
    %s60 = sphi 0, %s62
    %s63 = sphi 0, %s60
    %s64 = sphi 0, %s63
    %s80 = sphi 0, %s64
    %s84 = sphi 0, %s84
    %s86 = sphi 0, %s84
    %s87 = sphi 0, %s86
    %s101 = sphi 0, %s87
    %s105 = sphi 0, %s105
    %s107 = sphi 0, %s105
    %s108 = sphi 0, %s107
    %s122 = sphi 0, %s108
    %s128 = sphi 0, %s130
    %s131 = sphi 0, %s128
    %s132 = sphi 0, %s131
    %s148 = sphi 0, %s132
  $region4: #{discriminators_forward.6} parent=0 // loop_header_branch
    %13 = sbr.rel (%p11) target = $region8
  $region5: #{discriminators_forward.6} parent=0 // loop_body
    %s15 = ssub.s32 %s10, 1
    %s16 = ssub.s32 %s10, 2
    %s23 = sadd.s32 1, %s18
    %p24 = scmp.ge.s32.totalorder %s23, 1
    %s25 = scalar_select %p24, 0, %s23
    %s26 = sadd.s32 1, %s17
    %s27 = scalar_select %p24, %s26, %s17
    %p28 = scmp.ge.s32.totalorder %s27, 2
    %s29 = scalar_select %p28, 0, %s27
    %s30 = ssub.s32 %s17, %s29
    %s31 = ssub.s32 %s18, %s25
    %s32 = sor.u32 %s30, %s31
    %p33 = scmp.eq.s32.totalorder %s32, 0
    %s35 = sadd.s32 %s34, 1
    %s36 = scalar_select %p33, %s34, %s35
    %p39 = pneg %p33
    %p40 = scmp.eq.s32.totalorder %s10, 1
    %p41 = por %p39, %p40
    %p42 = scmp.ne.s32.totalorder %s34, %s37
    %p43 = scmp.eq.s32.totalorder %s10, 0
    %p44 = por %p42, %p43
    %p45 = scmp.ne.s32.totalorder %s34, %s37
    %p46 = scmp.eq.s32.totalorder %s15, 1
    %p47 = por %p45, %p46
    %p48 = scmp.ne.s32.totalorder %s37, %s38
    %p49 = scmp.eq.s32.totalorder %s15, 0
    %p50 = por %p48, %p49
    %p51 = scmp.ne.s32.totalorder %s37, %s38
    %p52 = scmp.eq.s32.totalorder %s16, 1
    %p53 = por %p51, %p52
    %p55 = scmp.ne.s32.totalorder %s38, %s54
    %p56 = scmp.eq.s32.totalorder %s16, 0
    %p57 = por %p55, %p56
    %s58 = ssub.s32 %s18, %s25
    %p59 = scmp.eq.s32.totalorder %s58, 0
    %s61 = sadd.s32 %s60, 1
    %s62 = scalar_select %p59, %s60, %s61
    %p65 = pneg %p59
    %p66 = scmp.eq.s32.totalorder %s10, 1
    %p67 = por %p65, %p66
    %p68 = scmp.ne.s32.totalorder %s60, %s63
    %p69 = scmp.eq.s32.totalorder %s10, 0
    %p70 = por %p68, %p69
    %p71 = scmp.ne.s32.totalorder %s60, %s63
    %p72 = scmp.eq.s32.totalorder %s15, 1
    %p73 = por %p71, %p72
    %p74 = scmp.ne.s32.totalorder %s63, %s64
    %p75 = scmp.eq.s32.totalorder %s15, 0
    %p76 = por %p74, %p75
    %p77 = scmp.ne.s32.totalorder %s63, %s64
    %p78 = scmp.eq.s32.totalorder %s16, 1
    %p79 = por %p77, %p78
    %p81 = scmp.ne.s32.totalorder %s64, %s80
    %p82 = scmp.eq.s32.totalorder %s16, 0
    %p83 = por %p81, %p82
    %s85 = sadd.s32 %s84, 1
    %p88 = scmp.eq.s32.totalorder %s10, 1
    %p89 = scmp.ne.s32.totalorder %s84, %s86
    %p90 = scmp.eq.s32.totalorder %s10, 0
    %p91 = por %p89, %p90
    %p92 = scmp.ne.s32.totalorder %s84, %s86
    %p93 = scmp.eq.s32.totalorder %s15, 1
    %p94 = por %p92, %p93
    %p95 = scmp.ne.s32.totalorder %s86, %s87
    %p96 = scmp.eq.s32.totalorder %s15, 0
    %p97 = por %p95, %p96
    %p98 = scmp.ne.s32.totalorder %s86, %s87
    %p99 = scmp.eq.s32.totalorder %s16, 1
    %p100 = por %p98, %p99
    %p102 = scmp.ne.s32.totalorder %s87, %s101
    %p103 = scmp.eq.s32.totalorder %s16, 0
    %p104 = por %p102, %p103
    %s106 = sadd.s32 %s105, 1
    %p109 = scmp.eq.s32.totalorder %s10, 1
    %p110 = scmp.ne.s32.totalorder %s105, %s107
    %p111 = scmp.eq.s32.totalorder %s10, 0
    %p112 = por %p110, %p111
    %p113 = scmp.ne.s32.totalorder %s105, %s107
    %p114 = scmp.eq.s32.totalorder %s15, 1
    %p115 = por %p113, %p114
    %p116 = scmp.ne.s32.totalorder %s107, %s108
    %p117 = scmp.eq.s32.totalorder %s15, 0
    %p118 = por %p116, %p117
    %p119 = scmp.ne.s32.totalorder %s107, %s108
    %p120 = scmp.eq.s32.totalorder %s16, 1
    %p121 = por %p119, %p120
    %p123 = scmp.ne.s32.totalorder %s108, %s122
    %p124 = scmp.eq.s32.totalorder %s16, 0
    %p125 = por %p123, %p124
    %s126 = ssub.s32 %s17, %s29
    %p127 = scmp.eq.s32.totalorder %s126, 0
    %s129 = sadd.s32 %s128, 1
    %s130 = scalar_select %p127, %s128, %s129
    %p133 = pneg %p127
    %p134 = scmp.eq.s32.totalorder %s10, 1
    %p135 = por %p133, %p134
    %p136 = scmp.ne.s32.totalorder %s128, %s131
    %p137 = scmp.eq.s32.totalorder %s10, 0
    %p138 = por %p136, %p137
    %p139 = scmp.ne.s32.totalorder %s128, %s131
    %p140 = scmp.eq.s32.totalorder %s15, 1
    %p141 = por %p139, %p140
    %p142 = scmp.ne.s32.totalorder %s131, %s132
    %p143 = scmp.eq.s32.totalorder %s15, 0
    %p144 = por %p142, %p143
    %p145 = scmp.ne.s32.totalorder %s131, %s132
    %p146 = scmp.eq.s32.totalorder %s16, 1
    %p147 = por %p145, %p146
    %p149 = scmp.ne.s32.totalorder %s132, %s148
    %p150 = scmp.eq.s32.totalorder %s16, 0
    %p151 = por %p149, %p150
    %p152 = scmp.le.s32.totalorder 1, %s10
    %p153 = scmp.lt.s32.totalorder %s10, 3
    %p154 = pnand %p152, %p153
    %p155 = pneg %p154
    // Predicated region
    $region9: #{discriminators_forward.6} parent=5 // pred_check
      _
    $region10: #{discriminators_forward.6} parent=5 // pred_check_branch
      %157 = sbr.rel (%p154) target = $region12
    $region11: #{discriminators_forward.6} parent=5 // pred_region
      %s158 = ssub.s32 %s10, 1
      // Predicated region
      $region13: #{discriminators_forward.6} parent=11 // pred_check
        %p159 = pneg %p76
      $region14: #{discriminators_forward.6} parent=11 // pred_check_branch
        %161 = sbr.rel (%p159) target = $region16
      $region15: #{discriminators_forward.6} parent=11 // pred_region
        %s162 = smul.u32 8, %s20
        %p163 = scmp.lt.s32.totalorder %s162, 7
        %s164 = scalar_select %p163, %s162, 7
        %s165 = smul.addr %s164, 4
        %s166 = scalar_lea.vmem %s1, %s165
        %s167 = smul.u32 8, %s20
      $region16: #{discriminators_forward.6} parent=11 // pred_fallthru
        _
      // Predicated region
      $region17: #{discriminators_forward.6} parent=11 // pred_check
        %p168 = pneg %p97
      $region18: #{discriminators_forward.6} parent=11 // pred_check_branch
        %170 = sbr.rel (%p168) target = $region20
      $region19: #{discriminators_forward.6} parent=11 // pred_region
        _
      $region20: #{discriminators_forward.6} parent=11 // pred_fallthru
        _
      // Predicated region
      $region21: #{discriminators_forward.6} parent=11 // pred_check
        %p171 = pneg %p118
      $region22: #{discriminators_forward.6} parent=11 // pred_check_branch
        %173 = sbr.rel (%p171) target = $region24
      $region23: #{discriminators_forward.6} parent=11 // pred_region
        _
      $region24: #{discriminators_forward.6} parent=11 // pred_fallthru
        _
    $region12: #{discriminators_forward.6} parent=5 // pred_fallthru
      _
    %p174 = scmp.lt.s32.totalorder %s10, 2
    // Predicated region
    $region25: #{discriminators_forward.6} parent=5 // pred_check
      %p175 = pneg %p174
    $region26: #{discriminators_forward.6} parent=5 // pred_check_branch
      %177 = sbr.rel (%p175) target = $region28
    $region27: #{discriminators_forward.6} parent=5 // pred_region
      // Predicated region
      $region29: #{discriminators_forward.6} parent=27 // pred_check
        %p178 = pneg %p44
      $region30: #{discriminators_forward.6} parent=27 // pred_check_branch
        %180 = sbr.rel (%p178) target = $region32
      $region31: #{discriminators_forward.6} parent=27 // pred_region
        %p181 = scmp.lt.s32.totalorder %s17, 1
        %s182 = scalar_select %p181, %s17, 1
        %p183 = scmp.lt.s32.totalorder %s18, 0
        %s184 = scalar_select %p183, %s18, 0
        %s185 = smul.addr %s182, 3
        %s186 = sadd.s32 %s184, %s185
        %s187 = smul.addr %s186, 4
        %s188 = scalar_lea.vmem %s0, %s187
      $region32: #{discriminators_forward.6} parent=27 // pred_fallthru
        _
    $region28: #{discriminators_forward.6} parent=5 // pred_fallthru
      _
    %p189 = scmp.le.s32.totalorder 1, %s10
    %p190 = scmp.lt.s32.totalorder %s10, 3
    %p191 = pnand %p189, %p190
    %p192 = pneg %p191
    // Predicated region
    $region33: #{discriminators_forward.6} parent=5 // pred_check
      _
    $region34: #{discriminators_forward.6} parent=5 // pred_check_branch
      %194 = sbr.rel (%p191) target = $region36
    $region35: #{discriminators_forward.6} parent=5 // pred_region
      %s195 = ssub.s32 %s10, 1
      %p196 = scmp.lt.s32.totalorder %s19, 1
      %s197 = scalar_select %p196, %s19, 1
      %p198 = scmp.lt.s32.totalorder %s20, 0
      %s199 = scalar_select %p198, %s20, 0
      %s200 = smul.addr %s197, 3
      %s201 = sadd.s32 %s199, %s200
      %s202 = smul.addr %s201, 4
      %s203 = scalar_lea.vmem %s0, %s202
      %p204 = pneg %p50
      %p205 = pneg %p47
      %s206 = smul.u32 8, %s20
      %p207 = scmp.lt.s32.totalorder %s206, 7
      %s208 = scalar_select %p207, %s206, 7
      %s209 = smul.addr %s208, 4
      %s210 = scalar_lea.vmem %s1, %s209
      %p211 = pneg %p76
      %p212 = pneg %p73
      %p213 = pneg %p97
      %p214 = pneg %p94
      %p215 = pneg %p118
      %p216 = pneg %p115
      %p217 = pneg %p144
      %p218 = pneg %p141
      %p219 = scmp.lt.s32.totalorder %s19, 1
      %s220 = scalar_select %p219, %s19, 1
      %s221 = smul.addr %s220, 2
      %s222 = smul.addr %s221, 8
      %s223 = scalar_lea.vmem %s4, %s222
      %p224 = scmp.lt.s32.totalorder %s19, 1
      %s225 = scalar_select %p224, %s19, 1
      %p226 = scmp.lt.s32.totalorder %s20, 0
      %s227 = scalar_select %p226, %s20, 0
      %s228 = smul.addr %s225, 3
      %s229 = sadd.s32 %s227, %s228
      %s230 = smul.addr %s229, 4
      %s231 = scalar_lea.vmem %s0, %s230
      %s232 = smul.u32 8, %s20
      %p233 = scmp.lt.s32.totalorder %s232, 7
      %s234 = scalar_select %p233, %s232, 7
      %s235 = smul.addr %s234, 4
      %s236 = scalar_lea.vmem %s1, %s235
      %s237 = smul.u32 8, %s20
      %p238 = scmp.lt.s32.totalorder %s19, 1
      %s239 = scalar_select %p238, %s19, 1
      %s240 = smul.addr %s239, 2
      %s241 = smul.addr %s240, 8
      %s242 = scalar_lea.vmem %s4, %s241
      %p244 = scmp.eq.s32.totalorder %s20, 0
      // Predicated region
      $region37: #{discriminators_forward.6} parent=35 // pred_check
        %p245 = pneg %p244
      $region38: #{discriminators_forward.6} parent=35 // pred_check_branch
        %247 = sbr.rel (%p245) target = $region40
      $region39: #{discriminators_forward.6} parent=35 // pred_region
        %vm248 = vcmask 261120
        %249 = vst.msk [vmem:[%s242] sm:$0xff] %vm248, 0.0
        %250 = vst.msk [vmem:[%s242 + $0x8] sm:$0xff] %vm248, 0.0
      $region40: #{discriminators_forward.6} parent=35 // pred_fallthru
        _
      %v251 = vld [vmem:[%s242] sm:$0xff]
      %v252 = vld [vmem:[%s242 + $0x8] sm:$0xff]
      %v253 = vld [vmem:[%s231] sm:$0xf]
      %v254 = vld [vmem:[%s231 + $0x4] sm:$0xf]
      %v255 = vld [vmem:[%s231 + $0x8] sm:$0xf]
      %v256 = vld [vmem:[%s236] sm:$0xf]
      %v257 = vld [vmem:[%s236 + $0x4] sm:$0xf]
      %v258 = vld [vmem:[%s236 + $0x8] sm:$0xf]
      %v259 = vld [vmem:[%s236 + $0xc] sm:$0xf]
      %v260 = vld [vmem:[%s236 + $0x10] sm:$0xf]
      %v261 = vld [vmem:[%s236 + $0x14] sm:$0xf]
      %v262 = vld [vmem:[%s236 + $0x18] sm:$0xf]
      %v263 = vld [vmem:[%s236 + $0x1c] sm:$0xf]
      %s264 = scalar_lea.vmem %s236, 64
      %v265 = vld [vmem:[%s264] sm:$0xf]
      %v266 = vld [vmem:[%s264 + $0x4] sm:$0xf]
      %v267 = vld [vmem:[%s264 + $0x8] sm:$0xf]
      %v268 = vld [vmem:[%s264 + $0xc] sm:$0xf]
      %v269 = vld [vmem:[%s264 + $0x10] sm:$0xf]
      %v270 = vld [vmem:[%s264 + $0x14] sm:$0xf]
      %v271 = vld [vmem:[%s264 + $0x18] sm:$0xf]
      %v272 = vld [vmem:[%s264 + $0x1c] sm:$0xf]
      %v275 = vunpack.c.l.b16 %v254
      %v276 = vunpack.c.l.b16 %v255
      %v277 = vpack.c.b16 %v276, %v275
      %v286 = vunpack.c.l.b16 %v265
      %v287 = vunpack.c.l.b16 %v266
      %v288 = vunpack.c.l.b16 %v267
      %v289 = vunpack.c.l.b16 %v268
      %v290 = vunpack.c.l.b16 %v269
      %v291 = vunpack.c.l.b16 %v270
      %v292 = vunpack.c.l.b16 %v271
      %v293 = vunpack.c.l.b16 %v272
      %v294 = vpack.c.b16 %v287, %v286
      %v295 = vpack.c.b16 %v289, %v288
      %v296 = vpack.c.b16 %v291, %v290
      %v297 = vpack.c.b16 %v293, %v292
      %vm302 = vcmask 523264
      %v304 = vsel %vm302, %v277, 0
      %306 = vmatpush.bf16.msra.mxu0 0
      %307 = vmatpush.bf16.msra.mxu0 0
      %308 = vmatpush.bf16.msra.mxu0 0
      %309 = vmatpush.bf16.msra.mxu0 0
      %310 = vmatpush.bf16.msra.mxu0 %v297
      %311 = vmatpush.bf16.msra.mxu0 %v296
      %312 = vmatpush.bf16.msra.mxu0 %v295
      %313 = vmatpush.bf16.msra.mxu0 %v294
      %314 = vmatmul.bf16.gmra.mxu0 %v304
      %v315 = vpop.f32.mrf.mxu0
      %v316 = vadd.f32 0.0, %v315
      %v317 = vpop.f32.mrf.mxu0
      %v318 = vadd.f32 0.0, %v317
      %319 = vdwg.mxu0
      %v321 = vunpack.c.l.b16 %v253
      %v322 = vpack.c.b16 %v275, %v321
      %v331 = vunpack.c.l.b16 %v256
      %v332 = vunpack.c.l.b16 %v257
      %v333 = vunpack.c.l.b16 %v258
      %v334 = vunpack.c.l.b16 %v259
      %v335 = vunpack.c.l.b16 %v260
      %v336 = vunpack.c.l.b16 %v261
      %v337 = vunpack.c.l.b16 %v262
      %v338 = vunpack.c.l.b16 %v263
      %v339 = vpack.c.b16 %v332, %v331
      %v340 = vpack.c.b16 %v334, %v333
      %v341 = vpack.c.b16 %v336, %v335
      %v342 = vpack.c.b16 %v338, %v337
      %v348 = vsel %vm302, %v322, 0
      %350 = vmatpush.bf16.msra.mxu0 0
      %351 = vmatpush.bf16.msra.mxu0 0
      %352 = vmatpush.bf16.msra.mxu0 0
      %353 = vmatpush.bf16.msra.mxu0 0
      %354 = vmatpush.bf16.msra.mxu0 %v342
      %355 = vmatpush.bf16.msra.mxu0 %v341
      %356 = vmatpush.bf16.msra.mxu0 %v340
      %357 = vmatpush.bf16.msra.mxu0 %v339
      %358 = vmatmul.bf16.gmra.mxu0 %v348
      %v359 = vpop.f32.mrf.mxu0
      %v360 = vadd.f32 %v316, %v359
      %v361 = vpop.f32.mrf.mxu0
      %v362 = vadd.f32 %v318, %v361
      %363 = vdwg.mxu0
      %s364 = scalar_lea.vmem %s236, 32
      %v365 = vld [vmem:[%s364] sm:$0xf]
      %v366 = vld [vmem:[%s364 + $0x4] sm:$0xf]
      %v367 = vld [vmem:[%s364 + $0x8] sm:$0xf]
      %v368 = vld [vmem:[%s364 + $0xc] sm:$0xf]
      %v369 = vld [vmem:[%s364 + $0x10] sm:$0xf]
      %v370 = vld [vmem:[%s364 + $0x14] sm:$0xf]
      %v371 = vld [vmem:[%s364 + $0x18] sm:$0xf]
      %v372 = vld [vmem:[%s364 + $0x1c] sm:$0xf]
      %s373 = scalar_lea.vmem %s236, 96
      %v374 = vld [vmem:[%s373] sm:$0xf]
      %v375 = vld [vmem:[%s373 + $0x4] sm:$0xf]
      %v376 = vld [vmem:[%s373 + $0x8] sm:$0xf]
      %v377 = vld [vmem:[%s373 + $0xc] sm:$0xf]
      %v378 = vld [vmem:[%s373 + $0x10] sm:$0xf]
      %v379 = vld [vmem:[%s373 + $0x14] sm:$0xf]
      %v380 = vld [vmem:[%s373 + $0x18] sm:$0xf]
      %v381 = vld [vmem:[%s373 + $0x1c] sm:$0xf]
      %v390 = vunpack.c.l.b16 %v374
      %v391 = vunpack.c.l.b16 %v375
      %v392 = vunpack.c.l.b16 %v376
      %v393 = vunpack.c.l.b16 %v377
      %v394 = vunpack.c.l.b16 %v378
      %v395 = vunpack.c.l.b16 %v379
      %v396 = vunpack.c.l.b16 %v380
      %v397 = vunpack.c.l.b16 %v381
      %v398 = vpack.c.b16 %v391, %v390
      %v399 = vpack.c.b16 %v393, %v392
      %v400 = vpack.c.b16 %v395, %v394
      %v401 = vpack.c.b16 %v397, %v396
      %406 = vmatpush.bf16.msra.mxu0 0
      %407 = vmatpush.bf16.msra.mxu0 0
      %408 = vmatpush.bf16.msra.mxu0 0
      %409 = vmatpush.bf16.msra.mxu0 0
      %410 = vmatpush.bf16.msra.mxu0 %v401
      %411 = vmatpush.bf16.msra.mxu0 %v400
      %412 = vmatpush.bf16.msra.mxu0 %v399
      %413 = vmatpush.bf16.msra.mxu0 %v398
      %414 = vmatmul.bf16.gmra.mxu0 %v304
      %v415 = vpop.f32.mrf.mxu0
      %v416 = vadd.f32 0.0, %v415
      %v417 = vpop.f32.mrf.mxu0
      %v418 = vadd.f32 0.0, %v417
      %419 = vdwg.mxu0
      %v428 = vunpack.c.l.b16 %v365
      %v429 = vunpack.c.l.b16 %v366
      %v430 = vunpack.c.l.b16 %v367
      %v431 = vunpack.c.l.b16 %v368
      %v432 = vunpack.c.l.b16 %v369
      %v433 = vunpack.c.l.b16 %v370
      %v434 = vunpack.c.l.b16 %v371
      %v435 = vunpack.c.l.b16 %v372
      %v436 = vpack.c.b16 %v429, %v428
      %v437 = vpack.c.b16 %v431, %v430
      %v438 = vpack.c.b16 %v433, %v432
      %v439 = vpack.c.b16 %v435, %v434
      %444 = vmatpush.bf16.msra.mxu0 0
      %445 = vmatpush.bf16.msra.mxu0 0
      %446 = vmatpush.bf16.msra.mxu0 0
      %447 = vmatpush.bf16.msra.mxu0 0
      %448 = vmatpush.bf16.msra.mxu0 %v439
      %449 = vmatpush.bf16.msra.mxu0 %v438
      %450 = vmatpush.bf16.msra.mxu0 %v437
      %451 = vmatpush.bf16.msra.mxu0 %v436
      %452 = vmatmul.bf16.gmra.mxu0 %v348
      %v453 = vpop.f32.mrf.mxu0
      %v454 = vadd.f32 %v416, %v453
      %v455 = vpop.f32.mrf.mxu0
      %v456 = vadd.f32 %v418, %v455
      %457 = vdwg.mxu0
      %v458 = vadd.f32 %v251, %v360
      %v459 = vadd.f32 %v252, %v362
      %v460 = vrot.slane %v454, 1
      %v461 = vrot.slane %v456, 1
      %v462 = vlaneseq
      %v463 = vshrl.u32 %v462, 7
      %vm464 = vcmp.lt.s32.totalorder %v463, 7
      %v465 = vsel %vm464, %v460, %v461
      %v466 = vsel %vm464, %v461, %v460
      %v467 = vadd.f32 %v458, %v465
      %v468 = vadd.f32 %v459, %v466
      %vm469 = vcmask 261120
      %470 = vst.msk [vmem:[%s242] sm:$0xff] %vm469, %v467
      %471 = vst.msk [vmem:[%s242 + $0x8] sm:$0xff] %vm469, %v468
      // Predicated region
      $region41: #{discriminators_forward.6} parent=35 // pred_check
        %p472 = pneg %p244
      $region42: #{discriminators_forward.6} parent=35 // pred_check_branch
        %474 = sbr.rel (%p472) target = $region44
      $region43: #{discriminators_forward.6} parent=35 // pred_region
        %v475 = vadd.s32 %v463, 8
        %vm476 = vcmp.lt.s32.totalorder %v463, 0
        %v477 = vsub.s32 0, %v463
        %v478 = vsel %vm476, %v477, %v463
        %v479 = vshrl.u32 %v478, 3
        %v480 = vand.u32 %v478, 7
        %v481 = vsub.s32 0, %v480
        %v482 = vsel %vm476, %v481, %v480
        %vm483 = vcmp.lt.s32.totalorder %v475, 0
        %v484 = vsub.s32 0, %v475
        %v485 = vsel %vm483, %v484, %v475
        %v486 = vshrl.u32 %v485, 3
        %v487 = vand.u32 %v485, 7
        %v488 = vsub.s32 0, %v487
        %v489 = vsel %vm483, %v488, %v487
        %vm490 = vcmp.ne.s32.totalorder %v482, 0
        %vm491 = vcmp.ne.s32.totalorder %v489, 0
        %vm492 = vcmp.lt.s32.totalorder %v482, 0
        %vm493 = vcmp.lt.s32.totalorder %v489, 0
        %vm494 = vmand %vm492, %vm490
        %vm495 = vmand %vm493, %vm491
        %v496 = vadd.s32 %v482, 8
        %v497 = vadd.s32 %v489, 8
        %v498 = vsel %vm494, %v496, %v482
        %v499 = vsel %vm495, %v497, %v489
        %vm500 = vcmp.lt.s32.totalorder %v498, 2
        %vm501 = vcmp.lt.s32.totalorder %v499, 2
        %v502 = vsel %vm500, 1, 0
        %v503 = vsel %vm501, 1, 0
        %v504 = vcvt.s32.f32 %v502
        %v505 = vcvt.s32.f32 %v503
        %v506 = vld [vmem:[%s2] sm:$0x1]
        %v507 = vld [vmem:[%s3] sm:$0x1]
        %v508 = vld [vmem:[%s242] sm:$0xff]
        %v509 = vld [vmem:[%s242 + $0x8] sm:$0xff]
        %v510 = vmul.f32 %v508, %v504
        %v511 = vmul.f32 %v509, %v505
        %v512 = vsel %vm469, %v510, 0.0
        %v513 = vsel %vm469, %v511, 0.0
        %v514 = vadd.f32 %v512, %v513
        %v515 = vrot.slane %v514, 4
        %v516 = vadd.f32 %v514, %v515
        %v517 = vrot.slane %v516, 2
        %v518 = vadd.f32 %v516, %v517
        %v519 = vrot.slane %v518, 1
        %v520 = vadd.f32 %v518, %v519
        %v521 = vmul.f32 %v520, 0.25
        %v522 = vsub.f32 %v510, %v521
        %v523 = vsub.f32 %v511, %v521
        %v524 = vmul.f32 %v522, %v504
        %v525 = vmul.f32 %v523, %v505
        %v526 = vmul.f32 %v524, %v524
        %v527 = vmul.f32 %v525, %v525
        %v528 = vsel %vm469, %v526, 0.0
        %v529 = vsel %vm469, %v527, 0.0
        %v530 = vadd.f32 %v528, %v529
        %v531 = vrot.slane %v530, 4
        %v532 = vadd.f32 %v530, %v531
        %v533 = vrot.slane %v532, 2
        %v534 = vadd.f32 %v532, %v533
        %v535 = vrot.slane %v534, 1
        %v536 = vadd.f32 %v534, %v535
        %v537 = vmul.f32 %v536, 0.25
        %v538 = vadd.f32 %v537, 1e-05
        %v539 = vrsqrt.pop %v538
        %v540 = vmul.f32 %v539, %v538
        %v541 = vmul.f32 %v540, %v539
        %v542 = vmul.f32 0.5, %v541
        %v543 = vsub.f32 1.5, %v542
        %v544 = vmul.f32 %v539, %v543
        %vm545 = vweird.f32 %v538
        %vm546 = vweird.f32 %v539
        %vm547 = vmor %vm545, %vm546
        %v548 = vsel %vm547, %v539, %v544
        %v549 = vmul.f32 %v524, %v548
        %v550 = vmul.f32 %v525, %v548
        %v552 = vperm.slane %v506, 0
        %v554 = vmul.f32 %v549, %v552
        %v555 = vmul.f32 %v550, %v552
        %v557 = vperm.slane %v507, 0
        %v559 = vadd.f32 %v554, %v557
        %v560 = vadd.f32 %v555, %v557
        %vm561 = vcmp.ge.f32.partialorder %v559, 0.0
        %vm562 = vcmp.ge.f32.partialorder %v560, 0.0
        %v563 = vmul.f32 %v559, 0.01
        %v564 = vmul.f32 %v560, 0.01
        %v565 = vsel %vm561, %v559, %v563
        %v566 = vsel %vm562, %v560, %v564
        %v567 = vmul.f32 %v565, %v504
        %v568 = vmul.f32 %v566, %v505
        %569 = vst.msk [vmem:[%s242] sm:$0xff] %vm469, %v567
        %570 = vst.msk [vmem:[%s242 + $0x8] sm:$0xff] %vm469, %v568
      $region44: #{discriminators_forward.6} parent=35 // pred_fallthru
        _
      %p571 = scmp.lt.s32.totalorder %s19, 1
      %s572 = scalar_select %p571, %s19, 1
      %s573 = smul.addr %s572, 2
      %s574 = smul.addr %s573, 8
      %s575 = scalar_lea.vmem %s4, %s574
      // Predicated region
      $region45: #{discriminators_forward.6} parent=35 // pred_check
        %p576 = pneg %p141
      $region46: #{discriminators_forward.6} parent=35 // pred_check_branch
        %578 = sbr.rel (%p576) target = $region48
      $region47: #{discriminators_forward.6} parent=35 // pred_region
        _
      $region48: #{discriminators_forward.6} parent=35 // pred_fallthru
        _
    $region36: #{discriminators_forward.6} parent=5 // pred_fallthru
      _
    %p579 = scmp.le.s32.totalorder 2, %s10
    // Predicated region
    $region49: #{discriminators_forward.6} parent=5 // pred_check
      %p580 = pneg %p579
    $region50: #{discriminators_forward.6} parent=5 // pred_check_branch
      %582 = sbr.rel (%p580) target = $region52
    $region51: #{discriminators_forward.6} parent=5 // pred_region
      %s583 = ssub.s32 %s10, 2
      // Predicated region
      $region53: #{discriminators_forward.6} parent=51 // pred_check
        %p584 = pneg %p147
      $region54: #{discriminators_forward.6} parent=51 // pred_check_branch
        %586 = sbr.rel (%p584) target = $region56
      $region55: #{discriminators_forward.6} parent=51 // pred_region
        %p587 = scmp.lt.s32.totalorder %s21, 1
        %s588 = scalar_select %p587, %s21, 1
        %s589 = smul.addr %s588, 2
        %s590 = smul.addr %s589, 8
        %s591 = scalar_lea.vmem %s4, %s590
      $region56: #{discriminators_forward.6} parent=51 // pred_fallthru
        _
    $region52: #{discriminators_forward.6} parent=5 // pred_fallthru
      _
  $region6: #{discriminators_forward.6} parent=0 // loop_footer
    %s14 = sadd.s32 1, %s10
  $region7: #{discriminators_forward.6} parent=0 // loop_footer_branch
    %9 = sbr.rel target = $region3
  $region8: #{discriminators_forward.6} parent=0 // loop_exit
    _

</llo_original>
